<compile_context>
chip_gen: v5e
topology: v5e:2x2
jax: 0.10.0
libtpu: 0.0.40
codegen_flags: <defaults>
</compile_context>

<pallas_src>
import jax
import jax.numpy as jnp
from jax import lax
from jax.experimental import pallas as pl
from jax.experimental.pallas import tpu as pltpu

_F32 = jnp.float32


def _round_up(x, m):
    return (x + m - 1) // m * m


def _pad_items(n):
    # Pad the item axis so large tables always admit big power-of-two tiles.
    return _round_up(n, 128) if n <= 4096 else _round_up(n, 4096)


def _vmem_limit(request_bytes):
    cap = 128 * 1024 * 1024
    try:  # re-derive the budget per chip (64 MiB on v7x, 128 MiB on v5e/v6e)
        cap = int(getattr(pltpu.get_tpu_info(), "vmem_capacity_bytes", cap))
    except Exception:
        pass
    return int(min(max(int(request_bytes), 32 * 1024 * 1024), cap * 3 // 4))


def _choose_tile_n(n_pad, p1, b_rows, budget_bytes=8 * 1024 * 1024):
    """Largest power-of-two multiple of 128 dividing n_pad whose double-buffered
    bf16 E tile + f32 output tile fit the byte budget (no artificial row cap)."""
    per_row = 2 * (p1 * 2 + b_rows * 4)
    max_rows = max(128, budget_bytes // per_row)
    tile = 128
    cand = 256
    while cand <= max_rows and cand <= n_pad:
        if n_pad % cand == 0:
            tile = cand
        cand *= 2
    return tile


# ---------------------------------------------------------------------------
# Kernel 1: projection + GRU stack + user-rep back-projection (batch-tiled)
# ---------------------------------------------------------------------------

def _make_seq_kernel(num_layers, seq_len, tile_b, hidden, fuse_gates):
    H = hidden
    LB = seq_len * tile_b
    unroll = min(seq_len, 8)   # bounded unroll: MXU/EUP overlap w/o vreg blow-up

    if fuse_gates:
        # H % 128 == 0: one (H, 3H) matmul per step, slices at 128-lane bounds.
        def kernel(x_ref, wproj_ref, bproj_ref, wscore_ref,
                   wih_ref, whh_ref, bi_ref, bhn_ref,
                   out_ref, *scratch):
            gi_scr = scratch[0]                             # (LB, 3H)
            seq_scr = scratch[1] if num_layers > 1 else None

            x2 = x_ref[...].reshape(LB, x_ref.shape[2])
            layer_in = (jnp.dot(x2, wproj_ref[...], preferred_element_type=_F32)
                        + bproj_ref[...])                    # (LB, H)

            h_last = None
            for layer in range(num_layers):
                # Hoisted input-to-hidden GEMM for the whole sequence (one slab),
                # b_hh_r / b_hh_z already folded into bi at weight-prep time.
                gi_scr[...] = (jnp.dot(layer_in, wih_ref[layer],
                                       preferred_element_type=_F32)
                               + bi_ref[layer])
                bhn_b = jnp.broadcast_to(bhn_ref[layer], (tile_b, H))  # hoisted
                write_seq = layer < num_layers - 1

                def step(t, h, _layer=layer, _write=write_seq, _bhn=bhn_b):
                    row = pl.multiple_of(t * tile_b, tile_b)
                    gh = jnp.dot(h, whh_ref[_layer], preferred_element_type=_F32)
                    gi_r = gi_scr[pl.ds(row, tile_b), pl.ds(0, H)]
                    gi_z = gi_scr[pl.ds(row, tile_b), pl.ds(H, H)]
                    gi_n = gi_scr[pl.ds(row, tile_b), pl.ds(2 * H, H)]
                    r = jax.nn.sigmoid(gi_r + gh[:, :H])
                    z = jax.nn.sigmoid(gi_z + gh[:, H:2 * H])
                    n = jnp.tanh(gi_n + r * (gh[:, 2 * H:] + _bhn))
                    h_new = (1.0 - z) * n + z * h
                    if _write:
                        seq_scr[pl.ds(row, tile_b), :] = h_new
                    return h_new

                h_last = lax.fori_loop(0, seq_len, step,
                                       jnp.zeros((tile_b, H), _F32),
                                       unroll=unroll)
                if write_seq:
                    layer_in = seq_scr[...]

            # uproj_aug = h_n @ [W_proj | b_proj]  -> scoring never needs (N,H)
            out_ref[...] = jnp.dot(h_last, wscore_ref[...],
                                   preferred_element_type=_F32)
        return kernel

    # Per-gate path (H not a multiple of 128): never slice inside a vreg.
    def kernel(x_ref, wproj_ref, bproj_ref, wscore_ref,
               wih_r_ref, wih_z_ref, wih_n_ref,
               whh_r_ref, whh_z_ref, whh_n_ref,
               bi_r_ref, bi_z_ref, bi_n_ref, bhn_ref,
               out_ref, *scratch):
        gir_scr, giz_scr, gin_scr = scratch[0], scratch[1], scratch[2]
        seq_scr = scratch[3] if num_layers > 1 else None

        x2 = x_ref[...].reshape(LB, x_ref.shape[2])
        layer_in = (jnp.dot(x2, wproj_ref[...], preferred_element_type=_F32)
                    + bproj_ref[...])                        # (LB, H)

        h_last = None
        for layer in range(num_layers):
            gir_scr[...] = (jnp.dot(layer_in, wih_r_ref[layer],
                                    preferred_element_type=_F32) + bi_r_ref[layer])
            giz_scr[...] = (jnp.dot(layer_in, wih_z_ref[layer],
                                    preferred_element_type=_F32) + bi_z_ref[layer])
            gin_scr[...] = (jnp.dot(layer_in, wih_n_ref[layer],
                                    preferred_element_type=_F32) + bi_n_ref[layer])
            bhn_b = jnp.broadcast_to(bhn_ref[layer], (tile_b, H))      # hoisted
            write_seq = layer < num_layers - 1

            def step(t, h, _layer=layer, _write=write_seq, _bhn=bhn_b):
                row = pl.multiple_of(t * tile_b, tile_b)
                gh_r = jnp.dot(h, whh_r_ref[_layer], preferred_element_type=_F32)
                gh_z = jnp.dot(h, whh_z_ref[_layer], preferred_element_type=_F32)
                gh_n = jnp.dot(h, whh_n_ref[_layer],
                               preferred_element_type=_F32) + _bhn
                r = jax.nn.sigmoid(gir_scr[pl.ds(row, tile_b), :] + gh_r)
                z = jax.nn.sigmoid(giz_scr[pl.ds(row, tile_b), :] + gh_z)
                n = jnp.tanh(gin_scr[pl.ds(row, tile_b), :] + r * gh_n)
                h_new = (1.0 - z) * n + z * h
                if _write:
                    seq_scr[pl.ds(row, tile_b), :] = h_new
                return h_new

            h_last = lax.fori_loop(0, seq_len, step,
                                   jnp.zeros((tile_b, H), _F32), unroll=unroll)
            if write_seq:
                layer_in = seq_scr[...]

        out_ref[...] = jnp.dot(h_last, wscore_ref[...],
                               preferred_element_type=_F32)
    return kernel


# ---------------------------------------------------------------------------
# Kernel 2: N-tiled scoring over the bf16-streamed transposed table
# ---------------------------------------------------------------------------

def _score_kernel(u_ref, e_ref, o_ref):
    # u: (Bp, P+1) f32, e: (P+1, TILE_N) bf16 -> f32 promote, f32 accumulation.
    o_ref[...] = jnp.dot(u_ref[...], e_ref[...].astype(_F32),
                         preferred_element_type=_F32)


# ---------------------------------------------------------------------------
# GRU4Rec forward
# ---------------------------------------------------------------------------

@jax.jit
def gru4rec_forward(item_seq, params):
    """item_seq: (B, L) int32 -> logits (B, N) float32."""
    emb_table = params["emb_table"]          # (N, P) f32 (for the GRU gather)
    e_score = params["e_score"]              # (P+1, N_pad) bf16, prebuilt at load time
    w_proj_t = params["w_proj_t"]            # (P, H)
    b_proj = params["b_proj"]                # (1, H)
    w_score = params["w_score"]              # (H, P+1) = [W_proj | b_proj]

    B, L = item_seq.shape
    N, P = emb_table.shape
    H = w_proj_t.shape[1]
    P1 = w_score.shape[1]
    fuse_gates = "w_ih_g" in params
    num_layers = (params["w_ih_g"] if fuse_gates else params["w_ih_r"]).shape[0]

    TILE_B = min(128, _round_up(B, 8))
    B_pad = _round_up(B, TILE_B)
    nb = B_pad // TILE_B
    LB = L * TILE_B

    # Embedding gather directly in time-major order (transpose the tiny index
    # array, not the gathered tensor).  Dropout == identity (inference).
    # TODO(synk): fold this gather into kernel 1 via PrefetchScalarGridSpec +
    # pl.Element row gather so (L, B, P) is never materialized in HBM.
    x = jnp.take(emb_table, item_seq.T, axis=0)              # (L, B, P)
    if B_pad != B:
        x = jnp.pad(x, ((0, 0), (0, B_pad - B), (0, 0)))     # (L, Bp, P)

    kernel = _make_seq_kernel(num_layers, L, TILE_B, H, fuse_gates)

    if fuse_gates:
        weight_args = (params["w_ih_g"], params["w_hh_g"],
                       params["b_i_g"], params["b_hn"])
        scratch = [pltpu.VMEM((LB, 3 * H), jnp.float32)]
    else:
        weight_args = (params["w_ih_r"], params["w_ih_z"], params["w_ih_n"],
                       params["w_hh_r"], params["w_hh_z"], params["w_hh_n"],
                       params["b_i_r"], params["b_i_z"], params["b_i_n"],
                       params["b_hn"])
        scratch = [pltpu.VMEM((LB, H), jnp.float32),
                   pltpu.VMEM((LB, H), jnp.float32),
                   pltpu.VMEM((LB, H), jnp.float32)]
    if num_layers > 1:
        scratch = scratch + [pltpu.VMEM((LB, H), jnp.float32)]

    w_specs = [pl.BlockSpec(tuple(w.shape), lambda i, _n=w.ndim: (0,) * _n)
               for w in weight_args]
    in_specs = ([pl.BlockSpec((L, TILE_B, P), lambda i: (0, i, 0)),
                 pl.BlockSpec((P, H), lambda i: (0, 0)),
                 pl.BlockSpec((1, H), lambda i: (0, 0)),
                 pl.BlockSpec((H, P1), lambda i: (0, 0))]
                + w_specs)
    out_spec = pl.BlockSpec((TILE_B, P1), lambda i: (i, 0))

    weights_bytes = sum(int(w.size) * 4 for w in weight_args) \
        + (P * H + H + H * P1) * 4
    k1_need = (2 * LB * P * 4 + 2 * TILE_B * P1 * 4 + 2 * weights_bytes
               + 4 * H * LB * 4 + (4 << 20))

    uproj_aug = pl.pallas_call(
        kernel,
        out_shape=jax.ShapeDtypeStruct((B_pad, P1), jnp.float32),
        grid=(nb,),
        in_specs=in_specs,
        out_specs=out_spec,
        scratch_shapes=scratch,
        compiler_params=pltpu.CompilerParams(
            dimension_semantics=("parallel",),
            vmem_limit_bytes=_vmem_limit(k1_need)),
    )(x, w_proj_t, b_proj, w_score, *weight_args)

    # Scoring: stream bf16 E^T over large lane-dense N tiles ("parallel" grid).
    N_pad = e_score.shape[1]
    TILE_N = _choose_tile_n(N_pad, P1, B_pad)
    k2_need = (2 * TILE_N * P1 * 2 + 2 * B_pad * TILE_N * 4
               + 2 * B_pad * P1 * 4 + (4 << 20))

    logits_pad = pl.pallas_call(
        _score_kernel,
        out_shape=jax.ShapeDtypeStruct((B_pad, N_pad), jnp.float32),
        grid=(N_pad // TILE_N,),
        in_specs=[pl.BlockSpec((B_pad, P1), lambda i: (0, 0)),
                  pl.BlockSpec((P1, TILE_N), lambda i: (0, i))],
        out_specs=pl.BlockSpec((B_pad, TILE_N), lambda i: (0, i)),
        compiler_params=pltpu.CompilerParams(
            dimension_semantics=("parallel",),
            vmem_limit_bytes=_vmem_limit(k2_need)),
    )(uproj_aug, e_score)

    return logits_pad[:B, :N]


# ---------------------------------------------------------------------------
# Plain-JAX reference (mirrors the PyTorch graph; optionally matches bf16 E)
# ---------------------------------------------------------------------------

def gru4rec_reference(item_seq, tp, quantize_scoring_table=False):
    emb = tp["emb_table"]
    w_proj, b_proj = tp["w_proj"], tp["b_proj"]              # (H, P), (H,)
    num_layers = len(tp["w_ih"])
    H = w_proj.shape[0]

    x = jnp.take(emb, item_seq, axis=0) @ w_proj.T + b_proj  # (B, L, H)
    layer_in = jnp.transpose(x, (1, 0, 2))                   # (L, B, H)
    B = item_seq.shape[0]
    h = jnp.zeros((B, H), jnp.float32)
    for layer in range(num_layers):
        w_ih, w_hh = tp["w_ih"][layer], tp["w_hh"][layer]
        b_ih, b_hh = tp["b_ih"][layer], tp["b_hh"][layer]
        h = jnp.zeros((B, H), jnp.float32)
        outs = []
        for t in range(layer_in.shape[0]):
            gi = layer_in[t] @ w_ih.T + b_ih
            gh = h @ w_hh.T + b_hh
            r = jax.nn.sigmoid(gi[:, :H] + gh[:, :H])
            z = jax.nn.sigmoid(gi[:, H:2 * H] + gh[:, H:2 * H])
            n = jnp.tanh(gi[:, 2 * H:] + r * gh[:, 2 * H:])
            h = (1.0 - z) * n + z * h
            outs.append(h)
        layer_in = jnp.stack(outs, axis=0)
    user_rep = h
    table = emb
    if quantize_scoring_table:
        table = emb.astype(jnp.bfloat16).astype(jnp.float32)
    item_embeddings = table @ w_proj.T + b_proj               # (N, H)
    return user_rep @ item_embeddings.T


# ---------------------------------------------------------------------------
# Deterministic parameter construction (PyTorch layout -> kernel-ready layout)
# ---------------------------------------------------------------------------

def make_params(key, num_items, pretrained_dim, hidden_units, num_layers):
    H, P = hidden_units, pretrained_dim
    keys = jax.random.split(key, 3 + 4 * num_layers)
    emb_table = 0.1 * jax.random.normal(keys[0], (num_items, P), jnp.float32)
    w_proj = 0.1 * jax.random.normal(keys[1], (H, P), jnp.float32)   # Linear weight (H, P)
    b_proj = 0.1 * jax.random.normal(keys[2], (H,), jnp.float32)

    w_ih_l, w_hh_l, b_ih_l, b_hh_l = [], [], [], []
    for layer in range(num_layers):
        k0, k1, k2, k3 = keys[3 + 4 * layer: 7 + 4 * layer]
        w_ih_l.append(0.1 * jax.random.normal(k0, (3 * H, H), jnp.float32))
        w_hh_l.append(0.1 * jax.random.normal(k1, (3 * H, H), jnp.float32))
        b_ih_l.append(0.1 * jax.random.normal(k2, (3 * H,), jnp.float32))
        b_hh_l.append(0.1 * jax.random.normal(k3, (3 * H,), jnp.float32))

    torch_params = {"emb_table": emb_table, "w_proj": w_proj, "b_proj": b_proj,
                    "w_ih": w_ih_l, "w_hh": w_hh_l, "b_ih": b_ih_l, "b_hh": b_hh_l}

    # --- kernel-ready params ------------------------------------------------
    P1 = P + 1
    N_pad = _pad_items(num_items)
    # Transposed, bias-augmented scoring table, bf16, built once at embedding
    # load time (mirrors load_new_pretrain_embeddings), streamed by kernel 2.
    e_aug = jnp.concatenate(
        [emb_table.T, jnp.ones((1, num_items), jnp.float32)], axis=0)   # (P1, N)
    e_aug = jnp.pad(e_aug, ((0, 0), (0, N_pad - num_items)))
    params = {
        "emb_table": emb_table,
        "w_proj_t": w_proj.T,                                            # (P, H)
        "b_proj": b_proj.reshape(1, H),
        "w_score": jnp.concatenate([w_proj, b_proj.reshape(H, 1)], axis=1),  # (H, P1)
        "e_score": e_aug.astype(jnp.bfloat16),                           # (P1, N_pad)
    }

    fuse_gates = (H % 128 == 0)
    per_gate = {k: [] for k in ("w_ih_r", "w_ih_z", "w_ih_n",
                                "w_hh_r", "w_hh_z", "w_hh_n",
                                "b_i_r", "b_i_z", "b_i_n", "b_hn")}
    for layer in range(num_layers):
        w_ih, w_hh = w_ih_l[layer], w_hh_l[layer]
        b_ih, b_hh = b_ih_l[layer], b_hh_l[layer]
        sl = {"r": slice(0, H), "z": slice(H, 2 * H), "n": slice(2 * H, 3 * H)}
        for g in ("r", "z", "n"):
            per_gate[f"w_ih_{g}"].append(w_ih[sl[g]].T)                  # (Hin, H)
            per_gate[f"w_hh_{g}"].append(w_hh[sl[g]].T)                  # (H, H)
        # Fold b_hh_r / b_hh_z into the hoisted input-gate biases; only b_hh_n
        # must stay inside the reset-gate product (PyTorch GRU semantics).
        per_gate["b_i_r"].append((b_ih[sl["r"]] + b_hh[sl["r"]]).reshape(1, H))
        per_gate["b_i_z"].append((b_ih[sl["z"]] + b_hh[sl["z"]]).reshape(1, H))
        per_gate["b_i_n"].append(b_ih[sl["n"]].reshape(1, H))
        per_gate["b_hn"].append(b_hh[sl["n"]].reshape(1, H))

    stacked = {k: jnp.stack(v, axis=0) for k, v in per_gate.items()}     # (NL, ., H)
    if fuse_gates:
        params["w_ih_g"] = jnp.concatenate(
            [stacked["w_ih_r"], stacked["w_ih_z"], stacked["w_ih_n"]], axis=2)
        params["w_hh_g"] = jnp.concatenate(
            [stacked["w_hh_r"], stacked["w_hh_z"], stacked["w_hh_n"]], axis=2)
        params["b_i_g"] = jnp.concatenate(
            [stacked["b_i_r"], stacked["b_i_z"], stacked["b_i_n"]], axis=2)
        params["b_hn"] = stacked["b_hn"]
    else:
        params.update(stacked)
    return params, torch_params


if __name__ == "__main__":
    def run_case(hidden_units, tag):
        B, L = 2, 8
        pretrained_dim = 48
        num_items = 64
        num_layers = 2

        key = jax.random.PRNGKey(0)
        k_params, k_seq = jax.random.split(key)
        params, torch_params = make_params(k_params, num_items, pretrained_dim,
                                           hidden_units, num_layers)
        item_seq = jax.random.randint(k_seq, (B, L), 0, num_items, dtype=jnp.int32)

        logits = gru4rec_forward(item_seq, params)
        jax.block_until_ready(logits)
        assert logits.shape == (B, num_items) and logits.dtype == jnp.float32

        # Matched-quantization reference (bf16 scoring table, same as kernel 2)
        ref_q = gru4rec_reference(item_seq, torch_params, quantize_scoring_table=True)
        # Full-f32 reference (original PyTorch numerics)
        ref_f = gru4rec_reference(item_seq, torch_params, quantize_scoring_table=False)
        err_q = float(jnp.max(jnp.abs(logits - ref_q)))
        err_f = float(jnp.max(jnp.abs(logits - ref_f)))
        assert err_q < 2e-2, f"[{tag}] max abs error vs matched-quant reference: {err_q}"
        assert err_f < 6e-2, f"[{tag}] max abs error vs f32 reference: {err_f}"

    run_case(hidden_units=32, tag="per-gate")       # H % 128 != 0 -> per-gate path
    run_case(hidden_units=128, tag="fused-gates")   # H % 128 == 0 -> packed-gate path
    print("KERNEL_OK")
</pallas_src>

<mosaic_0001>
module attributes {stable_mosaic.version = 11 : i64} {
  func.func @_score_kernel(%arg0: i32, %arg1: memref<8x49xf32, #tpu.memory_space<vmem>>, %arg2: memref<49x128xbf16, #tpu.memory_space<vmem>>, %arg3: memref<8x128xf32, #tpu.memory_space<vmem>>) attributes {dimension_semantics = [#tpu.dimension_semantics<parallel>], iteration_bounds = array<i64: 1>, scalar_prefetch = 0 : i64, scratch_operands = 0 : i64, tpu.core_type = #tpu.core_type<tc>, window_params = [{pipeline_mode = #tpu.pipeline_mode<synchronous>, transform_indices = @transform_0, window_bounds = array<i64: 8, 49>}, {transform_indices = @transform_1, window_bounds = array<i64: 49, 128>}, {transform_indices = @transform_2, window_bounds = array<i64: 8, 128>}]} {
    %c0 = arith.constant 0 : index
    %c0_0 = arith.constant 0 : index
    %0 = vector.load %arg1[%c0, %c0_0] : memref<8x49xf32, #tpu.memory_space<vmem>>, vector<8x49xf32>
    %c0_1 = arith.constant 0 : index
    %c0_2 = arith.constant 0 : index
    %1 = vector.load %arg2[%c0_1, %c0_2] : memref<49x128xbf16, #tpu.memory_space<vmem>>, vector<49x128xbf16>
    %2 = arith.extf %1 : vector<49x128xbf16> to vector<49x128xf32>
    %cst = arith.constant dense<0.000000e+00> : vector<8x128xf32>
    %3 = tpu.matmul %0, %2, %cst {dimension_numbers = #tpu.dot_dimension_numbers<[1], [0], [0], [1], [0, 0, 1, 1], [], []>} : vector<8x49xf32>, vector<49x128xf32>, vector<8x128xf32> -> vector<8x128xf32>
    %c0_3 = arith.constant 0 : index
    %c0_4 = arith.constant 0 : index
    %4 = vector.load %arg3[%c0_3, %c0_4] : memref<8x128xf32, #tpu.memory_space<vmem>>, vector<8x128xf32>
    tpu.vector_store %arg3[%c0_3, %c0_4], %3 {strides = array<i32>} : memref<8x128xf32, #tpu.memory_space<vmem>>, vector<8x128xf32>,
    return
  }
  func.func @transform_0(%arg0: i32) -> (i32, i32) {
    %c0_i32 = arith.constant 0 : i32
    %c0_i32_0 = arith.constant 0 : i32
    %c0_i32_1 = arith.constant 0 : i32
    return %c0_i32, %c0_i32_0 : i32, i32
  }
  func.func @transform_1(%arg0: i32) -> (i32, i32) {
    %c0_i32 = arith.constant 0 : i32
    %c0_i32_0 = arith.constant 0 : i32
    return %c0_i32, %arg0 : i32, i32
  }
  func.func @transform_2(%arg0: i32) -> (i32, i32) {
    %c0_i32 = arith.constant 0 : i32
    %c0_i32_0 = arith.constant 0 : i32
    return %c0_i32, %arg0 : i32, i32
  }
}

module attributes {stable_mosaic.version = 11 : i64} {
  func.func @kernel(%arg0: i32, %arg1: memref<8x8x48xf32, #tpu.memory_space<vmem>>, %arg2: memref<48x32xf32, #tpu.memory_space<vmem>>, %arg3: memref<1x32xf32, #tpu.memory_space<vmem>>, %arg4: memref<32x49xf32, #tpu.memory_space<vmem>>, %arg5: memref<2x32x32xf32, #tpu.memory_space<vmem>>, %arg6: memref<2x32x32xf32, #tpu.memory_space<vmem>>, %arg7: memref<2x32x32xf32, #tpu.memory_space<vmem>>, %arg8: memref<2x32x32xf32, #tpu.memory_space<vmem>>, %arg9: memref<2x32x32xf32, #tpu.memory_space<vmem>>, %arg10: memref<2x32x32xf32, #tpu.memory_space<vmem>>, %arg11: memref<2x1x32xf32, #tpu.memory_space<vmem>>, %arg12: memref<2x1x32xf32, #tpu.memory_space<vmem>>, %arg13: memref<2x1x32xf32, #tpu.memory_space<vmem>>, %arg14: memref<2x1x32xf32, #tpu.memory_space<vmem>>, %arg15: memref<8x49xf32, #tpu.memory_space<vmem>>, %arg16: memref<64x32xf32, #tpu.memory_space<vmem>>, %arg17: memref<64x32xf32, #tpu.memory_space<vmem>>, %arg18: memref<64x32xf32, #tpu.memory_space<vmem>>, %arg19: memref<64x32xf32, #tpu.memory_space<vmem>>) attributes {dimension_semantics = [#tpu.dimension_semantics<parallel>], iteration_bounds = array<i64: 1>, scalar_prefetch = 0 : i64, scratch_operands = 4 : i64, tpu.core_type = #tpu.core_type<tc>, window_params = [{transform_indices = @transform_0, window_bounds = array<i64: 8, 8, 48>}, {pipeline_mode = #tpu.pipeline_mode<synchronous>, transform_indices = @transform_1, window_bounds = array<i64: 48, 32>}, {pipeline_mode = #tpu.pipeline_mode<synchronous>, transform_indices = @transform_2, window_bounds = array<i64: 1, 32>}, {pipeline_mode = #tpu.pipeline_mode<synchronous>, transform_indices = @transform_3, window_bounds = array<i64: 32, 49>}, {pipeline_mode = #tpu.pipeline_mode<synchronous>, transform_indices = @transform_4, window_bounds = array<i64: 2, 32, 32>}, {pipeline_mode = #tpu.pipeline_mode<synchronous>, transform_indices = @transform_5, window_bounds = array<i64: 2, 32, 32>}, {pipeline_mode = #tpu.pipeline_mode<synchronous>, transform_indices = @transform_6, window_bounds = array<i64: 2, 32, 32>}, {pipeline_mode = #tpu.pipeline_mode<synchronous>, transform_indices = @transform_7, window_bounds = array<i64: 2, 32, 32>}, {pipeline_mode = #tpu.pipeline_mode<synchronous>, transform_indices = @transform_8, window_bounds = array<i64: 2, 32, 32>}, {pipeline_mode = #tpu.pipeline_mode<synchronous>, transform_indices = @transform_9, window_bounds = array<i64: 2, 32, 32>}, {pipeline_mode = #tpu.pipeline_mode<synchronous>, transform_indices = @transform_10, window_bounds = array<i64: 2, 1, 32>}, {pipeline_mode = #tpu.pipeline_mode<synchronous>, transform_indices = @transform_11, window_bounds = array<i64: 2, 1, 32>}, {pipeline_mode = #tpu.pipeline_mode<synchronous>, transform_indices = @transform_12, window_bounds = array<i64: 2, 1, 32>}, {pipeline_mode = #tpu.pipeline_mode<synchronous>, transform_indices = @transform_13, window_bounds = array<i64: 2, 1, 32>}, {transform_indices = @transform_14, window_bounds = array<i64: 8, 49>}]} {
    %c0 = arith.constant 0 : index
    %c0_0 = arith.constant 0 : index
    %c0_1 = arith.constant 0 : index
    %0 = vector.load %arg1[%c0, %c0_0, %c0_1] : memref<8x8x48xf32, #tpu.memory_space<vmem>>, vector<8x8x48xf32>
    %1 = vector.shape_cast %0 : vector<8x8x48xf32> to vector<64x48xf32>
    %c0_2 = arith.constant 0 : index
    %c0_3 = arith.constant 0 : index
    %2 = vector.load %arg2[%c0_2, %c0_3] : memref<48x32xf32, #tpu.memory_space<vmem>>, vector<48x32xf32>
    %cst = arith.constant dense<0.000000e+00> : vector<64x32xf32>
    %3 = tpu.matmul %1, %2, %cst {dimension_numbers = #tpu.dot_dimension_numbers<[1], [0], [0], [1], [0, 0, 1, 1], [], []>} : vector<64x48xf32>, vector<48x32xf32>, vector<64x32xf32> -> vector<64x32xf32>
    %c0_4 = arith.constant 0 : index
    %c0_5 = arith.constant 0 : index
    %4 = vector.load %arg3[%c0_4, %c0_5] : memref<1x32xf32, #tpu.memory_space<vmem>>, vector<1x32xf32>
    %5 = vector.broadcast %4 : vector<1x32xf32> to vector<64x32xf32>
    %6 = arith.addf %3, %5 : vector<64x32xf32>
    %c0_6 = arith.constant 0 : index
    %c0_7 = arith.constant 0 : index
    %c0_8 = arith.constant 0 : index
    %7 = vector.load %arg5[%c0_6, %c0_7, %c0_8] : memref<2x32x32xf32, #tpu.memory_space<vmem>>, vector<1x32x32xf32>
    %8 = vector.shape_cast %7 : vector<1x32x32xf32> to vector<32x32xf32>
    %cst_9 = arith.constant dense<0.000000e+00> : vector<64x32xf32>
    %9 = tpu.matmul %6, %8, %cst_9 {dimension_numbers = #tpu.dot_dimension_numbers<[1], [0], [0], [1], [0, 0, 1, 1], [], []>} : vector<64x32xf32>, vector<32x32xf32>, vector<64x32xf32> -> vector<64x32xf32>
    %c0_10 = arith.constant 0 : index
    %c0_11 = arith.constant 0 : index
    %c0_12 = arith.constant 0 : index
    %10 = vector.load %arg11[%c0_10, %c0_11, %c0_12] : memref<2x1x32xf32, #tpu.memory_space<vmem>>, vector<1x1x32xf32>
    %11 = vector.shape_cast %10 : vector<1x1x32xf32> to vector<1x32xf32>
    %12 = vector.broadcast %11 : vector<1x32xf32> to vector<64x32xf32>
    %13 = arith.addf %9, %12 : vector<64x32xf32>
    %c0_13 = arith.constant 0 : index
    %c0_14 = arith.constant 0 : index
    %14 = vector.load %arg16[%c0_13, %c0_14] : memref<64x32xf32, #tpu.memory_space<vmem>>, vector<64x32xf32>
    tpu.vector_store %arg16[%c0_13, %c0_14], %13 {strides = array<i32>} : memref<64x32xf32, #tpu.memory_space<vmem>>, vector<64x32xf32>,
    %c0_15 = arith.constant 0 : index
    %c0_16 = arith.constant 0 : index
    %c0_17 = arith.constant 0 : index
    %15 = vector.load %arg6[%c0_15, %c0_16, %c0_17] : memref<2x32x32xf32, #tpu.memory_space<vmem>>, vector<1x32x32xf32>
    %16 = vector.shape_cast %15 : vector<1x32x32xf32> to vector<32x32xf32>
    %cst_18 = arith.constant dense<0.000000e+00> : vector<64x32xf32>
    %17 = tpu.matmul %6, %16, %cst_18 {dimension_numbers = #tpu.dot_dimension_numbers<[1], [0], [0], [1], [0, 0, 1, 1], [], []>} : vector<64x32xf32>, vector<32x32xf32>, vector<64x32xf32> -> vector<64x32xf32>
    %c0_19 = arith.constant 0 : index
    %c0_20 = arith.constant 0 : index
    %c0_21 = arith.constant 0 : index
    %18 = vector.load %arg12[%c0_19, %c0_20, %c0_21] : memref<2x1x32xf32, #tpu.memory_space<vmem>>, vector<1x1x32xf32>
    %19 = vector.shape_cast %18 : vector<1x1x32xf32> to vector<1x32xf32>
    %20 = vector.broadcast %19 : vector<1x32xf32> to vector<64x32xf32>
    %21 = arith.addf %17, %20 : vector<64x32xf32>
    %c0_22 = arith.constant 0 : index
    %c0_23 = arith.constant 0 : index
    %22 = vector.load %arg17[%c0_22, %c0_23] : memref<64x32xf32, #tpu.memory_space<vmem>>, vector<64x32xf32>
    tpu.vector_store %arg17[%c0_22, %c0_23], %21 {strides = array<i32>} : memref<64x32xf32, #tpu.memory_space<vmem>>, vector<64x32xf32>,
    %c0_24 = arith.constant 0 : index
    %c0_25 = arith.constant 0 : index
    %c0_26 = arith.constant 0 : index
    %23 = vector.load %arg7[%c0_24, %c0_25, %c0_26] : memref<2x32x32xf32, #tpu.memory_space<vmem>>, vector<1x32x32xf32>
    %24 = vector.shape_cast %23 : vector<1x32x32xf32> to vector<32x32xf32>
    %cst_27 = arith.constant dense<0.000000e+00> : vector<64x32xf32>
    %25 = tpu.matmul %6, %24, %cst_27 {dimension_numbers = #tpu.dot_dimension_numbers<[1], [0], [0], [1], [0, 0, 1, 1], [], []>} : vector<64x32xf32>, vector<32x32xf32>, vector<64x32xf32> -> vector<64x32xf32>
    %c0_28 = arith.constant 0 : index
    %c0_29 = arith.constant 0 : index
    %c0_30 = arith.constant 0 : index
    %26 = vector.load %arg13[%c0_28, %c0_29, %c0_30] : memref<2x1x32xf32, #tpu.memory_space<vmem>>, vector<1x1x32xf32>
    %27 = vector.shape_cast %26 : vector<1x1x32xf32> to vector<1x32xf32>
    %28 = vector.broadcast %27 : vector<1x32xf32> to vector<64x32xf32>
    %29 = arith.addf %25, %28 : vector<64x32xf32>
    %c0_31 = arith.constant 0 : index
    %c0_32 = arith.constant 0 : index
    %30 = vector.load %arg18[%c0_31, %c0_32] : memref<64x32xf32, #tpu.memory_space<vmem>>, vector<64x32xf32>
    tpu.vector_store %arg18[%c0_31, %c0_32], %29 {strides = array<i32>} : memref<64x32xf32, #tpu.memory_space<vmem>>, vector<64x32xf32>,
    %c0_33 = arith.constant 0 : index
    %c0_34 = arith.constant 0 : index
    %c0_35 = arith.constant 0 : index
    %31 = vector.load %arg14[%c0_33, %c0_34, %c0_35] : memref<2x1x32xf32, #tpu.memory_space<vmem>>, vector<1x1x32xf32>
    %32 = vector.shape_cast %31 : vector<1x1x32xf32> to vector<1x32xf32>
    %33 = vector.shape_cast %32 : vector<1x32xf32> to vector<1x32xf32>
    %34 = vector.broadcast %33 : vector<1x32xf32> to vector<8x32xf32>
    %cst_36 = arith.constant 0.000000e+00 : f32
    %35 = vector.broadcast %cst_36 : f32 to vector<8x32xf32>
    %c0_i32 = arith.constant 0 : i32
    %c8_i32 = arith.constant 8 : i32
    %36 = arith.muli %c0_i32, %c8_i32 : i32
    %37 = tpu.assume_multiple %36, 8 : i32
    %c0_37 = arith.constant 0 : index
    %c0_38 = arith.constant 0 : index
    %c0_39 = arith.constant 0 : index
    %38 = vector.load %arg8[%c0_37, %c0_38, %c0_39] : memref<2x32x32xf32, #tpu.memory_space<vmem>>, vector<1x32x32xf32>
    %39 = vector.shape_cast %38 : vector<1x32x32xf32> to vector<32x32xf32>
    %cst_40 = arith.constant dense<0.000000e+00> : vector<8x32xf32>
    %40 = tpu.matmul %35, %39, %cst_40 {dimension_numbers = #tpu.dot_dimension_numbers<[1], [0], [0], [1], [0, 0, 1, 1], [], []>} : vector<8x32xf32>, vector<32x32xf32>, vector<8x32xf32> -> vector<8x32xf32>
    %c0_41 = arith.constant 0 : index
    %c0_42 = arith.constant 0 : index
    %c0_43 = arith.constant 0 : index
    %41 = vector.load %arg9[%c0_41, %c0_42, %c0_43] : memref<2x32x32xf32, #tpu.memory_space<vmem>>, vector<1x32x32xf32>
    %42 = vector.shape_cast %41 : vector<1x32x32xf32> to vector<32x32xf32>
    %cst_44 = arith.constant dense<0.000000e+00> : vector<8x32xf32>
    %43 = tpu.matmul %35, %42, %cst_44 {dimension_numbers = #tpu.dot_dimension_numbers<[1], [0], [0], [1], [0, 0, 1, 1], [], []>} : vector<8x32xf32>, vector<32x32xf32>, vector<8x32xf32> -> vector<8x32xf32>
    %c0_45 = arith.constant 0 : index
    %c0_46 = arith.constant 0 : index
    %c0_47 = arith.constant 0 : index
    %44 = vector.load %arg10[%c0_45, %c0_46, %c0_47] : memref<2x32x32xf32, #tpu.memory_space<vmem>>, vector<1x32x32xf32>
    %45 = vector.shape_cast %44 : vector<1x32x32xf32> to vector<32x32xf32>
    %cst_48 = arith.constant dense<0.000000e+00> : vector<8x32xf32>
    %46 = tpu.matmul %35, %45, %cst_48 {dimension_numbers = #tpu.dot_dimension_numbers<[1], [0], [0], [1], [0, 0, 1, 1], [], []>} : vector<8x32xf32>, vector<32x32xf32>, vector<8x32xf32> -> vector<8x32xf32>
    %47 = arith.addf %46, %34 : vector<8x32xf32>
    %48 = arith.index_cast %37 : i32 to index
    %c0_49 = arith.constant 0 : index
    %49 = vector.load %arg16[%48, %c0_49] : memref<64x32xf32, #tpu.memory_space<vmem>>, vector<8x32xf32>
    %50 = arith.addf %49, %40 : vector<8x32xf32>
    %51 = arith.negf %50 : vector<8x32xf32>
    %52 = math.exp %51 : vector<8x32xf32>
    %cst_50 = arith.constant 1.000000e+00 : f32
    %53 = vector.broadcast %cst_50 : f32 to vector<8x32xf32>
    %54 = arith.addf %53, %52 : vector<8x32xf32>
    %55 = arith.divf %53, %54 : vector<8x32xf32>
    %56 = arith.index_cast %37 : i32 to index
    %c0_51 = arith.constant 0 : index
    %57 = vector.load %arg17[%56, %c0_51] : memref<64x32xf32, #tpu.memory_space<vmem>>, vector<8x32xf32>
    %58 = arith.addf %57, %43 : vector<8x32xf32>
    %59 = arith.negf %58 : vector<8x32xf32>
    %60 = math.exp %59 : vector<8x32xf32>
    %cst_52 = arith.constant 1.000000e+00 : f32
    %61 = vector.broadcast %cst_52 : f32 to vector<8x32xf32>
    %62 = arith.addf %61, %60 : vector<8x32xf32>
    %63 = arith.divf %61, %62 : vector<8x32xf32>
    %64 = arith.index_cast %37 : i32 to index
    %c0_53 = arith.constant 0 : index
    %65 = vector.load %arg18[%64, %c0_53] : memref<64x32xf32, #tpu.memory_space<vmem>>, vector<8x32xf32>
    %66 = arith.mulf %55, %47 : vector<8x32xf32>
    %67 = arith.addf %65, %66 : vector<8x32xf32>
    %68 = math.tanh %67 : vector<8x32xf32>
    %cst_54 = arith.constant 1.000000e+00 : f32
    %69 = vector.broadcast %cst_54 : f32 to vector<8x32xf32>
    %70 = arith.subf %69, %63 : vector<8x32xf32>
    %71 = arith.mulf %70, %68 : vector<8x32xf32>
    %72 = arith.mulf %63, %35 : vector<8x32xf32>
    %73 = arith.addf %71, %72 : vector<8x32xf32>
    %74 = arith.index_cast %37 : i32 to index
    %c0_55 = arith.constant 0 : index
    %75 = vector.load %arg19[%74, %c0_55] : memref<64x32xf32, #tpu.memory_space<vmem>>, vector<8x32xf32>
    tpu.vector_store %arg19[%74, %c0_55], %73 {strides = array<i32>} : memref<64x32xf32, #tpu.memory_space<vmem>>, vector<8x32xf32>,
    %c1_i32 = arith.constant 1 : i32
    %c8_i32_56 = arith.constant 8 : i32
    %76 = arith.muli %c1_i32, %c8_i32_56 : i32
    %77 = tpu.assume_multiple %76, 8 : i32
    %c0_57 = arith.constant 0 : index
    %c0_58 = arith.constant 0 : index
    %c0_59 = arith.constant 0 : index
    %78 = vector.load %arg8[%c0_57, %c0_58, %c0_59] : memref<2x32x32xf32, #tpu.memory_space<vmem>>, vector<1x32x32xf32>
    %79 = vector.shape_cast %78 : vector<1x32x32xf32> to vector<32x32xf32>
    %cst_60 = arith.constant dense<0.000000e+00> : vector<8x32xf32>
    %80 = tpu.matmul %73, %79, %cst_60 {dimension_numbers = #tpu.dot_dimension_numbers<[1], [0], [0], [1], [0, 0, 1, 1], [], []>} : vector<8x32xf32>, vector<32x32xf32>, vector<8x32xf32> -> vector<8x32xf32>
    %c0_61 = arith.constant 0 : index
    %c0_62 = arith.constant 0 : index
    %c0_63 = arith.constant 0 : index
    %81 = vector.load %arg9[%c0_61, %c0_62, %c0_63] : memref<2x32x32xf32, #tpu.memory_space<vmem>>, vector<1x32x32xf32>
    %82 = vector.shape_cast %81 : vector<1x32x32xf32> to vector<32x32xf32>
    %cst_64 = arith.constant dense<0.000000e+00> : vector<8x32xf32>
    %83 = tpu.matmul %73, %82, %cst_64 {dimension_numbers = #tpu.dot_dimension_numbers<[1], [0], [0], [1], [0, 0, 1, 1], [], []>} : vector<8x32xf32>, vector<32x32xf32>, vector<8x32xf32> -> vector<8x32xf32>
    %c0_65 = arith.constant 0 : index
    %c0_66 = arith.constant 0 : index
    %c0_67 = arith.constant 0 : index
    %84 = vector.load %arg10[%c0_65, %c0_66, %c0_67] : memref<2x32x32xf32, #tpu.memory_space<vmem>>, vector<1x32x32xf32>
    %85 = vector.shape_cast %84 : vector<1x32x32xf32> to vector<32x32xf32>
    %cst_68 = arith.constant dense<0.000000e+00> : vector<8x32xf32>
    %86 = tpu.matmul %73, %85, %cst_68 {dimension_numbers = #tpu.dot_dimension_numbers<[1], [0], [0], [1], [0, 0, 1, 1], [], []>} : vector<8x32xf32>, vector<32x32xf32>, vector<8x32xf32> -> vector<8x32xf32>
    %87 = arith.addf %86, %34 : vector<8x32xf32>
    %88 = arith.index_cast %77 : i32 to index
    %c0_69 = arith.constant 0 : index
    %89 = vector.load %arg16[%88, %c0_69] : memref<64x32xf32, #tpu.memory_space<vmem>>, vector<8x32xf32>
    %90 = arith.addf %89, %80 : vector<8x32xf32>
    %91 = arith.negf %90 : vector<8x32xf32>
    %92 = math.exp %91 : vector<8x32xf32>
    %cst_70 = arith.constant 1.000000e+00 : f32
    %93 = vector.broadcast %cst_70 : f32 to vector<8x32xf32>
    %94 = arith.addf %93, %92 : vector<8x32xf32>
    %95 = arith.divf %93, %94 : vector<8x32xf32>
    %96 = arith.index_cast %77 : i32 to index
    %c0_71 = arith.constant 0 : index
    %97 = vector.load %arg17[%96, %c0_71] : memref<64x32xf32, #tpu.memory_space<vmem>>, vector<8x32xf32>
    %98 = arith.addf %97, %83 : vector<8x32xf32>
    %99 = arith.negf %98 : vector<8x32xf32>
    %100 = math.exp %99 : vector<8x32xf32>
    %cst_72 = arith.constant 1.000000e+00 : f32
    %101 = vector.broadcast %cst_72 : f32 to vector<8x32xf32>
    %102 = arith.addf %101, %100 : vector<8x32xf32>
    %103 = arith.divf %101, %102 : vector<8x32xf32>
    %104 = arith.index_cast %77 : i32 to index
    %c0_73 = arith.constant 0 : index
    %105 = vector.load %arg18[%104, %c0_73] : memref<64x32xf32, #tpu.memory_space<vmem>>, vector<8x32xf32>
    %106 = arith.mulf %95, %87 : vector<8x32xf32>
    %107 = arith.addf %105, %106 : vector<8x32xf32>
    %108 = math.tanh %107 : vector<8x32xf32>
    %cst_74 = arith.constant 1.000000e+00 : f32
    %109 = vector.broadcast %cst_74 : f32 to vector<8x32xf32>
    %110 = arith.subf %109, %103 : vector<8x32xf32>
    %111 = arith.mulf %110, %108 : vector<8x32xf32>
    %112 = arith.mulf %103, %73 : vector<8x32xf32>
    %113 = arith.addf %111, %112 : vector<8x32xf32>
    %114 = arith.index_cast %77 : i32 to index
    %c0_75 = arith.constant 0 : index
    %115 = vector.load %arg19[%114, %c0_75] : memref<64x32xf32, #tpu.memory_space<vmem>>, vector<8x32xf32>
    tpu.vector_store %arg19[%114, %c0_75], %113 {strides = array<i32>} : memref<64x32xf32, #tpu.memory_space<vmem>>, vector<8x32xf32>,
    %c2_i32 = arith.constant 2 : i32
    %c8_i32_76 = arith.constant 8 : i32
    %116 = arith.muli %c2_i32, %c8_i32_76 : i32
    %117 = tpu.assume_multiple %116, 8 : i32
    %c0_77 = arith.constant 0 : index
    %c0_78 = arith.constant 0 : index
    %c0_79 = arith.constant 0 : index
    %118 = vector.load %arg8[%c0_77, %c0_78, %c0_79] : memref<2x32x32xf32, #tpu.memory_space<vmem>>, vector<1x32x32xf32>
    %119 = vector.shape_cast %118 : vector<1x32x32xf32> to vector<32x32xf32>
    %cst_80 = arith.constant dense<0.000000e+00> : vector<8x32xf32>
    %120 = tpu.matmul %113, %119, %cst_80 {dimension_numbers = #tpu.dot_dimension_numbers<[1], [0], [0], [1], [0, 0, 1, 1], [], []>} : vector<8x32xf32>, vector<32x32xf32>, vector<8x32xf32> -> vector<8x32xf32>
    %c0_81 = arith.constant 0 : index
    %c0_82 = arith.constant 0 : index
    %c0_83 = arith.constant 0 : index
    %121 = vector.load %arg9[%c0_81, %c0_82, %c0_83] : memref<2x32x32xf32, #tpu.memory_space<vmem>>, vector<1x32x32xf32>
    %122 = vector.shape_cast %121 : vector<1x32x32xf32> to vector<32x32xf32>
    %cst_84 = arith.constant dense<0.000000e+00> : vector<8x32xf32>
    %123 = tpu.matmul %113, %122, %cst_84 {dimension_numbers = #tpu.dot_dimension_numbers<[1], [0], [0], [1], [0, 0, 1, 1], [], []>} : vector<8x32xf32>, vector<32x32xf32>, vector<8x32xf32> -> vector<8x32xf32>
    %c0_85 = arith.constant 0 : index
    %c0_86 = arith.constant 0 : index
    %c0_87 = arith.constant 0 : index
    %124 = vector.load %arg10[%c0_85, %c0_86, %c0_87] : memref<2x32x32xf32, #tpu.memory_space<vmem>>, vector<1x32x32xf32>
    %125 = vector.shape_cast %124 : vector<1x32x32xf32> to vector<32x32xf32>
    %cst_88 = arith.constant dense<0.000000e+00> : vector<8x32xf32>
    %126 = tpu.matmul %113, %125, %cst_88 {dimension_numbers = #tpu.dot_dimension_numbers<[1], [0], [0], [1], [0, 0, 1, 1], [], []>} : vector<8x32xf32>, vector<32x32xf32>, vector<8x32xf32> -> vector<8x32xf32>
    %127 = arith.addf %126, %34 : vector<8x32xf32>
    %128 = arith.index_cast %117 : i32 to index
    %c0_89 = arith.constant 0 : index
    %129 = vector.load %arg16[%128, %c0_89] : memref<64x32xf32, #tpu.memory_space<vmem>>, vector<8x32xf32>
    %130 = arith.addf %129, %120 : vector<8x32xf32>
    %131 = arith.negf %130 : vector<8x32xf32>
    %132 = math.exp %131 : vector<8x32xf32>
    %cst_90 = arith.constant 1.000000e+00 : f32
    %133 = vector.broadcast %cst_90 : f32 to vector<8x32xf32>
    %134 = arith.addf %133, %132 : vector<8x32xf32>
    %135 = arith.divf %133, %134 : vector<8x32xf32>
    %136 = arith.index_cast %117 : i32 to index
    %c0_91 = arith.constant 0 : index
    %137 = vector.load %arg17[%136, %c0_91] : memref<64x32xf32, #tpu.memory_space<vmem>>, vector<8x32xf32>
    %138 = arith.addf %137, %123 : vector<8x32xf32>
    %139 = arith.negf %138 : vector<8x32xf32>
    %140 = math.exp %139 : vector<8x32xf32>
    %cst_92 = arith.constant 1.000000e+00 : f32
    %141 = vector.broadcast %cst_92 : f32 to vector<8x32xf32>
    %142 = arith.addf %141, %140 : vector<8x32xf32>
    %143 = arith.divf %141, %142 : vector<8x32xf32>
    %144 = arith.index_cast %117 : i32 to index
    %c0_93 = arith.constant 0 : index
    %145 = vector.load %arg18[%144, %c0_93] : memref<64x32xf32, #tpu.memory_space<vmem>>, vector<8x32xf32>
    %146 = arith.mulf %135, %127 : vector<8x32xf32>
    %147 = arith.addf %145, %146 : vector<8x32xf32>
    %148 = math.tanh %147 : vector<8x32xf32>
    %cst_94 = arith.constant 1.000000e+00 : f32
    %149 = vector.broadcast %cst_94 : f32 to vector<8x32xf32>
    %150 = arith.subf %149, %143 : vector<8x32xf32>
    %151 = arith.mulf %150, %148 : vector<8x32xf32>
    %152 = arith.mulf %143, %113 : vector<8x32xf32>
    %153 = arith.addf %151, %152 : vector<8x32xf32>
    %154 = arith.index_cast %117 : i32 to index
    %c0_95 = arith.constant 0 : index
    %155 = vector.load %arg19[%154, %c0_95] : memref<64x32xf32, #tpu.memory_space<vmem>>, vector<8x32xf32>
    tpu.vector_store %arg19[%154, %c0_95], %153 {strides = array<i32>} : memref<64x32xf32, #tpu.memory_space<vmem>>, vector<8x32xf32>,
    %c3_i32 = arith.constant 3 : i32
    %c8_i32_96 = arith.constant 8 : i32
    %156 = arith.muli %c3_i32, %c8_i32_96 : i32
    %157 = tpu.assume_multiple %156, 8 : i32
    %c0_97 = arith.constant 0 : index
    %c0_98 = arith.constant 0 : index
    %c0_99 = arith.constant 0 : index
    %158 = vector.load %arg8[%c0_97, %c0_98, %c0_99] : memref<2x32x32xf32, #tpu.memory_space<vmem>>, vector<1x32x32xf32>
    %159 = vector.shape_cast %158 : vector<1x32x32xf32> to vector<32x32xf32>
    %cst_100 = arith.constant dense<0.000000e+00> : vector<8x32xf32>
    %160 = tpu.matmul %153, %159, %cst_100 {dimension_numbers = #tpu.dot_dimension_numbers<[1], [0], [0], [1], [0, 0, 1, 1], [], []>} : vector<8x32xf32>, vector<32x32xf32>, vector<8x32xf32> -> vector<8x32xf32>
    %c0_101 = arith.constant 0 : index
    %c0_102 = arith.constant 0 : index
    %c0_103 = arith.constant 0 : index
    %161 = vector.load %arg9[%c0_101, %c0_102, %c0_103] : memref<2x32x32xf32, #tpu.memory_space<vmem>>, vector<1x32x32xf32>
    %162 = vector.shape_cast %161 : vector<1x32x32xf32> to vector<32x32xf32>
    %cst_104 = arith.constant dense<0.000000e+00> : vector<8x32xf32>
    %163 = tpu.matmul %153, %162, %cst_104 {dimension_numbers = #tpu.dot_dimension_numbers<[1], [0], [0], [1], [0, 0, 1, 1], [], []>} : vector<8x32xf32>, vector<32x32xf32>, vector<8x32xf32> -> vector<8x32xf32>
    %c0_105 = arith.constant 0 : index
    %c0_106 = arith.constant 0 : index
    %c0_107 = arith.constant 0 : index
    %164 = vector.load %arg10[%c0_105, %c0_106, %c0_107] : memref<2x32x32xf32, #tpu.memory_space<vmem>>, vector<1x32x32xf32>
    %165 = vector.shape_cast %164 : vector<1x32x32xf32> to vector<32x32xf32>
    %cst_108 = arith.constant dense<0.000000e+00> : vector<8x32xf32>
    %166 = tpu.matmul %153, %165, %cst_108 {dimension_numbers = #tpu.dot_dimension_numbers<[1], [0], [0], [1], [0, 0, 1, 1], [], []>} : vector<8x32xf32>, vector<32x32xf32>, vector<8x32xf32> -> vector<8x32xf32>
    %167 = arith.addf %166, %34 : vector<8x32xf32>
    %168 = arith.index_cast %157 : i32 to index
    %c0_109 = arith.constant 0 : index
    %169 = vector.load %arg16[%168, %c0_109] : memref<64x32xf32, #tpu.memory_space<vmem>>, vector<8x32xf32>
    %170 = arith.addf %169, %160 : vector<8x32xf32>
    %171 = arith.negf %170 : vector<8x32xf32>
    %172 = math.exp %171 : vector<8x32xf32>
    %cst_110 = arith.constant 1.000000e+00 : f32
    %173 = vector.broadcast %cst_110 : f32 to vector<8x32xf32>
    %174 = arith.addf %173, %172 : vector<8x32xf32>
    %175 = arith.divf %173, %174 : vector<8x32xf32>
    %176 = arith.index_cast %157 : i32 to index
    %c0_111 = arith.constant 0 : index
    %177 = vector.load %arg17[%176, %c0_111] : memref<64x32xf32, #tpu.memory_space<vmem>>, vector<8x32xf32>
    %178 = arith.addf %177, %163 : vector<8x32xf32>
    %179 = arith.negf %178 : vector<8x32xf32>
    %180 = math.exp %179 : vector<8x32xf32>
    %cst_112 = arith.constant 1.000000e+00 : f32
    %181 = vector.broadcast %cst_112 : f32 to vector<8x32xf32>
    %182 = arith.addf %181, %180 : vector<8x32xf32>
    %183 = arith.divf %181, %182 : vector<8x32xf32>
    %184 = arith.index_cast %157 : i32 to index
    %c0_113 = arith.constant 0 : index
    %185 = vector.load %arg18[%184, %c0_113] : memref<64x32xf32, #tpu.memory_space<vmem>>, vector<8x32xf32>
    %186 = arith.mulf %175, %167 : vector<8x32xf32>
    %187 = arith.addf %185, %186 : vector<8x32xf32>
    %188 = math.tanh %187 : vector<8x32xf32>
    %cst_114 = arith.constant 1.000000e+00 : f32
    %189 = vector.broadcast %cst_114 : f32 to vector<8x32xf32>
    %190 = arith.subf %189, %183 : vector<8x32xf32>
    %191 = arith.mulf %190, %188 : vector<8x32xf32>
    %192 = arith.mulf %183, %153 : vector<8x32xf32>
    %193 = arith.addf %191, %192 : vector<8x32xf32>
    %194 = arith.index_cast %157 : i32 to index
    %c0_115 = arith.constant 0 : index
    %195 = vector.load %arg19[%194, %c0_115] : memref<64x32xf32, #tpu.memory_space<vmem>>, vector<8x32xf32>
    tpu.vector_store %arg19[%194, %c0_115], %193 {strides = array<i32>} : memref<64x32xf32, #tpu.memory_space<vmem>>, vector<8x32xf32>,
    %c4_i32 = arith.constant 4 : i32
    %c8_i32_116 = arith.constant 8 : i32
    %196 = arith.muli %c4_i32, %c8_i32_116 : i32
    %197 = tpu.assume_multiple %196, 8 : i32
    %c0_117 = arith.constant 0 : index
    %c0_118 = arith.constant 0 : index
    %c0_119 = arith.constant 0 : index
    %198 = vector.load %arg8[%c0_117, %c0_118, %c0_119] : memref<2x32x32xf32, #tpu.memory_space<vmem>>, vector<1x32x32xf32>
    %199 = vector.shape_cast %198 : vector<1x32x32xf32> to vector<32x32xf32>
    %cst_120 = arith.constant dense<0.000000e+00> : vector<8x32xf32>
    %200 = tpu.matmul %193, %199, %cst_120 {dimension_numbers = #tpu.dot_dimension_numbers<[1], [0], [0], [1], [0, 0, 1, 1], [], []>} : vector<8x32xf32>, vector<32x32xf32>, vector<8x32xf32> -> vector<8x32xf32>
    %c0_121 = arith.constant 0 : index
    %c0_122 = arith.constant 0 : index
    %c0_123 = arith.constant 0 : index
    %201 = vector.load %arg9[%c0_121, %c0_122, %c0_123] : memref<2x32x32xf32, #tpu.memory_space<vmem>>, vector<1x32x32xf32>
    %202 = vector.shape_cast %201 : vector<1x32x32xf32> to vector<32x32xf32>
    %cst_124 = arith.constant dense<0.000000e+00> : vector<8x32xf32>
    %203 = tpu.matmul %193, %202, %cst_124 {dimension_numbers = #tpu.dot_dimension_numbers<[1], [0], [0], [1], [0, 0, 1, 1], [], []>} : vector<8x32xf32>, vector<32x32xf32>, vector<8x32xf32> -> vector<8x32xf32>
    %c0_125 = arith.constant 0 : index
    %c0_126 = arith.constant 0 : index
    %c0_127 = arith.constant 0 : index
    %204 = vector.load %arg10[%c0_125, %c0_126, %c0_127] : memref<2x32x32xf32, #tpu.memory_space<vmem>>, vector<1x32x32xf32>
    %205 = vector.shape_cast %204 : vector<1x32x32xf32> to vector<32x32xf32>
    %cst_128 = arith.constant dense<0.000000e+00> : vector<8x32xf32>
    %206 = tpu.matmul %193, %205, %cst_128 {dimension_numbers = #tpu.dot_dimension_numbers<[1], [0], [0], [1], [0, 0, 1, 1], [], []>} : vector<8x32xf32>, vector<32x32xf32>, vector<8x32xf32> -> vector<8x32xf32>
    %207 = arith.addf %206, %34 : vector<8x32xf32>
    %208 = arith.index_cast %197 : i32 to index
    %c0_129 = arith.constant 0 : index
    %209 = vector.load %arg16[%208, %c0_129] : memref<64x32xf32, #tpu.memory_space<vmem>>, vector<8x32xf32>
    %210 = arith.addf %209, %200 : vector<8x32xf32>
    %211 = arith.negf %210 : vector<8x32xf32>
    %212 = math.exp %211 : vector<8x32xf32>
    %cst_130 = arith.constant 1.000000e+00 : f32
    %213 = vector.broadcast %cst_130 : f32 to vector<8x32xf32>
    %214 = arith.addf %213, %212 : vector<8x32xf32>
    %215 = arith.divf %213, %214 : vector<8x32xf32>
    %216 = arith.index_cast %197 : i32 to index
    %c0_131 = arith.constant 0 : index
    %217 = vector.load %arg17[%216, %c0_131] : memref<64x32xf32, #tpu.memory_space<vmem>>, vector<8x32xf32>
    %218 = arith.addf %217, %203 : vector<8x32xf32>
    %219 = arith.negf %218 : vector<8x32xf32>
    %220 = math.exp %219 : vector<8x32xf32>
    %cst_132 = arith.constant 1.000000e+00 : f32
    %221 = vector.broadcast %cst_132 : f32 to vector<8x32xf32>
    %222 = arith.addf %221, %220 : vector<8x32xf32>
    %223 = arith.divf %221, %222 : vector<8x32xf32>
    %224 = arith.index_cast %197 : i32 to index
    %c0_133 = arith.constant 0 : index
    %225 = vector.load %arg18[%224, %c0_133] : memref<64x32xf32, #tpu.memory_space<vmem>>, vector<8x32xf32>
    %226 = arith.mulf %215, %207 : vector<8x32xf32>
    %227 = arith.addf %225, %226 : vector<8x32xf32>
    %228 = math.tanh %227 : vector<8x32xf32>
    %cst_134 = arith.constant 1.000000e+00 : f32
    %229 = vector.broadcast %cst_134 : f32 to vector<8x32xf32>
    %230 = arith.subf %229, %223 : vector<8x32xf32>
    %231 = arith.mulf %230, %228 : vector<8x32xf32>
    %232 = arith.mulf %223, %193 : vector<8x32xf32>
    %233 = arith.addf %231, %232 : vector<8x32xf32>
    %234 = arith.index_cast %197 : i32 to index
    %c0_135 = arith.constant 0 : index
    %235 = vector.load %arg19[%234, %c0_135] : memref<64x32xf32, #tpu.memory_space<vmem>>, vector<8x32xf32>
    tpu.vector_store %arg19[%234, %c0_135], %233 {strides = array<i32>} : memref<64x32xf32, #tpu.memory_space<vmem>>, vector<8x32xf32>,
    %c5_i32 = arith.constant 5 : i32
    %c8_i32_136 = arith.constant 8 : i32
    %236 = arith.muli %c5_i32, %c8_i32_136 : i32
    %237 = tpu.assume_multiple %236, 8 : i32
    %c0_137 = arith.constant 0 : index
    %c0_138 = arith.constant 0 : index
    %c0_139 = arith.constant 0 : index
    %238 = vector.load %arg8[%c0_137, %c0_138, %c0_139] : memref<2x32x32xf32, #tpu.memory_space<vmem>>, vector<1x32x32xf32>
    %239 = vector.shape_cast %238 : vector<1x32x32xf32> to vector<32x32xf32>
    %cst_140 = arith.constant dense<0.000000e+00> : vector<8x32xf32>
    %240 = tpu.matmul %233, %239, %cst_140 {dimension_numbers = #tpu.dot_dimension_numbers<[1], [0], [0], [1], [0, 0, 1, 1], [], []>} : vector<8x32xf32>, vector<32x32xf32>, vector<8x32xf32> -> vector<8x32xf32>
    %c0_141 = arith.constant 0 : index
    %c0_142 = arith.constant 0 : index
    %c0_143 = arith.constant 0 : index
    %241 = vector.load %arg9[%c0_141, %c0_142, %c0_143] : memref<2x32x32xf32, #tpu.memory_space<vmem>>, vector<1x32x32xf32>
    %242 = vector.shape_cast %241 : vector<1x32x32xf32> to vector<32x32xf32>
    %cst_144 = arith.constant dense<0.000000e+00> : vector<8x32xf32>
    %243 = tpu.matmul %233, %242, %cst_144 {dimension_numbers = #tpu.dot_dimension_numbers<[1], [0], [0], [1], [0, 0, 1, 1], [], []>} : vector<8x32xf32>, vector<32x32xf32>, vector<8x32xf32> -> vector<8x32xf32>
    %c0_145 = arith.constant 0 : index
    %c0_146 = arith.constant 0 : index
    %c0_147 = arith.constant 0 : index
    %244 = vector.load %arg10[%c0_145, %c0_146, %c0_147] : memref<2x32x32xf32, #tpu.memory_space<vmem>>, vector<1x32x32xf32>
    %245 = vector.shape_cast %244 : vector<1x32x32xf32> to vector<32x32xf32>
    %cst_148 = arith.constant dense<0.000000e+00> : vector<8x32xf32>
    %246 = tpu.matmul %233, %245, %cst_148 {dimension_numbers = #tpu.dot_dimension_numbers<[1], [0], [0], [1], [0, 0, 1, 1], [], []>} : vector<8x32xf32>, vector<32x32xf32>, vector<8x32xf32> -> vector<8x32xf32>
    %247 = arith.addf %246, %34 : vector<8x32xf32>
    %248 = arith.index_cast %237 : i32 to index
    %c0_149 = arith.constant 0 : index
    %249 = vector.load %arg16[%248, %c0_149] : memref<64x32xf32, #tpu.memory_space<vmem>>, vector<8x32xf32>
    %250 = arith.addf %249, %240 : vector<8x32xf32>
    %251 = arith.negf %250 : vector<8x32xf32>
    %252 = math.exp %251 : vector<8x32xf32>
    %cst_150 = arith.constant 1.000000e+00 : f32
    %253 = vector.broadcast %cst_150 : f32 to vector<8x32xf32>
    %254 = arith.addf %253, %252 : vector<8x32xf32>
    %255 = arith.divf %253, %254 : vector<8x32xf32>
    %256 = arith.index_cast %237 : i32 to index
    %c0_151 = arith.constant 0 : index
    %257 = vector.load %arg17[%256, %c0_151] : memref<64x32xf32, #tpu.memory_space<vmem>>, vector<8x32xf32>
    %258 = arith.addf %257, %243 : vector<8x32xf32>
    %259 = arith.negf %258 : vector<8x32xf32>
    %260 = math.exp %259 : vector<8x32xf32>
    %cst_152 = arith.constant 1.000000e+00 : f32
    %261 = vector.broadcast %cst_152 : f32 to vector<8x32xf32>
    %262 = arith.addf %261, %260 : vector<8x32xf32>
    %263 = arith.divf %261, %262 : vector<8x32xf32>
    %264 = arith.index_cast %237 : i32 to index
    %c0_153 = arith.constant 0 : index
    %265 = vector.load %arg18[%264, %c0_153] : memref<64x32xf32, #tpu.memory_space<vmem>>, vector<8x32xf32>
    %266 = arith.mulf %255, %247 : vector<8x32xf32>
    %267 = arith.addf %265, %266 : vector<8x32xf32>
    %268 = math.tanh %267 : vector<8x32xf32>
    %cst_154 = arith.constant 1.000000e+00 : f32
    %269 = vector.broadcast %cst_154 : f32 to vector<8x32xf32>
    %270 = arith.subf %269, %263 : vector<8x32xf32>
    %271 = arith.mulf %270, %268 : vector<8x32xf32>
    %272 = arith.mulf %263, %233 : vector<8x32xf32>
    %273 = arith.addf %271, %272 : vector<8x32xf32>
    %274 = arith.index_cast %237 : i32 to index
    %c0_155 = arith.constant 0 : index
    %275 = vector.load %arg19[%274, %c0_155] : memref<64x32xf32, #tpu.memory_space<vmem>>, vector<8x32xf32>
    tpu.vector_store %arg19[%274, %c0_155], %273 {strides = array<i32>} : memref<64x32xf32, #tpu.memory_space<vmem>>, vector<8x32xf32>,
    %c6_i32 = arith.constant 6 : i32
    %c8_i32_156 = arith.constant 8 : i32
    %276 = arith.muli %c6_i32, %c8_i32_156 : i32
    %277 = tpu.assume_multiple %276, 8 : i32
    %c0_157 = arith.constant 0 : index
    %c0_158 = arith.constant 0 : index
    %c0_159 = arith.constant 0 : index
    %278 = vector.load %arg8[%c0_157, %c0_158, %c0_159] : memref<2x32x32xf32, #tpu.memory_space<vmem>>, vector<1x32x32xf32>
    %279 = vector.shape_cast %278 : vector<1x32x32xf32> to vector<32x32xf32>
    %cst_160 = arith.constant dense<0.000000e+00> : vector<8x32xf32>
    %280 = tpu.matmul %273, %279, %cst_160 {dimension_numbers = #tpu.dot_dimension_numbers<[1], [0], [0], [1], [0, 0, 1, 1], [], []>} : vector<8x32xf32>, vector<32x32xf32>, vector<8x32xf32> -> vector<8x32xf32>
    %c0_161 = arith.constant 0 : index
    %c0_162 = arith.constant 0 : index
    %c0_163 = arith.constant 0 : index
    %281 = vector.load %arg9[%c0_161, %c0_162, %c0_163] : memref<2x32x32xf32, #tpu.memory_space<vmem>>, vector<1x32x32xf32>
    %282 = vector.shape_cast %281 : vector<1x32x32xf32> to vector<32x32xf32>
    %cst_164 = arith.constant dense<0.000000e+00> : vector<8x32xf32>
    %283 = tpu.matmul %273, %282, %cst_164 {dimension_numbers = #tpu.dot_dimension_numbers<[1], [0], [0], [1], [0, 0, 1, 1], [], []>} : vector<8x32xf32>, vector<32x32xf32>, vector<8x32xf32> -> vector<8x32xf32>
    %c0_165 = arith.constant 0 : index
    %c0_166 = arith.constant 0 : index
    %c0_167 = arith.constant 0 : index
    %284 = vector.load %arg10[%c0_165, %c0_166, %c0_167] : memref<2x32x32xf32, #tpu.memory_space<vmem>>, vector<1x32x32xf32>
    %285 = vector.shape_cast %284 : vector<1x32x32xf32> to vector<32x32xf32>
    %cst_168 = arith.constant dense<0.000000e+00> : vector<8x32xf32>
    %286 = tpu.matmul %273, %285, %cst_168 {dimension_numbers = #tpu.dot_dimension_numbers<[1], [0], [0], [1], [0, 0, 1, 1], [], []>} : vector<8x32xf32>, vector<32x32xf32>, vector<8x32xf32> -> vector<8x32xf32>
    %287 = arith.addf %286, %34 : vector<8x32xf32>
    %288 = arith.index_cast %277 : i32 to index
    %c0_169 = arith.constant 0 : index
    %289 = vector.load %arg16[%288, %c0_169] : memref<64x32xf32, #tpu.memory_space<vmem>>, vector<8x32xf32>
    %290 = arith.addf %289, %280 : vector<8x32xf32>
    %291 = arith.negf %290 : vector<8x32xf32>
    %292 = math.exp %291 : vector<8x32xf32>
    %cst_170 = arith.constant 1.000000e+00 : f32
    %293 = vector.broadcast %cst_170 : f32 to vector<8x32xf32>
    %294 = arith.addf %293, %292 : vector<8x32xf32>
    %295 = arith.divf %293, %294 : vector<8x32xf32>
    %296 = arith.index_cast %277 : i32 to index
    %c0_171 = arith.constant 0 : index
    %297 = vector.load %arg17[%296, %c0_171] : memref<64x32xf32, #tpu.memory_space<vmem>>, vector<8x32xf32>
    %298 = arith.addf %297, %283 : vector<8x32xf32>
    %299 = arith.negf %298 : vector<8x32xf32>
    %300 = math.exp %299 : vector<8x32xf32>
    %cst_172 = arith.constant 1.000000e+00 : f32
    %301 = vector.broadcast %cst_172 : f32 to vector<8x32xf32>
    %302 = arith.addf %301, %300 : vector<8x32xf32>
    %303 = arith.divf %301, %302 : vector<8x32xf32>
    %304 = arith.index_cast %277 : i32 to index
    %c0_173 = arith.constant 0 : index
    %305 = vector.load %arg18[%304, %c0_173] : memref<64x32xf32, #tpu.memory_space<vmem>>, vector<8x32xf32>
    %306 = arith.mulf %295, %287 : vector<8x32xf32>
    %307 = arith.addf %305, %306 : vector<8x32xf32>
    %308 = math.tanh %307 : vector<8x32xf32>
    %cst_174 = arith.constant 1.000000e+00 : f32
    %309 = vector.broadcast %cst_174 : f32 to vector<8x32xf32>
    %310 = arith.subf %309, %303 : vector<8x32xf32>
    %311 = arith.mulf %310, %308 : vector<8x32xf32>
    %312 = arith.mulf %303, %273 : vector<8x32xf32>
    %313 = arith.addf %311, %312 : vector<8x32xf32>
    %314 = arith.index_cast %277 : i32 to index
    %c0_175 = arith.constant 0 : index
    %315 = vector.load %arg19[%314, %c0_175] : memref<64x32xf32, #tpu.memory_space<vmem>>, vector<8x32xf32>
    tpu.vector_store %arg19[%314, %c0_175], %313 {strides = array<i32>} : memref<64x32xf32, #tpu.memory_space<vmem>>, vector<8x32xf32>,
    %c7_i32 = arith.constant 7 : i32
    %c8_i32_176 = arith.constant 8 : i32
    %316 = arith.muli %c7_i32, %c8_i32_176 : i32
    %317 = tpu.assume_multiple %316, 8 : i32
    %c0_177 = arith.constant 0 : index
    %c0_178 = arith.constant 0 : index
    %c0_179 = arith.constant 0 : index
    %318 = vector.load %arg8[%c0_177, %c0_178, %c0_179] : memref<2x32x32xf32, #tpu.memory_space<vmem>>, vector<1x32x32xf32>
    %319 = vector.shape_cast %318 : vector<1x32x32xf32> to vector<32x32xf32>
    %cst_180 = arith.constant dense<0.000000e+00> : vector<8x32xf32>
    %320 = tpu.matmul %313, %319, %cst_180 {dimension_numbers = #tpu.dot_dimension_numbers<[1], [0], [0], [1], [0, 0, 1, 1], [], []>} : vector<8x32xf32>, vector<32x32xf32>, vector<8x32xf32> -> vector<8x32xf32>
    %c0_181 = arith.constant 0 : index
    %c0_182 = arith.constant 0 : index
    %c0_183 = arith.constant 0 : index
    %321 = vector.load %arg9[%c0_181, %c0_182, %c0_183] : memref<2x32x32xf32, #tpu.memory_space<vmem>>, vector<1x32x32xf32>
    %322 = vector.shape_cast %321 : vector<1x32x32xf32> to vector<32x32xf32>
    %cst_184 = arith.constant dense<0.000000e+00> : vector<8x32xf32>
    %323 = tpu.matmul %313, %322, %cst_184 {dimension_numbers = #tpu.dot_dimension_numbers<[1], [0], [0], [1], [0, 0, 1, 1], [], []>} : vector<8x32xf32>, vector<32x32xf32>, vector<8x32xf32> -> vector<8x32xf32>
    %c0_185 = arith.constant 0 : index
    %c0_186 = arith.constant 0 : index
    %c0_187 = arith.constant 0 : index
    %324 = vector.load %arg10[%c0_185, %c0_186, %c0_187] : memref<2x32x32xf32, #tpu.memory_space<vmem>>, vector<1x32x32xf32>
    %325 = vector.shape_cast %324 : vector<1x32x32xf32> to vector<32x32xf32>
    %cst_188 = arith.constant dense<0.000000e+00> : vector<8x32xf32>
    %326 = tpu.matmul %313, %325, %cst_188 {dimension_numbers = #tpu.dot_dimension_numbers<[1], [0], [0], [1], [0, 0, 1, 1], [], []>} : vector<8x32xf32>, vector<32x32xf32>, vector<8x32xf32> -> vector<8x32xf32>
    %327 = arith.addf %326, %34 : vector<8x32xf32>
    %328 = arith.index_cast %317 : i32 to index
    %c0_189 = arith.constant 0 : index
    %329 = vector.load %arg16[%328, %c0_189] : memref<64x32xf32, #tpu.memory_space<vmem>>, vector<8x32xf32>
    %330 = arith.addf %329, %320 : vector<8x32xf32>
    %331 = arith.negf %330 : vector<8x32xf32>
    %332 = math.exp %331 : vector<8x32xf32>
    %cst_190 = arith.constant 1.000000e+00 : f32
    %333 = vector.broadcast %cst_190 : f32 to vector<8x32xf32>
    %334 = arith.addf %333, %332 : vector<8x32xf32>
    %335 = arith.divf %333, %334 : vector<8x32xf32>
    %336 = arith.index_cast %317 : i32 to index
    %c0_191 = arith.constant 0 : index
    %337 = vector.load %arg17[%336, %c0_191] : memref<64x32xf32, #tpu.memory_space<vmem>>, vector<8x32xf32>
    %338 = arith.addf %337, %323 : vector<8x32xf32>
    %339 = arith.negf %338 : vector<8x32xf32>
    %340 = math.exp %339 : vector<8x32xf32>
    %cst_192 = arith.constant 1.000000e+00 : f32
    %341 = vector.broadcast %cst_192 : f32 to vector<8x32xf32>
    %342 = arith.addf %341, %340 : vector<8x32xf32>
    %343 = arith.divf %341, %342 : vector<8x32xf32>
    %344 = arith.index_cast %317 : i32 to index
    %c0_193 = arith.constant 0 : index
    %345 = vector.load %arg18[%344, %c0_193] : memref<64x32xf32, #tpu.memory_space<vmem>>, vector<8x32xf32>
    %346 = arith.mulf %335, %327 : vector<8x32xf32>
    %347 = arith.addf %345, %346 : vector<8x32xf32>
    %348 = math.tanh %347 : vector<8x32xf32>
    %cst_194 = arith.constant 1.000000e+00 : f32
    %349 = vector.broadcast %cst_194 : f32 to vector<8x32xf32>
    %350 = arith.subf %349, %343 : vector<8x32xf32>
    %351 = arith.mulf %350, %348 : vector<8x32xf32>
    %352 = arith.mulf %343, %313 : vector<8x32xf32>
    %353 = arith.addf %351, %352 : vector<8x32xf32>
    %354 = arith.index_cast %317 : i32 to index
    %c0_195 = arith.constant 0 : index
    %355 = vector.load %arg19[%354, %c0_195] : memref<64x32xf32, #tpu.memory_space<vmem>>, vector<8x32xf32>
    tpu.vector_store %arg19[%354, %c0_195], %353 {strides = array<i32>} : memref<64x32xf32, #tpu.memory_space<vmem>>, vector<8x32xf32>,
    %c8_i32_196 = arith.constant 8 : i32
    %c0_197 = arith.constant 0 : index
    %c0_198 = arith.constant 0 : index
    %356 = vector.load %arg19[%c0_197, %c0_198] : memref<64x32xf32, #tpu.memory_space<vmem>>, vector<64x32xf32>
    %c1 = arith.constant 1 : index
    %c0_199 = arith.constant 0 : index
    %c0_200 = arith.constant 0 : index
    %357 = vector.load %arg5[%c1, %c0_199, %c0_200] : memref<2x32x32xf32, #tpu.memory_space<vmem>>, vector<1x32x32xf32>
    %358 = vector.shape_cast %357 : vector<1x32x32xf32> to vector<32x32xf32>
    %cst_201 = arith.constant dense<0.000000e+00> : vector<64x32xf32>
    %359 = tpu.matmul %356, %358, %cst_201 {dimension_numbers = #tpu.dot_dimension_numbers<[1], [0], [0], [1], [0, 0, 1, 1], [], []>} : vector<64x32xf32>, vector<32x32xf32>, vector<64x32xf32> -> vector<64x32xf32>
    %c1_202 = arith.constant 1 : index
    %c0_203 = arith.constant 0 : index
    %c0_204 = arith.constant 0 : index
    %360 = vector.load %arg11[%c1_202, %c0_203, %c0_204] : memref<2x1x32xf32, #tpu.memory_space<vmem>>, vector<1x1x32xf32>
    %361 = vector.shape_cast %360 : vector<1x1x32xf32> to vector<1x32xf32>
    %362 = vector.broadcast %361 : vector<1x32xf32> to vector<64x32xf32>
    %363 = arith.addf %359, %362 : vector<64x32xf32>
    %c0_205 = arith.constant 0 : index
    %c0_206 = arith.constant 0 : index
    %364 = vector.load %arg16[%c0_205, %c0_206] : memref<64x32xf32, #tpu.memory_space<vmem>>, vector<64x32xf32>
    tpu.vector_store %arg16[%c0_205, %c0_206], %363 {strides = array<i32>} : memref<64x32xf32, #tpu.memory_space<vmem>>, vector<64x32xf32>,
    %c1_207 = arith.constant 1 : index
    %c0_208 = arith.constant 0 : index
    %c0_209 = arith.constant 0 : index
    %365 = vector.load %arg6[%c1_207, %c0_208, %c0_209] : memref<2x32x32xf32, #tpu.memory_space<vmem>>, vector<1x32x32xf32>
    %366 = vector.shape_cast %365 : vector<1x32x32xf32> to vector<32x32xf32>
    %cst_210 = arith.constant dense<0.000000e+00> : vector<64x32xf32>
    %367 = tpu.matmul %356, %366, %cst_210 {dimension_numbers = #tpu.dot_dimension_numbers<[1], [0], [0], [1], [0, 0, 1, 1], [], []>} : vector<64x32xf32>, vector<32x32xf32>, vector<64x32xf32> -> vector<64x32xf32>
    %c1_211 = arith.constant 1 : index
    %c0_212 = arith.constant 0 : index
    %c0_213 = arith.constant 0 : index
    %368 = vector.load %arg12[%c1_211, %c0_212, %c0_213] : memref<2x1x32xf32, #tpu.memory_space<vmem>>, vector<1x1x32xf32>
    %369 = vector.shape_cast %368 : vector<1x1x32xf32> to vector<1x32xf32>
    %370 = vector.broadcast %369 : vector<1x32xf32> to vector<64x32xf32>
    %371 = arith.addf %367, %370 : vector<64x32xf32>
    %c0_214 = arith.constant 0 : index
    %c0_215 = arith.constant 0 : index
    %372 = vector.load %arg17[%c0_214, %c0_215] : memref<64x32xf32, #tpu.memory_space<vmem>>, vector<64x32xf32>
    tpu.vector_store %arg17[%c0_214, %c0_215], %371 {strides = array<i32>} : memref<64x32xf32, #tpu.memory_space<vmem>>, vector<64x32xf32>,
    %c1_216 = arith.constant 1 : index
    %c0_217 = arith.constant 0 : index
    %c0_218 = arith.constant 0 : index
    %373 = vector.load %arg7[%c1_216, %c0_217, %c0_218] : memref<2x32x32xf32, #tpu.memory_space<vmem>>, vector<1x32x32xf32>
    %374 = vector.shape_cast %373 : vector<1x32x32xf32> to vector<32x32xf32>
    %cst_219 = arith.constant dense<0.000000e+00> : vector<64x32xf32>
    %375 = tpu.matmul %356, %374, %cst_219 {dimension_numbers = #tpu.dot_dimension_numbers<[1], [0], [0], [1], [0, 0, 1, 1], [], []>} : vector<64x32xf32>, vector<32x32xf32>, vector<64x32xf32> -> vector<64x32xf32>
    %c1_220 = arith.constant 1 : index
    %c0_221 = arith.constant 0 : index
    %c0_222 = arith.constant 0 : index
    %376 = vector.load %arg13[%c1_220, %c0_221, %c0_222] : memref<2x1x32xf32, #tpu.memory_space<vmem>>, vector<1x1x32xf32>
    %377 = vector.shape_cast %376 : vector<1x1x32xf32> to vector<1x32xf32>
    %378 = vector.broadcast %377 : vector<1x32xf32> to vector<64x32xf32>
    %379 = arith.addf %375, %378 : vector<64x32xf32>
    %c0_223 = arith.constant 0 : index
    %c0_224 = arith.constant 0 : index
    %380 = vector.load %arg18[%c0_223, %c0_224] : memref<64x32xf32, #tpu.memory_space<vmem>>, vector<64x32xf32>
    tpu.vector_store %arg18[%c0_223, %c0_224], %379 {strides = array<i32>} : memref<64x32xf32, #tpu.memory_space<vmem>>, vector<64x32xf32>,
    %c1_225 = arith.constant 1 : index
    %c0_226 = arith.constant 0 : index
    %c0_227 = arith.constant 0 : index
    %381 = vector.load %arg14[%c1_225, %c0_226, %c0_227] : memref<2x1x32xf32, #tpu.memory_space<vmem>>, vector<1x1x32xf32>
    %382 = vector.shape_cast %381 : vector<1x1x32xf32> to vector<1x32xf32>
    %383 = vector.shape_cast %382 : vector<1x32xf32> to vector<1x32xf32>
    %384 = vector.broadcast %383 : vector<1x32xf32> to vector<8x32xf32>
    %cst_228 = arith.constant 0.000000e+00 : f32
    %385 = vector.broadcast %cst_228 : f32 to vector<8x32xf32>
    %c0_i32_229 = arith.constant 0 : i32
    %c8_i32_230 = arith.constant 8 : i32
    %386 = arith.muli %c0_i32_229, %c8_i32_230 : i32
    %387 = tpu.assume_multiple %386, 8 : i32
    %c1_231 = arith.constant 1 : index
    %c0_232 = arith.constant 0 : index
    %c0_233 = arith.constant 0 : index
    %388 = vector.load %arg8[%c1_231, %c0_232, %c0_233] : memref<2x32x32xf32, #tpu.memory_space<vmem>>, vector<1x32x32xf32>
    %389 = vector.shape_cast %388 : vector<1x32x32xf32> to vector<32x32xf32>
    %cst_234 = arith.constant dense<0.000000e+00> : vector<8x32xf32>
    %390 = tpu.matmul %385, %389, %cst_234 {dimension_numbers = #tpu.dot_dimension_numbers<[1], [0], [0], [1], [0, 0, 1, 1], [], []>} : vector<8x32xf32>, vector<32x32xf32>, vector<8x32xf32> -> vector<8x32xf32>
    %c1_235 = arith.constant 1 : index
    %c0_236 = arith.constant 0 : index
    %c0_237 = arith.constant 0 : index
    %391 = vector.load %arg9[%c1_235, %c0_236, %c0_237] : memref<2x32x32xf32, #tpu.memory_space<vmem>>, vector<1x32x32xf32>
    %392 = vector.shape_cast %391 : vector<1x32x32xf32> to vector<32x32xf32>
    %cst_238 = arith.constant dense<0.000000e+00> : vector<8x32xf32>
    %393 = tpu.matmul %385, %392, %cst_238 {dimension_numbers = #tpu.dot_dimension_numbers<[1], [0], [0], [1], [0, 0, 1, 1], [], []>} : vector<8x32xf32>, vector<32x32xf32>, vector<8x32xf32> -> vector<8x32xf32>
    %c1_239 = arith.constant 1 : index
    %c0_240 = arith.constant 0 : index
    %c0_241 = arith.constant 0 : index
    %394 = vector.load %arg10[%c1_239, %c0_240, %c0_241] : memref<2x32x32xf32, #tpu.memory_space<vmem>>, vector<1x32x32xf32>
    %395 = vector.shape_cast %394 : vector<1x32x32xf32> to vector<32x32xf32>
    %cst_242 = arith.constant dense<0.000000e+00> : vector<8x32xf32>
    %396 = tpu.matmul %385, %395, %cst_242 {dimension_numbers = #tpu.dot_dimension_numbers<[1], [0], [0], [1], [0, 0, 1, 1], [], []>} : vector<8x32xf32>, vector<32x32xf32>, vector<8x32xf32> -> vector<8x32xf32>
    %397 = arith.addf %396, %384 : vector<8x32xf32>
    %398 = arith.index_cast %387 : i32 to index
    %c0_243 = arith.constant 0 : index
    %399 = vector.load %arg16[%398, %c0_243] : memref<64x32xf32, #tpu.memory_space<vmem>>, vector<8x32xf32>
    %400 = arith.addf %399, %390 : vector<8x32xf32>
    %401 = arith.negf %400 : vector<8x32xf32>
    %402 = math.exp %401 : vector<8x32xf32>
    %cst_244 = arith.constant 1.000000e+00 : f32
    %403 = vector.broadcast %cst_244 : f32 to vector<8x32xf32>
    %404 = arith.addf %403, %402 : vector<8x32xf32>
    %405 = arith.divf %403, %404 : vector<8x32xf32>
    %406 = arith.index_cast %387 : i32 to index
    %c0_245 = arith.constant 0 : index
    %407 = vector.load %arg17[%406, %c0_245] : memref<64x32xf32, #tpu.memory_space<vmem>>, vector<8x32xf32>
    %408 = arith.addf %407, %393 : vector<8x32xf32>
    %409 = arith.negf %408 : vector<8x32xf32>
    %410 = math.exp %409 : vector<8x32xf32>
    %cst_246 = arith.constant 1.000000e+00 : f32
    %411 = vector.broadcast %cst_246 : f32 to vector<8x32xf32>
    %412 = arith.addf %411, %410 : vector<8x32xf32>
    %413 = arith.divf %411, %412 : vector<8x32xf32>
    %414 = arith.index_cast %387 : i32 to index
    %c0_247 = arith.constant 0 : index
    %415 = vector.load %arg18[%414, %c0_247] : memref<64x32xf32, #tpu.memory_space<vmem>>, vector<8x32xf32>
    %416 = arith.mulf %405, %397 : vector<8x32xf32>
    %417 = arith.addf %415, %416 : vector<8x32xf32>
    %418 = math.tanh %417 : vector<8x32xf32>
    %cst_248 = arith.constant 1.000000e+00 : f32
    %419 = vector.broadcast %cst_248 : f32 to vector<8x32xf32>
    %420 = arith.subf %419, %413 : vector<8x32xf32>
    %421 = arith.mulf %420, %418 : vector<8x32xf32>
    %422 = arith.mulf %413, %385 : vector<8x32xf32>
    %423 = arith.addf %421, %422 : vector<8x32xf32>
    %c1_i32_249 = arith.constant 1 : i32
    %c8_i32_250 = arith.constant 8 : i32
    %424 = arith.muli %c1_i32_249, %c8_i32_250 : i32
    %425 = tpu.assume_multiple %424, 8 : i32
    %c1_251 = arith.constant 1 : index
    %c0_252 = arith.constant 0 : index
    %c0_253 = arith.constant 0 : index
    %426 = vector.load %arg8[%c1_251, %c0_252, %c0_253] : memref<2x32x32xf32, #tpu.memory_space<vmem>>, vector<1x32x32xf32>
    %427 = vector.shape_cast %426 : vector<1x32x32xf32> to vector<32x32xf32>
    %cst_254 = arith.constant dense<0.000000e+00> : vector<8x32xf32>
    %428 = tpu.matmul %423, %427, %cst_254 {dimension_numbers = #tpu.dot_dimension_numbers<[1], [0], [0], [1], [0, 0, 1, 1], [], []>} : vector<8x32xf32>, vector<32x32xf32>, vector<8x32xf32> -> vector<8x32xf32>
    %c1_255 = arith.constant 1 : index
    %c0_256 = arith.constant 0 : index
    %c0_257 = arith.constant 0 : index
    %429 = vector.load %arg9[%c1_255, %c0_256, %c0_257] : memref<2x32x32xf32, #tpu.memory_space<vmem>>, vector<1x32x32xf32>
    %430 = vector.shape_cast %429 : vector<1x32x32xf32> to vector<32x32xf32>
    %cst_258 = arith.constant dense<0.000000e+00> : vector<8x32xf32>
    %431 = tpu.matmul %423, %430, %cst_258 {dimension_numbers = #tpu.dot_dimension_numbers<[1], [0], [0], [1], [0, 0, 1, 1], [], []>} : vector<8x32xf32>, vector<32x32xf32>, vector<8x32xf32> -> vector<8x32xf32>
    %c1_259 = arith.constant 1 : index
    %c0_260 = arith.constant 0 : index
    %c0_261 = arith.constant 0 : index
    %432 = vector.load %arg10[%c1_259, %c0_260, %c0_261] : memref<2x32x32xf32, #tpu.memory_space<vmem>>, vector<1x32x32xf32>
    %433 = vector.shape_cast %432 : vector<1x32x32xf32> to vector<32x32xf32>
    %cst_262 = arith.constant dense<0.000000e+00> : vector<8x32xf32>
    %434 = tpu.matmul %423, %433, %cst_262 {dimension_numbers = #tpu.dot_dimension_numbers<[1], [0], [0], [1], [0, 0, 1, 1], [], []>} : vector<8x32xf32>, vector<32x32xf32>, vector<8x32xf32> -> vector<8x32xf32>
    %435 = arith.addf %434, %384 : vector<8x32xf32>
    %436 = arith.index_cast %425 : i32 to index
    %c0_263 = arith.constant 0 : index
    %437 = vector.load %arg16[%436, %c0_263] : memref<64x32xf32, #tpu.memory_space<vmem>>, vector<8x32xf32>
    %438 = arith.addf %437, %428 : vector<8x32xf32>
    %439 = arith.negf %438 : vector<8x32xf32>
    %440 = math.exp %439 : vector<8x32xf32>
    %cst_264 = arith.constant 1.000000e+00 : f32
    %441 = vector.broadcast %cst_264 : f32 to vector<8x32xf32>
    %442 = arith.addf %441, %440 : vector<8x32xf32>
    %443 = arith.divf %441, %442 : vector<8x32xf32>
    %444 = arith.index_cast %425 : i32 to index
    %c0_265 = arith.constant 0 : index
    %445 = vector.load %arg17[%444, %c0_265] : memref<64x32xf32, #tpu.memory_space<vmem>>, vector<8x32xf32>
    %446 = arith.addf %445, %431 : vector<8x32xf32>
    %447 = arith.negf %446 : vector<8x32xf32>
    %448 = math.exp %447 : vector<8x32xf32>
    %cst_266 = arith.constant 1.000000e+00 : f32
    %449 = vector.broadcast %cst_266 : f32 to vector<8x32xf32>
    %450 = arith.addf %449, %448 : vector<8x32xf32>
    %451 = arith.divf %449, %450 : vector<8x32xf32>
    %452 = arith.index_cast %425 : i32 to index
    %c0_267 = arith.constant 0 : index
    %453 = vector.load %arg18[%452, %c0_267] : memref<64x32xf32, #tpu.memory_space<vmem>>, vector<8x32xf32>
    %454 = arith.mulf %443, %435 : vector<8x32xf32>
    %455 = arith.addf %453, %454 : vector<8x32xf32>
    %456 = math.tanh %455 : vector<8x32xf32>
    %cst_268 = arith.constant 1.000000e+00 : f32
    %457 = vector.broadcast %cst_268 : f32 to vector<8x32xf32>
    %458 = arith.subf %457, %451 : vector<8x32xf32>
    %459 = arith.mulf %458, %456 : vector<8x32xf32>
    %460 = arith.mulf %451, %423 : vector<8x32xf32>
    %461 = arith.addf %459, %460 : vector<8x32xf32>
    %c2_i32_269 = arith.constant 2 : i32
    %c8_i32_270 = arith.constant 8 : i32
    %462 = arith.muli %c2_i32_269, %c8_i32_270 : i32
    %463 = tpu.assume_multiple %462, 8 : i32
    %c1_271 = arith.constant 1 : index
    %c0_272 = arith.constant 0 : index
    %c0_273 = arith.constant 0 : index
    %464 = vector.load %arg8[%c1_271, %c0_272, %c0_273] : memref<2x32x32xf32, #tpu.memory_space<vmem>>, vector<1x32x32xf32>
    %465 = vector.shape_cast %464 : vector<1x32x32xf32> to vector<32x32xf32>
    %cst_274 = arith.constant dense<0.000000e+00> : vector<8x32xf32>
    %466 = tpu.matmul %461, %465, %cst_274 {dimension_numbers = #tpu.dot_dimension_numbers<[1], [0], [0], [1], [0, 0, 1, 1], [], []>} : vector<8x32xf32>, vector<32x32xf32>, vector<8x32xf32> -> vector<8x32xf32>
    %c1_275 = arith.constant 1 : index
    %c0_276 = arith.constant 0 : index
    %c0_277 = arith.constant 0 : index
    %467 = vector.load %arg9[%c1_275, %c0_276, %c0_277] : memref<2x32x32xf32, #tpu.memory_space<vmem>>, vector<1x32x32xf32>
    %468 = vector.shape_cast %467 : vector<1x32x32xf32> to vector<32x32xf32>
    %cst_278 = arith.constant dense<0.000000e+00> : vector<8x32xf32>
    %469 = tpu.matmul %461, %468, %cst_278 {dimension_numbers = #tpu.dot_dimension_numbers<[1], [0], [0], [1], [0, 0, 1, 1], [], []>} : vector<8x32xf32>, vector<32x32xf32>, vector<8x32xf32> -> vector<8x32xf32>
    %c1_279 = arith.constant 1 : index
    %c0_280 = arith.constant 0 : index
    %c0_281 = arith.constant 0 : index
    %470 = vector.load %arg10[%c1_279, %c0_280, %c0_281] : memref<2x32x32xf32, #tpu.memory_space<vmem>>, vector<1x32x32xf32>
    %471 = vector.shape_cast %470 : vector<1x32x32xf32> to vector<32x32xf32>
    %cst_282 = arith.constant dense<0.000000e+00> : vector<8x32xf32>
    %472 = tpu.matmul %461, %471, %cst_282 {dimension_numbers = #tpu.dot_dimension_numbers<[1], [0], [0], [1], [0, 0, 1, 1], [], []>} : vector<8x32xf32>, vector<32x32xf32>, vector<8x32xf32> -> vector<8x32xf32>
    %473 = arith.addf %472, %384 : vector<8x32xf32>
    %474 = arith.index_cast %463 : i32 to index
    %c0_283 = arith.constant 0 : index
    %475 = vector.load %arg16[%474, %c0_283] : memref<64x32xf32, #tpu.memory_space<vmem>>, vector<8x32xf32>
    %476 = arith.addf %475, %466 : vector<8x32xf32>
    %477 = arith.negf %476 : vector<8x32xf32>
    %478 = math.exp %477 : vector<8x32xf32>
    %cst_284 = arith.constant 1.000000e+00 : f32
    %479 = vector.broadcast %cst_284 : f32 to vector<8x32xf32>
    %480 = arith.addf %479, %478 : vector<8x32xf32>
    %481 = arith.divf %479, %480 : vector<8x32xf32>
    %482 = arith.index_cast %463 : i32 to index
    %c0_285 = arith.constant 0 : index
    %483 = vector.load %arg17[%482, %c0_285] : memref<64x32xf32, #tpu.memory_space<vmem>>, vector<8x32xf32>
    %484 = arith.addf %483, %469 : vector<8x32xf32>
    %485 = arith.negf %484 : vector<8x32xf32>
    %486 = math.exp %485 : vector<8x32xf32>
    %cst_286 = arith.constant 1.000000e+00 : f32
    %487 = vector.broadcast %cst_286 : f32 to vector<8x32xf32>
    %488 = arith.addf %487, %486 : vector<8x32xf32>
    %489 = arith.divf %487, %488 : vector<8x32xf32>
    %490 = arith.index_cast %463 : i32 to index
    %c0_287 = arith.constant 0 : index
    %491 = vector.load %arg18[%490, %c0_287] : memref<64x32xf32, #tpu.memory_space<vmem>>, vector<8x32xf32>
    %492 = arith.mulf %481, %473 : vector<8x32xf32>
    %493 = arith.addf %491, %492 : vector<8x32xf32>
    %494 = math.tanh %493 : vector<8x32xf32>
    %cst_288 = arith.constant 1.000000e+00 : f32
    %495 = vector.broadcast %cst_288 : f32 to vector<8x32xf32>
    %496 = arith.subf %495, %489 : vector<8x32xf32>
    %497 = arith.mulf %496, %494 : vector<8x32xf32>
    %498 = arith.mulf %489, %461 : vector<8x32xf32>
    %499 = arith.addf %497, %498 : vector<8x32xf32>
    %c3_i32_289 = arith.constant 3 : i32
    %c8_i32_290 = arith.constant 8 : i32
    %500 = arith.muli %c3_i32_289, %c8_i32_290 : i32
    %501 = tpu.assume_multiple %500, 8 : i32
    %c1_291 = arith.constant 1 : index
    %c0_292 = arith.constant 0 : index
    %c0_293 = arith.constant 0 : index
    %502 = vector.load %arg8[%c1_291, %c0_292, %c0_293] : memref<2x32x32xf32, #tpu.memory_space<vmem>>, vector<1x32x32xf32>
    %503 = vector.shape_cast %502 : vector<1x32x32xf32> to vector<32x32xf32>
    %cst_294 = arith.constant dense<0.000000e+00> : vector<8x32xf32>
    %504 = tpu.matmul %499, %503, %cst_294 {dimension_numbers = #tpu.dot_dimension_numbers<[1], [0], [0], [1], [0, 0, 1, 1], [], []>} : vector<8x32xf32>, vector<32x32xf32>, vector<8x32xf32> -> vector<8x32xf32>
    %c1_295 = arith.constant 1 : index
    %c0_296 = arith.constant 0 : index
    %c0_297 = arith.constant 0 : index
    %505 = vector.load %arg9[%c1_295, %c0_296, %c0_297] : memref<2x32x32xf32, #tpu.memory_space<vmem>>, vector<1x32x32xf32>
    %506 = vector.shape_cast %505 : vector<1x32x32xf32> to vector<32x32xf32>
    %cst_298 = arith.constant dense<0.000000e+00> : vector<8x32xf32>
    %507 = tpu.matmul %499, %506, %cst_298 {dimension_numbers = #tpu.dot_dimension_numbers<[1], [0], [0], [1], [0, 0, 1, 1], [], []>} : vector<8x32xf32>, vector<32x32xf32>, vector<8x32xf32> -> vector<8x32xf32>
    %c1_299 = arith.constant 1 : index
    %c0_300 = arith.constant 0 : index
    %c0_301 = arith.constant 0 : index
    %508 = vector.load %arg10[%c1_299, %c0_300, %c0_301] : memref<2x32x32xf32, #tpu.memory_space<vmem>>, vector<1x32x32xf32>
    %509 = vector.shape_cast %508 : vector<1x32x32xf32> to vector<32x32xf32>
    %cst_302 = arith.constant dense<0.000000e+00> : vector<8x32xf32>
    %510 = tpu.matmul %499, %509, %cst_302 {dimension_numbers = #tpu.dot_dimension_numbers<[1], [0], [0], [1], [0, 0, 1, 1], [], []>} : vector<8x32xf32>, vector<32x32xf32>, vector<8x32xf32> -> vector<8x32xf32>
    %511 = arith.addf %510, %384 : vector<8x32xf32>
    %512 = arith.index_cast %501 : i32 to index
    %c0_303 = arith.constant 0 : index
    %513 = vector.load %arg16[%512, %c0_303] : memref<64x32xf32, #tpu.memory_space<vmem>>, vector<8x32xf32>
    %514 = arith.addf %513, %504 : vector<8x32xf32>
    %515 = arith.negf %514 : vector<8x32xf32>
    %516 = math.exp %515 : vector<8x32xf32>
    %cst_304 = arith.constant 1.000000e+00 : f32
    %517 = vector.broadcast %cst_304 : f32 to vector<8x32xf32>
    %518 = arith.addf %517, %516 : vector<8x32xf32>
    %519 = arith.divf %517, %518 : vector<8x32xf32>
    %520 = arith.index_cast %501 : i32 to index
    %c0_305 = arith.constant 0 : index
    %521 = vector.load %arg17[%520, %c0_305] : memref<64x32xf32, #tpu.memory_space<vmem>>, vector<8x32xf32>
    %522 = arith.addf %521, %507 : vector<8x32xf32>
    %523 = arith.negf %522 : vector<8x32xf32>
    %524 = math.exp %523 : vector<8x32xf32>
    %cst_306 = arith.constant 1.000000e+00 : f32
    %525 = vector.broadcast %cst_306 : f32 to vector<8x32xf32>
    %526 = arith.addf %525, %524 : vector<8x32xf32>
    %527 = arith.divf %525, %526 : vector<8x32xf32>
    %528 = arith.index_cast %501 : i32 to index
    %c0_307 = arith.constant 0 : index
    %529 = vector.load %arg18[%528, %c0_307] : memref<64x32xf32, #tpu.memory_space<vmem>>, vector<8x32xf32>
    %530 = arith.mulf %519, %511 : vector<8x32xf32>
    %531 = arith.addf %529, %530 : vector<8x32xf32>
    %532 = math.tanh %531 : vector<8x32xf32>
    %cst_308 = arith.constant 1.000000e+00 : f32
    %533 = vector.broadcast %cst_308 : f32 to vector<8x32xf32>
    %534 = arith.subf %533, %527 : vector<8x32xf32>
    %535 = arith.mulf %534, %532 : vector<8x32xf32>
    %536 = arith.mulf %527, %499 : vector<8x32xf32>
    %537 = arith.addf %535, %536 : vector<8x32xf32>
    %c4_i32_309 = arith.constant 4 : i32
    %c8_i32_310 = arith.constant 8 : i32
    %538 = arith.muli %c4_i32_309, %c8_i32_310 : i32
    %539 = tpu.assume_multiple %538, 8 : i32
    %c1_311 = arith.constant 1 : index
    %c0_312 = arith.constant 0 : index
    %c0_313 = arith.constant 0 : index
    %540 = vector.load %arg8[%c1_311, %c0_312, %c0_313] : memref<2x32x32xf32, #tpu.memory_space<vmem>>, vector<1x32x32xf32>
    %541 = vector.shape_cast %540 : vector<1x32x32xf32> to vector<32x32xf32>
    %cst_314 = arith.constant dense<0.000000e+00> : vector<8x32xf32>
    %542 = tpu.matmul %537, %541, %cst_314 {dimension_numbers = #tpu.dot_dimension_numbers<[1], [0], [0], [1], [0, 0, 1, 1], [], []>} : vector<8x32xf32>, vector<32x32xf32>, vector<8x32xf32> -> vector<8x32xf32>
    %c1_315 = arith.constant 1 : index
    %c0_316 = arith.constant 0 : index
    %c0_317 = arith.constant 0 : index
    %543 = vector.load %arg9[%c1_315, %c0_316, %c0_317] : memref<2x32x32xf32, #tpu.memory_space<vmem>>, vector<1x32x32xf32>
    %544 = vector.shape_cast %543 : vector<1x32x32xf32> to vector<32x32xf32>
    %cst_318 = arith.constant dense<0.000000e+00> : vector<8x32xf32>
    %545 = tpu.matmul %537, %544, %cst_318 {dimension_numbers = #tpu.dot_dimension_numbers<[1], [0], [0], [1], [0, 0, 1, 1], [], []>} : vector<8x32xf32>, vector<32x32xf32>, vector<8x32xf32> -> vector<8x32xf32>
    %c1_319 = arith.constant 1 : index
    %c0_320 = arith.constant 0 : index
    %c0_321 = arith.constant 0 : index
    %546 = vector.load %arg10[%c1_319, %c0_320, %c0_321] : memref<2x32x32xf32, #tpu.memory_space<vmem>>, vector<1x32x32xf32>
    %547 = vector.shape_cast %546 : vector<1x32x32xf32> to vector<32x32xf32>
    %cst_322 = arith.constant dense<0.000000e+00> : vector<8x32xf32>
    %548 = tpu.matmul %537, %547, %cst_322 {dimension_numbers = #tpu.dot_dimension_numbers<[1], [0], [0], [1], [0, 0, 1, 1], [], []>} : vector<8x32xf32>, vector<32x32xf32>, vector<8x32xf32> -> vector<8x32xf32>
    %549 = arith.addf %548, %384 : vector<8x32xf32>
    %550 = arith.index_cast %539 : i32 to index
    %c0_323 = arith.constant 0 : index
    %551 = vector.load %arg16[%550, %c0_323] : memref<64x32xf32, #tpu.memory_space<vmem>>, vector<8x32xf32>
    %552 = arith.addf %551, %542 : vector<8x32xf32>
    %553 = arith.negf %552 : vector<8x32xf32>
    %554 = math.exp %553 : vector<8x32xf32>
    %cst_324 = arith.constant 1.000000e+00 : f32
    %555 = vector.broadcast %cst_324 : f32 to vector<8x32xf32>
    %556 = arith.addf %555, %554 : vector<8x32xf32>
    %557 = arith.divf %555, %556 : vector<8x32xf32>
    %558 = arith.index_cast %539 : i32 to index
    %c0_325 = arith.constant 0 : index
    %559 = vector.load %arg17[%558, %c0_325] : memref<64x32xf32, #tpu.memory_space<vmem>>, vector<8x32xf32>
    %560 = arith.addf %559, %545 : vector<8x32xf32>
    %561 = arith.negf %560 : vector<8x32xf32>
    %562 = math.exp %561 : vector<8x32xf32>
    %cst_326 = arith.constant 1.000000e+00 : f32
    %563 = vector.broadcast %cst_326 : f32 to vector<8x32xf32>
    %564 = arith.addf %563, %562 : vector<8x32xf32>
    %565 = arith.divf %563, %564 : vector<8x32xf32>
    %566 = arith.index_cast %539 : i32 to index
    %c0_327 = arith.constant 0 : index
    %567 = vector.load %arg18[%566, %c0_327] : memref<64x32xf32, #tpu.memory_space<vmem>>, vector<8x32xf32>
    %568 = arith.mulf %557, %549 : vector<8x32xf32>
    %569 = arith.addf %567, %568 : vector<8x32xf32>
    %570 = math.tanh %569 : vector<8x32xf32>
    %cst_328 = arith.constant 1.000000e+00 : f32
    %571 = vector.broadcast %cst_328 : f32 to vector<8x32xf32>
    %572 = arith.subf %571, %565 : vector<8x32xf32>
    %573 = arith.mulf %572, %570 : vector<8x32xf32>
    %574 = arith.mulf %565, %537 : vector<8x32xf32>
    %575 = arith.addf %573, %574 : vector<8x32xf32>
    %c5_i32_329 = arith.constant 5 : i32
    %c8_i32_330 = arith.constant 8 : i32
    %576 = arith.muli %c5_i32_329, %c8_i32_330 : i32
    %577 = tpu.assume_multiple %576, 8 : i32
    %c1_331 = arith.constant 1 : index
    %c0_332 = arith.constant 0 : index
    %c0_333 = arith.constant 0 : index
    %578 = vector.load %arg8[%c1_331, %c0_332, %c0_333] : memref<2x32x32xf32, #tpu.memory_space<vmem>>, vector<1x32x32xf32>
    %579 = vector.shape_cast %578 : vector<1x32x32xf32> to vector<32x32xf32>
    %cst_334 = arith.constant dense<0.000000e+00> : vector<8x32xf32>
    %580 = tpu.matmul %575, %579, %cst_334 {dimension_numbers = #tpu.dot_dimension_numbers<[1], [0], [0], [1], [0, 0, 1, 1], [], []>} : vector<8x32xf32>, vector<32x32xf32>, vector<8x32xf32> -> vector<8x32xf32>
    %c1_335 = arith.constant 1 : index
    %c0_336 = arith.constant 0 : index
    %c0_337 = arith.constant 0 : index
    %581 = vector.load %arg9[%c1_335, %c0_336, %c0_337] : memref<2x32x32xf32, #tpu.memory_space<vmem>>, vector<1x32x32xf32>
    %582 = vector.shape_cast %581 : vector<1x32x32xf32> to vector<32x32xf32>
    %cst_338 = arith.constant dense<0.000000e+00> : vector<8x32xf32>
    %583 = tpu.matmul %575, %582, %cst_338 {dimension_numbers = #tpu.dot_dimension_numbers<[1], [0], [0], [1], [0, 0, 1, 1], [], []>} : vector<8x32xf32>, vector<32x32xf32>, vector<8x32xf32> -> vector<8x32xf32>
    %c1_339 = arith.constant 1 : index
    %c0_340 = arith.constant 0 : index
    %c0_341 = arith.constant 0 : index
    %584 = vector.load %arg10[%c1_339, %c0_340, %c0_341] : memref<2x32x32xf32, #tpu.memory_space<vmem>>, vector<1x32x32xf32>
    %585 = vector.shape_cast %584 : vector<1x32x32xf32> to vector<32x32xf32>
    %cst_342 = arith.constant dense<0.000000e+00> : vector<8x32xf32>
    %586 = tpu.matmul %575, %585, %cst_342 {dimension_numbers = #tpu.dot_dimension_numbers<[1], [0], [0], [1], [0, 0, 1, 1], [], []>} : vector<8x32xf32>, vector<32x32xf32>, vector<8x32xf32> -> vector<8x32xf32>
    %587 = arith.addf %586, %384 : vector<8x32xf32>
    %588 = arith.index_cast %577 : i32 to index
    %c0_343 = arith.constant 0 : index
    %589 = vector.load %arg16[%588, %c0_343] : memref<64x32xf32, #tpu.memory_space<vmem>>, vector<8x32xf32>
    %590 = arith.addf %589, %580 : vector<8x32xf32>
    %591 = arith.negf %590 : vector<8x32xf32>
    %592 = math.exp %591 : vector<8x32xf32>
    %cst_344 = arith.constant 1.000000e+00 : f32
    %593 = vector.broadcast %cst_344 : f32 to vector<8x32xf32>
    %594 = arith.addf %593, %592 : vector<8x32xf32>
    %595 = arith.divf %593, %594 : vector<8x32xf32>
    %596 = arith.index_cast %577 : i32 to index
    %c0_345 = arith.constant 0 : index
    %597 = vector.load %arg17[%596, %c0_345] : memref<64x32xf32, #tpu.memory_space<vmem>>, vector<8x32xf32>
    %598 = arith.addf %597, %583 : vector<8x32xf32>
    %599 = arith.negf %598 : vector<8x32xf32>
    %600 = math.exp %599 : vector<8x32xf32>
    %cst_346 = arith.constant 1.000000e+00 : f32
    %601 = vector.broadcast %cst_346 : f32 to vector<8x32xf32>
    %602 = arith.addf %601, %600 : vector<8x32xf32>
    %603 = arith.divf %601, %602 : vector<8x32xf32>
    %604 = arith.index_cast %577 : i32 to index
    %c0_347 = arith.constant 0 : index
    %605 = vector.load %arg18[%604, %c0_347] : memref<64x32xf32, #tpu.memory_space<vmem>>, vector<8x32xf32>
    %606 = arith.mulf %595, %587 : vector<8x32xf32>
    %607 = arith.addf %605, %606 : vector<8x32xf32>
    %608 = math.tanh %607 : vector<8x32xf32>
    %cst_348 = arith.constant 1.000000e+00 : f32
    %609 = vector.broadcast %cst_348 : f32 to vector<8x32xf32>
    %610 = arith.subf %609, %603 : vector<8x32xf32>
    %611 = arith.mulf %610, %608 : vector<8x32xf32>
    %612 = arith.mulf %603, %575 : vector<8x32xf32>
    %613 = arith.addf %611, %612 : vector<8x32xf32>
    %c6_i32_349 = arith.constant 6 : i32
    %c8_i32_350 = arith.constant 8 : i32
    %614 = arith.muli %c6_i32_349, %c8_i32_350 : i32
    %615 = tpu.assume_multiple %614, 8 : i32
    %c1_351 = arith.constant 1 : index
    %c0_352 = arith.constant 0 : index
    %c0_353 = arith.constant 0 : index
    %616 = vector.load %arg8[%c1_351, %c0_352, %c0_353] : memref<2x32x32xf32, #tpu.memory_space<vmem>>, vector<1x32x32xf32>
    %617 = vector.shape_cast %616 : vector<1x32x32xf32> to vector<32x32xf32>
    %cst_354 = arith.constant dense<0.000000e+00> : vector<8x32xf32>
    %618 = tpu.matmul %613, %617, %cst_354 {dimension_numbers = #tpu.dot_dimension_numbers<[1], [0], [0], [1], [0, 0, 1, 1], [], []>} : vector<8x32xf32>, vector<32x32xf32>, vector<8x32xf32> -> vector<8x32xf32>
    %c1_355 = arith.constant 1 : index
    %c0_356 = arith.constant 0 : index
    %c0_357 = arith.constant 0 : index
    %619 = vector.load %arg9[%c1_355, %c0_356, %c0_357] : memref<2x32x32xf32, #tpu.memory_space<vmem>>, vector<1x32x32xf32>
    %620 = vector.shape_cast %619 : vector<1x32x32xf32> to vector<32x32xf32>
    %cst_358 = arith.constant dense<0.000000e+00> : vector<8x32xf32>
    %621 = tpu.matmul %613, %620, %cst_358 {dimension_numbers = #tpu.dot_dimension_numbers<[1], [0], [0], [1], [0, 0, 1, 1], [], []>} : vector<8x32xf32>, vector<32x32xf32>, vector<8x32xf32> -> vector<8x32xf32>
    %c1_359 = arith.constant 1 : index
    %c0_360 = arith.constant 0 : index
    %c0_361 = arith.constant 0 : index
    %622 = vector.load %arg10[%c1_359, %c0_360, %c0_361] : memref<2x32x32xf32, #tpu.memory_space<vmem>>, vector<1x32x32xf32>
    %623 = vector.shape_cast %622 : vector<1x32x32xf32> to vector<32x32xf32>
    %cst_362 = arith.constant dense<0.000000e+00> : vector<8x32xf32>
    %624 = tpu.matmul %613, %623, %cst_362 {dimension_numbers = #tpu.dot_dimension_numbers<[1], [0], [0], [1], [0, 0, 1, 1], [], []>} : vector<8x32xf32>, vector<32x32xf32>, vector<8x32xf32> -> vector<8x32xf32>
    %625 = arith.addf %624, %384 : vector<8x32xf32>
    %626 = arith.index_cast %615 : i32 to index
    %c0_363 = arith.constant 0 : index
    %627 = vector.load %arg16[%626, %c0_363] : memref<64x32xf32, #tpu.memory_space<vmem>>, vector<8x32xf32>
    %628 = arith.addf %627, %618 : vector<8x32xf32>
    %629 = arith.negf %628 : vector<8x32xf32>
    %630 = math.exp %629 : vector<8x32xf32>
    %cst_364 = arith.constant 1.000000e+00 : f32
    %631 = vector.broadcast %cst_364 : f32 to vector<8x32xf32>
    %632 = arith.addf %631, %630 : vector<8x32xf32>
    %633 = arith.divf %631, %632 : vector<8x32xf32>
    %634 = arith.index_cast %615 : i32 to index
    %c0_365 = arith.constant 0 : index
    %635 = vector.load %arg17[%634, %c0_365] : memref<64x32xf32, #tpu.memory_space<vmem>>, vector<8x32xf32>
    %636 = arith.addf %635, %621 : vector<8x32xf32>
    %637 = arith.negf %636 : vector<8x32xf32>
    %638 = math.exp %637 : vector<8x32xf32>
    %cst_366 = arith.constant 1.000000e+00 : f32
    %639 = vector.broadcast %cst_366 : f32 to vector<8x32xf32>
    %640 = arith.addf %639, %638 : vector<8x32xf32>
    %641 = arith.divf %639, %640 : vector<8x32xf32>
    %642 = arith.index_cast %615 : i32 to index
    %c0_367 = arith.constant 0 : index
    %643 = vector.load %arg18[%642, %c0_367] : memref<64x32xf32, #tpu.memory_space<vmem>>, vector<8x32xf32>
    %644 = arith.mulf %633, %625 : vector<8x32xf32>
    %645 = arith.addf %643, %644 : vector<8x32xf32>
    %646 = math.tanh %645 : vector<8x32xf32>
    %cst_368 = arith.constant 1.000000e+00 : f32
    %647 = vector.broadcast %cst_368 : f32 to vector<8x32xf32>
    %648 = arith.subf %647, %641 : vector<8x32xf32>
    %649 = arith.mulf %648, %646 : vector<8x32xf32>
    %650 = arith.mulf %641, %613 : vector<8x32xf32>
    %651 = arith.addf %649, %650 : vector<8x32xf32>
    %c7_i32_369 = arith.constant 7 : i32
    %c8_i32_370 = arith.constant 8 : i32
    %652 = arith.muli %c7_i32_369, %c8_i32_370 : i32
    %653 = tpu.assume_multiple %652, 8 : i32
    %c1_371 = arith.constant 1 : index
    %c0_372 = arith.constant 0 : index
    %c0_373 = arith.constant 0 : index
    %654 = vector.load %arg8[%c1_371, %c0_372, %c0_373] : memref<2x32x32xf32, #tpu.memory_space<vmem>>, vector<1x32x32xf32>
    %655 = vector.shape_cast %654 : vector<1x32x32xf32> to vector<32x32xf32>
    %cst_374 = arith.constant dense<0.000000e+00> : vector<8x32xf32>
    %656 = tpu.matmul %651, %655, %cst_374 {dimension_numbers = #tpu.dot_dimension_numbers<[1], [0], [0], [1], [0, 0, 1, 1], [], []>} : vector<8x32xf32>, vector<32x32xf32>, vector<8x32xf32> -> vector<8x32xf32>
    %c1_375 = arith.constant 1 : index
    %c0_376 = arith.constant 0 : index
    %c0_377 = arith.constant 0 : index
    %657 = vector.load %arg9[%c1_375, %c0_376, %c0_377] : memref<2x32x32xf32, #tpu.memory_space<vmem>>, vector<1x32x32xf32>
    %658 = vector.shape_cast %657 : vector<1x32x32xf32> to vector<32x32xf32>
    %cst_378 = arith.constant dense<0.000000e+00> : vector<8x32xf32>
    %659 = tpu.matmul %651, %658, %cst_378 {dimension_numbers = #tpu.dot_dimension_numbers<[1], [0], [0], [1], [0, 0, 1, 1], [], []>} : vector<8x32xf32>, vector<32x32xf32>, vector<8x32xf32> -> vector<8x32xf32>
    %c1_379 = arith.constant 1 : index
    %c0_380 = arith.constant 0 : index
    %c0_381 = arith.constant 0 : index
    %660 = vector.load %arg10[%c1_379, %c0_380, %c0_381] : memref<2x32x32xf32, #tpu.memory_space<vmem>>, vector<1x32x32xf32>
    %661 = vector.shape_cast %660 : vector<1x32x32xf32> to vector<32x32xf32>
    %cst_382 = arith.constant dense<0.000000e+00> : vector<8x32xf32>
    %662 = tpu.matmul %651, %661, %cst_382 {dimension_numbers = #tpu.dot_dimension_numbers<[1], [0], [0], [1], [0, 0, 1, 1], [], []>} : vector<8x32xf32>, vector<32x32xf32>, vector<8x32xf32> -> vector<8x32xf32>
    %663 = arith.addf %662, %384 : vector<8x32xf32>
    %664 = arith.index_cast %653 : i32 to index
    %c0_383 = arith.constant 0 : index
    %665 = vector.load %arg16[%664, %c0_383] : memref<64x32xf32, #tpu.memory_space<vmem>>, vector<8x32xf32>
    %666 = arith.addf %665, %656 : vector<8x32xf32>
    %667 = arith.negf %666 : vector<8x32xf32>
    %668 = math.exp %667 : vector<8x32xf32>
    %cst_384 = arith.constant 1.000000e+00 : f32
    %669 = vector.broadcast %cst_384 : f32 to vector<8x32xf32>
    %670 = arith.addf %669, %668 : vector<8x32xf32>
    %671 = arith.divf %669, %670 : vector<8x32xf32>
    %672 = arith.index_cast %653 : i32 to index
    %c0_385 = arith.constant 0 : index
    %673 = vector.load %arg17[%672, %c0_385] : memref<64x32xf32, #tpu.memory_space<vmem>>, vector<8x32xf32>
    %674 = arith.addf %673, %659 : vector<8x32xf32>
    %675 = arith.negf %674 : vector<8x32xf32>
    %676 = math.exp %675 : vector<8x32xf32>
    %cst_386 = arith.constant 1.000000e+00 : f32
    %677 = vector.broadcast %cst_386 : f32 to vector<8x32xf32>
    %678 = arith.addf %677, %676 : vector<8x32xf32>
    %679 = arith.divf %677, %678 : vector<8x32xf32>
    %680 = arith.index_cast %653 : i32 to index
    %c0_387 = arith.constant 0 : index
    %681 = vector.load %arg18[%680, %c0_387] : memref<64x32xf32, #tpu.memory_space<vmem>>, vector<8x32xf32>
    %682 = arith.mulf %671, %663 : vector<8x32xf32>
    %683 = arith.addf %681, %682 : vector<8x32xf32>
    %684 = math.tanh %683 : vector<8x32xf32>
    %cst_388 = arith.constant 1.000000e+00 : f32
    %685 = vector.broadcast %cst_388 : f32 to vector<8x32xf32>
    %686 = arith.subf %685, %679 : vector<8x32xf32>
    %687 = arith.mulf %686, %684 : vector<8x32xf32>
    %688 = arith.mulf %679, %651 : vector<8x32xf32>
    %689 = arith.addf %687, %688 : vector<8x32xf32>
    %c8_i32_389 = arith.constant 8 : i32
    %c0_390 = arith.constant 0 : index
    %c0_391 = arith.constant 0 : index
    %690 = vector.load %arg4[%c0_390, %c0_391] : memref<32x49xf32, #tpu.memory_space<vmem>>, vector<32x49xf32>
    %cst_392 = arith.constant dense<0.000000e+00> : vector<8x49xf32>
    %691 = tpu.matmul %689, %690, %cst_392 {dimension_numbers = #tpu.dot_dimension_numbers<[1], [0], [0], [1], [0, 0, 1, 1], [], []>} : vector<8x32xf32>, vector<32x49xf32>, vector<8x49xf32> -> vector<8x49xf32>
    %c0_393 = arith.constant 0 : index
    %c0_394 = arith.constant 0 : index
    %692 = vector.load %arg15[%c0_393, %c0_394] : memref<8x49xf32, #tpu.memory_space<vmem>>, vector<8x49xf32>
    tpu.vector_store %arg15[%c0_393, %c0_394], %691 {strides = array<i32>} : memref<8x49xf32, #tpu.memory_space<vmem>>, vector<8x49xf32>,
    return
  }
  func.func @transform_0(%arg0: i32) -> (i32, i32, i32) {
    %c0_i32 = arith.constant 0 : i32
    %c0_i32_0 = arith.constant 0 : i32
    %c0_i32_1 = arith.constant 0 : i32
    return %c0_i32, %arg0, %c0_i32_0 : i32, i32, i32
  }
  func.func @transform_1(%arg0: i32) -> (i32, i32) {
    %c0_i32 = arith.constant 0 : i32
    %c0_i32_0 = arith.constant 0 : i32
    %c0_i32_1 = arith.constant 0 : i32
    return %c0_i32, %c0_i32_0 : i32, i32
  }
  func.func @transform_2(%arg0: i32) -> (i32, i32) {
    %c0_i32 = arith.constant 0 : i32
    %c0_i32_0 = arith.constant 0 : i32
    %c0_i32_1 = arith.constant 0 : i32
    return %c0_i32, %c0_i32_0 : i32, i32
  }
  func.func @transform_3(%arg0: i32) -> (i32, i32) {
    %c0_i32 = arith.constant 0 : i32
    %c0_i32_0 = arith.constant 0 : i32
    %c0_i32_1 = arith.constant 0 : i32
    return %c0_i32, %c0_i32_0 : i32, i32
  }
  func.func @transform_4(%arg0: i32) -> (i32, i32, i32) {
    %c0_i32 = arith.constant 0 : i32
    %c0_i32_0 = arith.constant 0 : i32
    %c0_i32_1 = arith.constant 0 : i32
    %c0_i32_2 = arith.constant 0 : i32
    return %c0_i32, %c0_i32_0, %c0_i32_1 : i32, i32, i32
  }
  func.func @transform_5(%arg0: i32) -> (i32, i32, i32) {
    %c0_i32 = arith.constant 0 : i32
    %c0_i32_0 = arith.constant 0 : i32
    %c0_i32_1 = arith.constant 0 : i32
    %c0_i32_2 = arith.constant 0 : i32
    return %c0_i32, %c0_i32_0, %c0_i32_1 : i32, i32, i32
  }
  func.func @transform_6(%arg0: i32) -> (i32, i32, i32) {
    %c0_i32 = arith.constant 0 : i32
    %c0_i32_0 = arith.constant 0 : i32
    %c0_i32_1 = arith.constant 0 : i32
    %c0_i32_2 = arith.constant 0 : i32
    return %c0_i32, %c0_i32_0, %c0_i32_1 : i32, i32, i32
  }
  func.func @transform_7(%arg0: i32) -> (i32, i32, i32) {
    %c0_i32 = arith.constant 0 : i32
    %c0_i32_0 = arith.constant 0 : i32
    %c0_i32_1 = arith.constant 0 : i32
    %c0_i32_2 = arith.constant 0 : i32
    return %c0_i32, %c0_i32_0, %c0_i32_1 : i32, i32, i32
  }
  func.func @transform_8(%arg0: i32) -> (i32, i32, i32) {
    %c0_i32 = arith.constant 0 : i32
    %c0_i32_0 = arith.constant 0 : i32
    %c0_i32_1 = arith.constant 0 : i32
    %c0_i32_2 = arith.constant 0 : i32
    return %c0_i32, %c0_i32_0, %c0_i32_1 : i32, i32, i32
  }
  func.func @transform_9(%arg0: i32) -> (i32, i32, i32) {
    %c0_i32 = arith.constant 0 : i32
    %c0_i32_0 = arith.constant 0 : i32
    %c0_i32_1 = arith.constant 0 : i32
    %c0_i32_2 = arith.constant 0 : i32
    return %c0_i32, %c0_i32_0, %c0_i32_1 : i32, i32, i32
  }
  func.func @transform_10(%arg0: i32) -> (i32, i32, i32) {
    %c0_i32 = arith.constant 0 : i32
    %c0_i32_0 = arith.constant 0 : i32
    %c0_i32_1 = arith.constant 0 : i32
    %c0_i32_2 = arith.constant 0 : i32
    return %c0_i32, %c0_i32_0, %c0_i32_1 : i32, i32, i32
  }
  func.func @transform_11(%arg0: i32) -> (i32, i32, i32) {
    %c0_i32 = arith.constant 0 : i32
    %c0_i32_0 = arith.constant 0 : i32
    %c0_i32_1 = arith.constant 0 : i32
    %c0_i32_2 = arith.constant 0 : i32
    return %c0_i32, %c0_i32_0, %c0_i32_1 : i32, i32, i32
  }
  func.func @transform_12(%arg0: i32) -> (i32, i32, i32) {
    %c0_i32 = arith.constant 0 : i32
    %c0_i32_0 = arith.constant 0 : i32
    %c0_i32_1 = arith.constant 0 : i32
    %c0_i32_2 = arith.constant 0 : i32
    return %c0_i32, %c0_i32_0, %c0_i32_1 : i32, i32, i32
  }
  func.func @transform_13(%arg0: i32) -> (i32, i32, i32) {
    %c0_i32 = arith.constant 0 : i32
    %c0_i32_0 = arith.constant 0 : i32
    %c0_i32_1 = arith.constant 0 : i32
    %c0_i32_2 = arith.constant 0 : i32
    return %c0_i32, %c0_i32_0, %c0_i32_1 : i32, i32, i32
  }
  func.func @transform_14(%arg0: i32) -> (i32, i32) {
    %c0_i32 = arith.constant 0 : i32
    %c0_i32_0 = arith.constant 0 : i32
    return %arg0, %c0_i32 : i32, i32
  }
}

</mosaic_0001>

<llo_original>
// kernel: gru4rec_forward.3
$region0: #{gru4rec_forward.3}
  #allocation0 [shape = 'u32[]', space=smem, size = 0x4, offset = 0x4, fixed_abs, tag = 'smem constant byte address 0x4 - core index']
  #allocation1 [shape = 'u32[72,128]{1,0:T(1,128)}', space=vmem, size = 0x9000, scoped, tag = 'internal scratch']
  %s0 = inlined_call_operand.vmem [shape: f32[8,49], index: 0, kind: input, shape index: {}]
  %s1 = inlined_call_operand.vmem [shape: bf16[49,128], index: 1, kind: input, shape index: {}]
  %s2 = inlined_call_operand.vmem [shape: f32[8,128], index: 2, kind: output, shape index: {}]
  %s3 = sld [smem:[#allocation0]]
  $region18: #{gru4rec_forward.3} parent=0
    _
  %s5 = ssub.s32 1, %s3
  %s6 = scalar_select 0, %s5, %s3
  // Predicated region
  $region2: #{gru4rec_forward.3} parent=0 // pred_check
    _
  $region3: #{gru4rec_forward.3} parent=0 // pred_check_branch
    %8 = sbr.rel (0) target = $region5
  $region4: #{gru4rec_forward.3} parent=0 // pred_region
    _
  $region5: #{gru4rec_forward.3} parent=0 // pred_fallthru
    _
  // Predicated region
  $region6: #{gru4rec_forward.3} parent=0 // pred_check
    _
  $region7: #{gru4rec_forward.3} parent=0 // pred_check_branch
    %10 = sbr.rel (0) target = $region9
  $region8: #{gru4rec_forward.3} parent=0 // pred_region
    _
  $region9: #{gru4rec_forward.3} parent=0 // pred_fallthru
    _
  %v11 = vld [vmem:[%s0] sm:$0xff]
  %v12 = vld [vmem:[%s1] sm:$0xf]
  %v13 = vld [vmem:[%s1 + $0x4] sm:$0xf]
  %v14 = vld [vmem:[%s1 + $0x8] sm:$0xf]
  %v15 = vld [vmem:[%s1 + $0xc] sm:$0xf]
  %v16 = vld [vmem:[%s1 + $0x10] sm:$0xf]
  %v17 = vld [vmem:[%s1 + $0x14] sm:$0xf]
  %v18 = vld [vmem:[%s1 + $0x18] sm:$0x1]
  %v19 = vunpack.c.l.bf16 %v12
  %v20 = vunpack.c.l.bf16 %v13
  %v21 = vunpack.c.l.bf16 %v14
  %v22 = vunpack.c.l.bf16 %v15
  %v23 = vunpack.c.l.bf16 %v16
  %v24 = vunpack.c.l.bf16 %v17
  %v25 = vunpack.c.l.bf16 %v18
  %vm26 = vcmask 400384
  %v28 = vsel %vm26, %v11, 0
  %vm30 = vcmask 1040384
  %v32 = vsel %vm30, %v25, 0
  %34 = vmatpush.msra.mxu0 0.0
  %35 = vmatpush.msra.mxu0 0.0
  %36 = vmatpush.msra.mxu0 0.0
  %37 = vmatpush.msra.mxu0 0.0
  %38 = vmatpush.msra.mxu0 0.0
  %39 = vmatpush.msra.mxu0 0.0
  %40 = vmatpush.msra.mxu0 0.0
  %41 = vmatpush.msra.mxu0 0.0
  %42 = vmatpush.msra.mxu0 0.0
  %43 = vmatpush.msra.mxu0 %v32
  %44 = vmatpush.msra.mxu0 %v24
  %45 = vmatpush.msra.mxu0 %v23
  %46 = vmatpush.msra.mxu0 %v22
  %47 = vmatpush.msra.mxu0 %v21
  %48 = vmatpush.msra.mxu0 %v20
  %49 = vmatpush.msra.mxu0 %v19
  %50 = vmatmul.f32.gmra.mxu0 %v28
  %v51 = vpop.f32.mrf.mxu0
  %v52 = vadd.f32 0.0, %v51
  %53 = vdwg.mxu0
  %54 = vst [vmem:[%s2] sm:$0xff] %v52
  // Predicated region
  $region10: #{gru4rec_forward.3} parent=0 // pred_check
    _
  $region11: #{gru4rec_forward.3} parent=0 // pred_check_branch
    %56 = sbr.rel (0) target = $region13
  $region12: #{gru4rec_forward.3} parent=0 // pred_region
    _
  $region13: #{gru4rec_forward.3} parent=0 // pred_fallthru
    _
  // Predicated region
  $region14: #{gru4rec_forward.3} parent=0 // pred_check
    _
  $region15: #{gru4rec_forward.3} parent=0 // pred_check_branch
    %58 = sbr.rel (0) target = $region17
  $region16: #{gru4rec_forward.3} parent=0 // pred_region
    _
  $region17: #{gru4rec_forward.3} parent=0 // pred_fallthru
    _

// kernel: gru4rec_forward.2
$region0: #{gru4rec_forward.2}
  #allocation0 [shape = 'u32[]', space=smem, size = 0x4, offset = 0x4, fixed_abs, tag = 'smem constant byte address 0x4 - core index']
  #allocation1 [shape = 'u32[72,128]{1,0:T(1,128)}', space=vmem, size = 0x9000, scoped, tag = 'internal scratch']
  #allocation2 [shape = 'f32[64,32]{1,0:T(8,128)}', space=vmem, size = 0x8000, scoped, tag = 'scratch operand']
  #allocation3 [shape = 'f32[64,32]{1,0:T(8,128)}', space=vmem, size = 0x8000, scoped, tag = 'scratch operand']
  #allocation4 [shape = 'f32[64,32]{1,0:T(8,128)}', space=vmem, size = 0x8000, scoped, tag = 'scratch operand']
  #allocation5 [shape = 'f32[64,32]{1,0:T(8,128)}', space=vmem, size = 0x8000, scoped, tag = 'scratch operand']
  %s0 = inlined_call_operand.vmem [shape: f32[8,8,48], index: 0, kind: input, shape index: {}]
  %s1 = inlined_call_operand.vmem [shape: f32[48,32], index: 1, kind: input, shape index: {}]
  %s2 = inlined_call_operand.vmem [shape: f32[1,32], index: 2, kind: input, shape index: {}]
  %s3 = inlined_call_operand.vmem [shape: f32[32,49], index: 3, kind: input, shape index: {}]
  %s4 = inlined_call_operand.vmem [shape: f32[2,32,32], index: 4, kind: input, shape index: {}]
  %s5 = inlined_call_operand.vmem [shape: f32[2,32,32], index: 5, kind: input, shape index: {}]
  %s6 = inlined_call_operand.vmem [shape: f32[2,32,32], index: 6, kind: input, shape index: {}]
  %s7 = inlined_call_operand.vmem [shape: f32[2,32,32], index: 7, kind: input, shape index: {}]
  %s8 = inlined_call_operand.vmem [shape: f32[2,32,32], index: 8, kind: input, shape index: {}]
  %s9 = inlined_call_operand.vmem [shape: f32[2,32,32], index: 9, kind: input, shape index: {}]
  %s10 = inlined_call_operand.vmem [shape: f32[2,1,32], index: 10, kind: input, shape index: {}]
  %s11 = inlined_call_operand.vmem [shape: f32[2,1,32], index: 11, kind: input, shape index: {}]
  %s12 = inlined_call_operand.vmem [shape: f32[2,1,32], index: 12, kind: input, shape index: {}]
  %s13 = inlined_call_operand.vmem [shape: f32[2,1,32], index: 13, kind: input, shape index: {}]
  %s14 = inlined_call_operand.vmem [shape: f32[8,49], index: 14, kind: output, shape index: {}]
  %s15 = sld [smem:[#allocation0]]
  $region66: #{gru4rec_forward.2} parent=0
    _
  %s17 = ssub.s32 1, %s15
  %s18 = scalar_select 0, %s17, %s15
  // Predicated region
  $region2: #{gru4rec_forward.2} parent=0 // pred_check
    _
  $region3: #{gru4rec_forward.2} parent=0 // pred_check_branch
    %20 = sbr.rel (0) target = $region5
  $region4: #{gru4rec_forward.2} parent=0 // pred_region
    _
  $region5: #{gru4rec_forward.2} parent=0 // pred_fallthru
    _
  // Predicated region
  $region6: #{gru4rec_forward.2} parent=0 // pred_check
    _
  $region7: #{gru4rec_forward.2} parent=0 // pred_check_branch
    %22 = sbr.rel (0) target = $region9
  $region8: #{gru4rec_forward.2} parent=0 // pred_region
    _
  $region9: #{gru4rec_forward.2} parent=0 // pred_fallthru
    _
  // Predicated region
  $region10: #{gru4rec_forward.2} parent=0 // pred_check
    _
  $region11: #{gru4rec_forward.2} parent=0 // pred_check_branch
    %24 = sbr.rel (0) target = $region13
  $region12: #{gru4rec_forward.2} parent=0 // pred_region
    _
  $region13: #{gru4rec_forward.2} parent=0 // pred_fallthru
    _
  // Predicated region
  $region14: #{gru4rec_forward.2} parent=0 // pred_check
    _
  $region15: #{gru4rec_forward.2} parent=0 // pred_check_branch
    %26 = sbr.rel (0) target = $region17
  $region16: #{gru4rec_forward.2} parent=0 // pred_region
    _
  $region17: #{gru4rec_forward.2} parent=0 // pred_fallthru
    _
  // Predicated region
  $region18: #{gru4rec_forward.2} parent=0 // pred_check
    _
  $region19: #{gru4rec_forward.2} parent=0 // pred_check_branch
    %28 = sbr.rel (0) target = $region21
  $region20: #{gru4rec_forward.2} parent=0 // pred_region
    _
  $region21: #{gru4rec_forward.2} parent=0 // pred_fallthru
    _
  // Predicated region
  $region22: #{gru4rec_forward.2} parent=0 // pred_check
    _
  $region23: #{gru4rec_forward.2} parent=0 // pred_check_branch
    %30 = sbr.rel (0) target = $region25
  $region24: #{gru4rec_forward.2} parent=0 // pred_region
    _
  $region25: #{gru4rec_forward.2} parent=0 // pred_fallthru
    _
  // Predicated region
  $region26: #{gru4rec_forward.2} parent=0 // pred_check
    _
  $region27: #{gru4rec_forward.2} parent=0 // pred_check_branch
    %32 = sbr.rel (0) target = $region29
  $region28: #{gru4rec_forward.2} parent=0 // pred_region
    _
  $region29: #{gru4rec_forward.2} parent=0 // pred_fallthru
    _
  // Predicated region
  $region30: #{gru4rec_forward.2} parent=0 // pred_check
    _
  $region31: #{gru4rec_forward.2} parent=0 // pred_check_branch
    %34 = sbr.rel (0) target = $region33
  $region32: #{gru4rec_forward.2} parent=0 // pred_region
    _
  $region33: #{gru4rec_forward.2} parent=0 // pred_fallthru
    _
  // Predicated region
  $region34: #{gru4rec_forward.2} parent=0 // pred_check
    _
  $region35: #{gru4rec_forward.2} parent=0 // pred_check_branch
    %36 = sbr.rel (0) target = $region37
  $region36: #{gru4rec_forward.2} parent=0 // pred_region
    _
  $region37: #{gru4rec_forward.2} parent=0 // pred_fallthru
    _
  // Predicated region
  $region38: #{gru4rec_forward.2} parent=0 // pred_check
    _
  $region39: #{gru4rec_forward.2} parent=0 // pred_check_branch
    %38 = sbr.rel (0) target = $region41
  $region40: #{gru4rec_forward.2} parent=0 // pred_region
    _
  $region41: #{gru4rec_forward.2} parent=0 // pred_fallthru
    _
  // Predicated region
  $region42: #{gru4rec_forward.2} parent=0 // pred_check
    _
  $region43: #{gru4rec_forward.2} parent=0 // pred_check_branch
    %40 = sbr.rel (0) target = $region45
  $region44: #{gru4rec_forward.2} parent=0 // pred_region
    _
  $region45: #{gru4rec_forward.2} parent=0 // pred_fallthru
    _
  // Predicated region
  $region46: #{gru4rec_forward.2} parent=0 // pred_check
    _
  $region47: #{gru4rec_forward.2} parent=0 // pred_check_branch
    %42 = sbr.rel (0) target = $region49
  $region48: #{gru4rec_forward.2} parent=0 // pred_region
    _
  $region49: #{gru4rec_forward.2} parent=0 // pred_fallthru
    _
  // Predicated region
  $region50: #{gru4rec_forward.2} parent=0 // pred_check
    _
  $region51: #{gru4rec_forward.2} parent=0 // pred_check_branch
    %44 = sbr.rel (0) target = $region53
  $region52: #{gru4rec_forward.2} parent=0 // pred_region
    _
  $region53: #{gru4rec_forward.2} parent=0 // pred_fallthru
    _
  // Predicated region
  $region54: #{gru4rec_forward.2} parent=0 // pred_check
    _
  $region55: #{gru4rec_forward.2} parent=0 // pred_check_branch
    %46 = sbr.rel (0) target = $region57
  $region56: #{gru4rec_forward.2} parent=0 // pred_region
    _
  $region57: #{gru4rec_forward.2} parent=0 // pred_fallthru
    _
  %v47 = vld [vmem:[%s0] sm:$0xff]
  %v48 = vld [vmem:[%s0 + $0x8] sm:$0xff]
  %v49 = vld [vmem:[%s0 + $0x10] sm:$0xff]
  %v50 = vld [vmem:[%s0 + $0x18] sm:$0xff]
  %v51 = vld [vmem:[%s0 + $0x20] sm:$0xff]
  %v52 = vld [vmem:[%s0 + $0x28] sm:$0xff]
  %v53 = vld [vmem:[%s0 + $0x30] sm:$0xff]
  %v54 = vld [vmem:[%s0 + $0x38] sm:$0xff]
  %v55 = vld [vmem:[%s1] sm:$0xff]
  %v56 = vld [vmem:[%s1 + $0x8] sm:$0xff]
  %v57 = vld [vmem:[%s1 + $0x10] sm:$0xff]
  %v58 = vld [vmem:[%s1 + $0x18] sm:$0xff]
  %v59 = vld [vmem:[%s1 + $0x20] sm:$0xff]
  %v60 = vld [vmem:[%s1 + $0x28] sm:$0xff]
  %v61 = vld [vmem:[%s2] sm:$0x1]
  %v63 = vperm.slane %v61, 0
  %vm65 = vcmask 392192
  %v67 = vsel %vm65, %v47, 0
  %v70 = vsel %vm65, %v48, 0
  %v73 = vsel %vm65, %v49, 0
  %v76 = vsel %vm65, %v50, 0
  %v79 = vsel %vm65, %v51, 0
  %v82 = vsel %vm65, %v52, 0
  %v85 = vsel %vm65, %v53, 0
  %v88 = vsel %vm65, %v54, 0
  %90 = vmatpush.msra.mxu0 0.0
  %91 = vmatpush.msra.mxu0 0.0
  %92 = vmatpush.msra.mxu0 0.0
  %93 = vmatpush.msra.mxu0 0.0
  %94 = vmatpush.msra.mxu0 0.0
  %95 = vmatpush.msra.mxu0 0.0
  %96 = vmatpush.msra.mxu0 0.0
  %97 = vmatpush.msra.mxu0 0.0
  %98 = vmatpush.msra.mxu0 0.0
  %99 = vmatpush.msra.mxu0 0.0
  %100 = vmatpush.msra.mxu0 %v60
  %101 = vmatpush.msra.mxu0 %v59
  %102 = vmatpush.msra.mxu0 %v58
  %103 = vmatpush.msra.mxu0 %v57
  %104 = vmatpush.msra.mxu0 %v56
  %105 = vmatpush.msra.mxu0 %v55
  %106 = vmatmul.f32.gmra.mxu0 %v67
  %v107 = vpop.f32.mrf.mxu0
  %v108 = vadd.f32 %v63, %v107
  %109 = vmatmul.f32.gmra.mxu0 %v70
  %v110 = vpop.f32.mrf.mxu0
  %v111 = vadd.f32 %v63, %v110
  %112 = vmatmul.f32.gmra.mxu0 %v73
  %v113 = vpop.f32.mrf.mxu0
  %v114 = vadd.f32 %v63, %v113
  %115 = vmatmul.f32.gmra.mxu0 %v76
  %v116 = vpop.f32.mrf.mxu0
  %v117 = vadd.f32 %v63, %v116
  %118 = vmatmul.f32.gmra.mxu0 %v79
  %v119 = vpop.f32.mrf.mxu0
  %v120 = vadd.f32 %v63, %v119
  %121 = vmatmul.f32.gmra.mxu0 %v82
  %v122 = vpop.f32.mrf.mxu0
  %v123 = vadd.f32 %v63, %v122
  %124 = vmatmul.f32.gmra.mxu0 %v85
  %v125 = vpop.f32.mrf.mxu0
  %v126 = vadd.f32 %v63, %v125
  %127 = vmatmul.f32.gmra.mxu0 %v88
  %v128 = vpop.f32.mrf.mxu0
  %v129 = vadd.f32 %v63, %v128
  %130 = vdwg.mxu0
  %v131 = vld [vmem:[%s4] sm:$0xff]
  %v132 = vld [vmem:[%s4 + $0x8] sm:$0xff]
  %v133 = vld [vmem:[%s4 + $0x10] sm:$0xff]
  %v134 = vld [vmem:[%s4 + $0x18] sm:$0xff]
  %v135 = vld [vmem:[%s10] sm:$0x1]
  %v137 = vperm.slane %v135, 0
  %vm139 = vcmask 261120
  %v141 = vsel %vm139, %v108, 0
  %v144 = vsel %vm139, %v111, 0
  %v147 = vsel %vm139, %v114, 0
  %v150 = vsel %vm139, %v117, 0
  %v153 = vsel %vm139, %v120, 0
  %v156 = vsel %vm139, %v123, 0
  %v159 = vsel %vm139, %v126, 0
  %v162 = vsel %vm139, %v129, 0
  %164 = vmatpush.msra.mxu0 0.0
  %165 = vmatpush.msra.mxu0 0.0
  %166 = vmatpush.msra.mxu0 0.0
  %167 = vmatpush.msra.mxu0 0.0
  %168 = vmatpush.msra.mxu0 0.0
  %169 = vmatpush.msra.mxu0 0.0
  %170 = vmatpush.msra.mxu0 0.0
  %171 = vmatpush.msra.mxu0 0.0
  %172 = vmatpush.msra.mxu0 0.0
  %173 = vmatpush.msra.mxu0 0.0
  %174 = vmatpush.msra.mxu0 0.0
  %175 = vmatpush.msra.mxu0 0.0
  %176 = vmatpush.msra.mxu0 %v134
  %177 = vmatpush.msra.mxu0 %v133
  %178 = vmatpush.msra.mxu0 %v132
  %179 = vmatpush.msra.mxu0 %v131
  %180 = vmatmul.f32.gmra.mxu0 %v141
  %v181 = vpop.f32.mrf.mxu0
  %v182 = vadd.f32 %v137, %v181
  %183 = vmatmul.f32.gmra.mxu0 %v144
  %v184 = vpop.f32.mrf.mxu0
  %v185 = vadd.f32 %v137, %v184
  %186 = vmatmul.f32.gmra.mxu0 %v147
  %v187 = vpop.f32.mrf.mxu0
  %v188 = vadd.f32 %v137, %v187
  %189 = vmatmul.f32.gmra.mxu0 %v150
  %v190 = vpop.f32.mrf.mxu0
  %v191 = vadd.f32 %v137, %v190
  %192 = vmatmul.f32.gmra.mxu0 %v153
  %v193 = vpop.f32.mrf.mxu0
  %v194 = vadd.f32 %v137, %v193
  %195 = vmatmul.f32.gmra.mxu0 %v156
  %v196 = vpop.f32.mrf.mxu0
  %v197 = vadd.f32 %v137, %v196
  %198 = vmatmul.f32.gmra.mxu0 %v159
  %v199 = vpop.f32.mrf.mxu0
  %v200 = vadd.f32 %v137, %v199
  %201 = vmatmul.f32.gmra.mxu0 %v162
  %v202 = vpop.f32.mrf.mxu0
  %v203 = vadd.f32 %v137, %v202
  %204 = vdwg.mxu0
  %205 = vst.msk [vmem:[#allocation2] sm:$0xff] %vm139, %v182
  %206 = vst.msk [vmem:[#allocation2 + $0x8] sm:$0xff] %vm139, %v185
  %207 = vst.msk [vmem:[#allocation2 + $0x10] sm:$0xff] %vm139, %v188
  %208 = vst.msk [vmem:[#allocation2 + $0x18] sm:$0xff] %vm139, %v191
  %209 = vst.msk [vmem:[#allocation2 + $0x20] sm:$0xff] %vm139, %v194
  %210 = vst.msk [vmem:[#allocation2 + $0x28] sm:$0xff] %vm139, %v197
  %211 = vst.msk [vmem:[#allocation2 + $0x30] sm:$0xff] %vm139, %v200
  %212 = vst.msk [vmem:[#allocation2 + $0x38] sm:$0xff] %vm139, %v203
  %v213 = vld [vmem:[%s5] sm:$0xff]
  %v214 = vld [vmem:[%s5 + $0x8] sm:$0xff]
  %v215 = vld [vmem:[%s5 + $0x10] sm:$0xff]
  %v216 = vld [vmem:[%s5 + $0x18] sm:$0xff]
  %v217 = vld [vmem:[%s11] sm:$0x1]
  %v219 = vperm.slane %v217, 0
  %221 = vmatpush.msra.mxu0 0.0
  %222 = vmatpush.msra.mxu0 0.0
  %223 = vmatpush.msra.mxu0 0.0
  %224 = vmatpush.msra.mxu0 0.0
  %225 = vmatpush.msra.mxu0 0.0
  %226 = vmatpush.msra.mxu0 0.0
  %227 = vmatpush.msra.mxu0 0.0
  %228 = vmatpush.msra.mxu0 0.0
  %229 = vmatpush.msra.mxu0 0.0
  %230 = vmatpush.msra.mxu0 0.0
  %231 = vmatpush.msra.mxu0 0.0
  %232 = vmatpush.msra.mxu0 0.0
  %233 = vmatpush.msra.mxu0 %v216
  %234 = vmatpush.msra.mxu0 %v215
  %235 = vmatpush.msra.mxu0 %v214
  %236 = vmatpush.msra.mxu0 %v213
  %237 = vmatmul.f32.gmra.mxu0 %v141
  %v238 = vpop.f32.mrf.mxu0
  %v239 = vadd.f32 %v219, %v238
  %240 = vmatmul.f32.gmra.mxu0 %v144
  %v241 = vpop.f32.mrf.mxu0
  %v242 = vadd.f32 %v219, %v241
  %243 = vmatmul.f32.gmra.mxu0 %v147
  %v244 = vpop.f32.mrf.mxu0
  %v245 = vadd.f32 %v219, %v244
  %246 = vmatmul.f32.gmra.mxu0 %v150
  %v247 = vpop.f32.mrf.mxu0
  %v248 = vadd.f32 %v219, %v247
  %249 = vmatmul.f32.gmra.mxu0 %v153
  %v250 = vpop.f32.mrf.mxu0
  %v251 = vadd.f32 %v219, %v250
  %252 = vmatmul.f32.gmra.mxu0 %v156
  %v253 = vpop.f32.mrf.mxu0
  %v254 = vadd.f32 %v219, %v253
  %255 = vmatmul.f32.gmra.mxu0 %v159
  %v256 = vpop.f32.mrf.mxu0
  %v257 = vadd.f32 %v219, %v256
  %258 = vmatmul.f32.gmra.mxu0 %v162
  %v259 = vpop.f32.mrf.mxu0
  %v260 = vadd.f32 %v219, %v259
  %261 = vdwg.mxu0
  %262 = vst.msk [vmem:[#allocation3] sm:$0xff] %vm139, %v239
  %263 = vst.msk [vmem:[#allocation3 + $0x8] sm:$0xff] %vm139, %v242
  %264 = vst.msk [vmem:[#allocation3 + $0x10] sm:$0xff] %vm139, %v245
  %265 = vst.msk [vmem:[#allocation3 + $0x18] sm:$0xff] %vm139, %v248
  %266 = vst.msk [vmem:[#allocation3 + $0x20] sm:$0xff] %vm139, %v251
  %267 = vst.msk [vmem:[#allocation3 + $0x28] sm:$0xff] %vm139, %v254
  %268 = vst.msk [vmem:[#allocation3 + $0x30] sm:$0xff] %vm139, %v257
  %269 = vst.msk [vmem:[#allocation3 + $0x38] sm:$0xff] %vm139, %v260
  %v270 = vld [vmem:[%s6] sm:$0xff]
  %v271 = vld [vmem:[%s6 + $0x8] sm:$0xff]
  %v272 = vld [vmem:[%s6 + $0x10] sm:$0xff]
  %v273 = vld [vmem:[%s6 + $0x18] sm:$0xff]
  %v274 = vld [vmem:[%s12] sm:$0x1]
  %v276 = vperm.slane %v274, 0
  %278 = vmatpush.msra.mxu0 0.0
  %279 = vmatpush.msra.mxu0 0.0
  %280 = vmatpush.msra.mxu0 0.0
  %281 = vmatpush.msra.mxu0 0.0
  %282 = vmatpush.msra.mxu0 0.0
  %283 = vmatpush.msra.mxu0 0.0
  %284 = vmatpush.msra.mxu0 0.0
  %285 = vmatpush.msra.mxu0 0.0
  %286 = vmatpush.msra.mxu0 0.0
  %287 = vmatpush.msra.mxu0 0.0
  %288 = vmatpush.msra.mxu0 0.0
  %289 = vmatpush.msra.mxu0 0.0
  %290 = vmatpush.msra.mxu0 %v273
  %291 = vmatpush.msra.mxu0 %v272
  %292 = vmatpush.msra.mxu0 %v271
  %293 = vmatpush.msra.mxu0 %v270
  %294 = vmatmul.f32.gmra.mxu0 %v141
  %v295 = vpop.f32.mrf.mxu0
  %v296 = vadd.f32 %v276, %v295
  %297 = vmatmul.f32.gmra.mxu0 %v144
  %v298 = vpop.f32.mrf.mxu0
  %v299 = vadd.f32 %v276, %v298
  %300 = vmatmul.f32.gmra.mxu0 %v147
  %v301 = vpop.f32.mrf.mxu0
  %v302 = vadd.f32 %v276, %v301
  %303 = vmatmul.f32.gmra.mxu0 %v150
  %v304 = vpop.f32.mrf.mxu0
  %v305 = vadd.f32 %v276, %v304
  %306 = vmatmul.f32.gmra.mxu0 %v153
  %v307 = vpop.f32.mrf.mxu0
  %v308 = vadd.f32 %v276, %v307
  %309 = vmatmul.f32.gmra.mxu0 %v156
  %v310 = vpop.f32.mrf.mxu0
  %v311 = vadd.f32 %v276, %v310
  %312 = vmatmul.f32.gmra.mxu0 %v159
  %v313 = vpop.f32.mrf.mxu0
  %v314 = vadd.f32 %v276, %v313
  %315 = vmatmul.f32.gmra.mxu0 %v162
  %v316 = vpop.f32.mrf.mxu0
  %v317 = vadd.f32 %v276, %v316
  %318 = vdwg.mxu0
  %319 = vst.msk [vmem:[#allocation4] sm:$0xff] %vm139, %v296
  %320 = vst.msk [vmem:[#allocation4 + $0x8] sm:$0xff] %vm139, %v299
  %321 = vst.msk [vmem:[#allocation4 + $0x10] sm:$0xff] %vm139, %v302
  %322 = vst.msk [vmem:[#allocation4 + $0x18] sm:$0xff] %vm139, %v305
  %323 = vst.msk [vmem:[#allocation4 + $0x20] sm:$0xff] %vm139, %v308
  %324 = vst.msk [vmem:[#allocation4 + $0x28] sm:$0xff] %vm139, %v311
  %325 = vst.msk [vmem:[#allocation4 + $0x30] sm:$0xff] %vm139, %v314
  %326 = vst.msk [vmem:[#allocation4 + $0x38] sm:$0xff] %vm139, %v317
  %v327 = vld [vmem:[%s13] sm:$0x1]
  %v329 = vperm.slane %v327, 0
  %v331 = vld [vmem:[%s7] sm:$0xff]
  %v332 = vld [vmem:[%s7 + $0x8] sm:$0xff]
  %v333 = vld [vmem:[%s7 + $0x10] sm:$0xff]
  %v334 = vld [vmem:[%s7 + $0x18] sm:$0xff]
  %v336 = vsel %vm139, 0.0, 0
  %338 = vmatpush.msra.mxu0 0.0
  %339 = vmatpush.msra.mxu0 0.0
  %340 = vmatpush.msra.mxu0 0.0
  %341 = vmatpush.msra.mxu0 0.0
  %342 = vmatpush.msra.mxu0 0.0
  %343 = vmatpush.msra.mxu0 0.0
  %344 = vmatpush.msra.mxu0 0.0
  %345 = vmatpush.msra.mxu0 0.0
  %346 = vmatpush.msra.mxu0 0.0
  %347 = vmatpush.msra.mxu0 0.0
  %348 = vmatpush.msra.mxu0 0.0
  %349 = vmatpush.msra.mxu0 0.0
  %350 = vmatpush.msra.mxu0 %v334
  %351 = vmatpush.msra.mxu0 %v333
  %352 = vmatpush.msra.mxu0 %v332
  %353 = vmatpush.msra.mxu0 %v331
  %354 = vmatmul.f32.gmra.mxu0 %v336
  %v355 = vpop.f32.mrf.mxu0
  %v356 = vadd.f32 0.0, %v355
  %357 = vdwg.mxu0
  %v358 = vld [vmem:[%s8] sm:$0xff]
  %v359 = vld [vmem:[%s8 + $0x8] sm:$0xff]
  %v360 = vld [vmem:[%s8 + $0x10] sm:$0xff]
  %v361 = vld [vmem:[%s8 + $0x18] sm:$0xff]
  %362 = vmatpush.msra.mxu0 0.0
  %363 = vmatpush.msra.mxu0 0.0
  %364 = vmatpush.msra.mxu0 0.0
  %365 = vmatpush.msra.mxu0 0.0
  %366 = vmatpush.msra.mxu0 0.0
  %367 = vmatpush.msra.mxu0 0.0
  %368 = vmatpush.msra.mxu0 0.0
  %369 = vmatpush.msra.mxu0 0.0
  %370 = vmatpush.msra.mxu0 0.0
  %371 = vmatpush.msra.mxu0 0.0
  %372 = vmatpush.msra.mxu0 0.0
  %373 = vmatpush.msra.mxu0 0.0
  %374 = vmatpush.msra.mxu0 %v361
  %375 = vmatpush.msra.mxu0 %v360
  %376 = vmatpush.msra.mxu0 %v359
  %377 = vmatpush.msra.mxu0 %v358
  %378 = vmatmul.f32.gmra.mxu0 %v336
  %v379 = vpop.f32.mrf.mxu0
  %v380 = vadd.f32 0.0, %v379
  %381 = vdwg.mxu0
  %v382 = vld [vmem:[%s9] sm:$0xff]
  %v383 = vld [vmem:[%s9 + $0x8] sm:$0xff]
  %v384 = vld [vmem:[%s9 + $0x10] sm:$0xff]
  %v385 = vld [vmem:[%s9 + $0x18] sm:$0xff]
  %386 = vmatpush.msra.mxu0 0.0
  %387 = vmatpush.msra.mxu0 0.0
  %388 = vmatpush.msra.mxu0 0.0
  %389 = vmatpush.msra.mxu0 0.0
  %390 = vmatpush.msra.mxu0 0.0
  %391 = vmatpush.msra.mxu0 0.0
  %392 = vmatpush.msra.mxu0 0.0
  %393 = vmatpush.msra.mxu0 0.0
  %394 = vmatpush.msra.mxu0 0.0
  %395 = vmatpush.msra.mxu0 0.0
  %396 = vmatpush.msra.mxu0 0.0
  %397 = vmatpush.msra.mxu0 0.0
  %398 = vmatpush.msra.mxu0 %v385
  %399 = vmatpush.msra.mxu0 %v384
  %400 = vmatpush.msra.mxu0 %v383
  %401 = vmatpush.msra.mxu0 %v382
  %402 = vmatmul.f32.gmra.mxu0 %v336
  %v403 = vpop.f32.mrf.mxu0
  %v404 = vadd.f32 %v329, %v403
  %405 = vdwg.mxu0
  %v406 = vld [vmem:[#allocation2] sm:$0xff]
  %v407 = vadd.f32 %v406, %v356
  %v408 = vxor.u32 %v407, 2147483648
  %v409 = vmul.f32 %v408, 1.442695
  %v410 = vpow.pop %v409
  %v411 = vadd.f32 %v410, 1.0
  %v412 = vrcp.pop %v411
  %v413 = vmul.f32 %v411, %v412
  %v414 = vsub.f32 1.0, %v413
  %v415 = vmul.f32 %v412, %v414
  %v416 = vadd.f32 %v412, %v415
  %vm417 = vweird.f32 %v411
  %vm418 = vweird.f32 %v412
  %vm419 = vmor %vm417, %vm418
  %v420 = vsel %vm419, %v412, %v416
  %v421 = vand.u32 2147483647, %v411
  %vm422 = vcmp.eq.f32.partialorder %v421, 8.507059e+37
  %v423 = vand.u32 %v411, 2147483648
  %v424 = vor.u32 1.1754944e-38, %v423
  %v425 = vsel %vm422, %v424, %v420
  %v426 = vmul.f32 1.0, %v425
  %v427 = vld [vmem:[#allocation3] sm:$0xff]
  %v428 = vadd.f32 %v427, %v380
  %v429 = vxor.u32 %v428, 2147483648
  %v430 = vmul.f32 %v429, 1.442695
  %v431 = vpow.pop %v430
  %v432 = vadd.f32 %v431, 1.0
  %v433 = vrcp.pop %v432
  %v434 = vmul.f32 %v432, %v433
  %v435 = vsub.f32 1.0, %v434
  %v436 = vmul.f32 %v433, %v435
  %v437 = vadd.f32 %v433, %v436
  %vm438 = vweird.f32 %v432
  %vm439 = vweird.f32 %v433
  %vm440 = vmor %vm438, %vm439
  %v441 = vsel %vm440, %v433, %v437
  %v442 = vand.u32 2147483647, %v432
  %vm443 = vcmp.eq.f32.partialorder %v442, 8.507059e+37
  %v444 = vand.u32 %v432, 2147483648
  %v445 = vor.u32 1.1754944e-38, %v444
  %v446 = vsel %vm443, %v445, %v441
  %v447 = vmul.f32 1.0, %v446
  %v448 = vld [vmem:[#allocation4] sm:$0xff]
  %v449 = vmul.f32 %v426, %v404
  %v450 = vadd.f32 %v448, %v449
  %v451 = vtanh.pop %v450
  %v452 = vsub.f32 1.0, %v447
  %v453 = vmul.f32 %v452, %v451
  %v454 = vmul.f32 %v447, 0.0
  %v455 = vadd.f32 %v453, %v454
  %456 = vst.msk [vmem:[#allocation5] sm:$0xff] %vm139, %v455
  %v457 = vld [vmem:[%s7] sm:$0xff]
  %v458 = vld [vmem:[%s7 + $0x8] sm:$0xff]
  %v459 = vld [vmem:[%s7 + $0x10] sm:$0xff]
  %v460 = vld [vmem:[%s7 + $0x18] sm:$0xff]
  %v462 = vsel %vm139, %v455, 0
  %464 = vmatpush.msra.mxu0 0.0
  %465 = vmatpush.msra.mxu0 0.0
  %466 = vmatpush.msra.mxu0 0.0
  %467 = vmatpush.msra.mxu0 0.0
  %468 = vmatpush.msra.mxu0 0.0
  %469 = vmatpush.msra.mxu0 0.0
  %470 = vmatpush.msra.mxu0 0.0
  %471 = vmatpush.msra.mxu0 0.0
  %472 = vmatpush.msra.mxu0 0.0
  %473 = vmatpush.msra.mxu0 0.0
  %474 = vmatpush.msra.mxu0 0.0
  %475 = vmatpush.msra.mxu0 0.0
  %476 = vmatpush.msra.mxu0 %v460
  %477 = vmatpush.msra.mxu0 %v459
  %478 = vmatpush.msra.mxu0 %v458
  %479 = vmatpush.msra.mxu0 %v457
  %480 = vmatmul.f32.gmra.mxu0 %v462
  %v481 = vpop.f32.mrf.mxu0
  %v482 = vadd.f32 0.0, %v481
  %483 = vdwg.mxu0
  %v484 = vld [vmem:[%s8] sm:$0xff]
  %v485 = vld [vmem:[%s8 + $0x8] sm:$0xff]
  %v486 = vld [vmem:[%s8 + $0x10] sm:$0xff]
  %v487 = vld [vmem:[%s8 + $0x18] sm:$0xff]
  %488 = vmatpush.msra.mxu0 0.0
  %489 = vmatpush.msra.mxu0 0.0
  %490 = vmatpush.msra.mxu0 0.0
  %491 = vmatpush.msra.mxu0 0.0
  %492 = vmatpush.msra.mxu0 0.0
  %493 = vmatpush.msra.mxu0 0.0
  %494 = vmatpush.msra.mxu0 0.0
  %495 = vmatpush.msra.mxu0 0.0
  %496 = vmatpush.msra.mxu0 0.0
  %497 = vmatpush.msra.mxu0 0.0
  %498 = vmatpush.msra.mxu0 0.0
  %499 = vmatpush.msra.mxu0 0.0
  %500 = vmatpush.msra.mxu0 %v487
  %501 = vmatpush.msra.mxu0 %v486
  %502 = vmatpush.msra.mxu0 %v485
  %503 = vmatpush.msra.mxu0 %v484
  %504 = vmatmul.f32.gmra.mxu0 %v462
  %v505 = vpop.f32.mrf.mxu0
  %v506 = vadd.f32 0.0, %v505
  %507 = vdwg.mxu0
  %v508 = vld [vmem:[%s9] sm:$0xff]
  %v509 = vld [vmem:[%s9 + $0x8] sm:$0xff]
  %v510 = vld [vmem:[%s9 + $0x10] sm:$0xff]
  %v511 = vld [vmem:[%s9 + $0x18] sm:$0xff]
  %512 = vmatpush.msra.mxu0 0.0
  %513 = vmatpush.msra.mxu0 0.0
  %514 = vmatpush.msra.mxu0 0.0
  %515 = vmatpush.msra.mxu0 0.0
  %516 = vmatpush.msra.mxu0 0.0
  %517 = vmatpush.msra.mxu0 0.0
  %518 = vmatpush.msra.mxu0 0.0
  %519 = vmatpush.msra.mxu0 0.0
  %520 = vmatpush.msra.mxu0 0.0
  %521 = vmatpush.msra.mxu0 0.0
  %522 = vmatpush.msra.mxu0 0.0
  %523 = vmatpush.msra.mxu0 0.0
  %524 = vmatpush.msra.mxu0 %v511
  %525 = vmatpush.msra.mxu0 %v510
  %526 = vmatpush.msra.mxu0 %v509
  %527 = vmatpush.msra.mxu0 %v508
  %528 = vmatmul.f32.gmra.mxu0 %v462
  %v529 = vpop.f32.mrf.mxu0
  %v530 = vadd.f32 %v329, %v529
  %531 = vdwg.mxu0
  %s532 = scalar_lea.vmem [#allocation2], 8
  %v533 = vld [vmem:[%s532] sm:$0xff]
  %v534 = vadd.f32 %v533, %v482
  %v535 = vxor.u32 %v534, 2147483648
  %v536 = vmul.f32 %v535, 1.442695
  %v537 = vpow.pop %v536
  %v538 = vadd.f32 %v537, 1.0
  %v539 = vrcp.pop %v538
  %v540 = vmul.f32 %v538, %v539
  %v541 = vsub.f32 1.0, %v540
  %v542 = vmul.f32 %v539, %v541
  %v543 = vadd.f32 %v539, %v542
  %vm544 = vweird.f32 %v538
  %vm545 = vweird.f32 %v539
  %vm546 = vmor %vm544, %vm545
  %v547 = vsel %vm546, %v539, %v543
  %v548 = vand.u32 2147483647, %v538
  %vm549 = vcmp.eq.f32.partialorder %v548, 8.507059e+37
  %v550 = vand.u32 %v538, 2147483648
  %v551 = vor.u32 1.1754944e-38, %v550
  %v552 = vsel %vm549, %v551, %v547
  %v553 = vmul.f32 1.0, %v552
  %s554 = scalar_lea.vmem [#allocation3], 8
  %v555 = vld [vmem:[%s554] sm:$0xff]
  %v556 = vadd.f32 %v555, %v506
  %v557 = vxor.u32 %v556, 2147483648
  %v558 = vmul.f32 %v557, 1.442695
  %v559 = vpow.pop %v558
  %v560 = vadd.f32 %v559, 1.0
  %v561 = vrcp.pop %v560
  %v562 = vmul.f32 %v560, %v561
  %v563 = vsub.f32 1.0, %v562
  %v564 = vmul.f32 %v561, %v563
  %v565 = vadd.f32 %v561, %v564
  %vm566 = vweird.f32 %v560
  %vm567 = vweird.f32 %v561
  %vm568 = vmor %vm566, %vm567
  %v569 = vsel %vm568, %v561, %v565
  %v570 = vand.u32 2147483647, %v560
  %vm571 = vcmp.eq.f32.partialorder %v570, 8.507059e+37
  %v572 = vand.u32 %v560, 2147483648
  %v573 = vor.u32 1.1754944e-38, %v572
  %v574 = vsel %vm571, %v573, %v569
  %v575 = vmul.f32 1.0, %v574
  %s576 = scalar_lea.vmem [#allocation4], 8
  %v577 = vld [vmem:[%s576] sm:$0xff]
  %v578 = vmul.f32 %v553, %v530
  %v579 = vadd.f32 %v577, %v578
  %v580 = vtanh.pop %v579
  %v581 = vsub.f32 1.0, %v575
  %v582 = vmul.f32 %v581, %v580
  %v583 = vmul.f32 %v575, %v455
  %v584 = vadd.f32 %v582, %v583
  %s585 = scalar_lea.vmem [#allocation5], 8
  %586 = vst.msk [vmem:[%s585] sm:$0xff] %vm139, %v584
  %v587 = vld [vmem:[%s7] sm:$0xff]
  %v588 = vld [vmem:[%s7 + $0x8] sm:$0xff]
  %v589 = vld [vmem:[%s7 + $0x10] sm:$0xff]
  %v590 = vld [vmem:[%s7 + $0x18] sm:$0xff]
  %v592 = vsel %vm139, %v584, 0
  %594 = vmatpush.msra.mxu0 0.0
  %595 = vmatpush.msra.mxu0 0.0
  %596 = vmatpush.msra.mxu0 0.0
  %597 = vmatpush.msra.mxu0 0.0
  %598 = vmatpush.msra.mxu0 0.0
  %599 = vmatpush.msra.mxu0 0.0
  %600 = vmatpush.msra.mxu0 0.0
  %601 = vmatpush.msra.mxu0 0.0
  %602 = vmatpush.msra.mxu0 0.0
  %603 = vmatpush.msra.mxu0 0.0
  %604 = vmatpush.msra.mxu0 0.0
  %605 = vmatpush.msra.mxu0 0.0
  %606 = vmatpush.msra.mxu0 %v590
  %607 = vmatpush.msra.mxu0 %v589
  %608 = vmatpush.msra.mxu0 %v588
  %609 = vmatpush.msra.mxu0 %v587
  %610 = vmatmul.f32.gmra.mxu0 %v592
  %v611 = vpop.f32.mrf.mxu0
  %v612 = vadd.f32 0.0, %v611
  %613 = vdwg.mxu0
  %v614 = vld [vmem:[%s8] sm:$0xff]
  %v615 = vld [vmem:[%s8 + $0x8] sm:$0xff]
  %v616 = vld [vmem:[%s8 + $0x10] sm:$0xff]
  %v617 = vld [vmem:[%s8 + $0x18] sm:$0xff]
  %618 = vmatpush.msra.mxu0 0.0
  %619 = vmatpush.msra.mxu0 0.0
  %620 = vmatpush.msra.mxu0 0.0
  %621 = vmatpush.msra.mxu0 0.0
  %622 = vmatpush.msra.mxu0 0.0
  %623 = vmatpush.msra.mxu0 0.0
  %624 = vmatpush.msra.mxu0 0.0
  %625 = vmatpush.msra.mxu0 0.0
  %626 = vmatpush.msra.mxu0 0.0
  %627 = vmatpush.msra.mxu0 0.0
  %628 = vmatpush.msra.mxu0 0.0
  %629 = vmatpush.msra.mxu0 0.0
  %630 = vmatpush.msra.mxu0 %v617
  %631 = vmatpush.msra.mxu0 %v616
  %632 = vmatpush.msra.mxu0 %v615
  %633 = vmatpush.msra.mxu0 %v614
  %634 = vmatmul.f32.gmra.mxu0 %v592
  %v635 = vpop.f32.mrf.mxu0
  %v636 = vadd.f32 0.0, %v635
  %637 = vdwg.mxu0
  %v638 = vld [vmem:[%s9] sm:$0xff]
  %v639 = vld [vmem:[%s9 + $0x8] sm:$0xff]
  %v640 = vld [vmem:[%s9 + $0x10] sm:$0xff]
  %v641 = vld [vmem:[%s9 + $0x18] sm:$0xff]
  %642 = vmatpush.msra.mxu0 0.0
  %643 = vmatpush.msra.mxu0 0.0
  %644 = vmatpush.msra.mxu0 0.0
  %645 = vmatpush.msra.mxu0 0.0
  %646 = vmatpush.msra.mxu0 0.0
  %647 = vmatpush.msra.mxu0 0.0
  %648 = vmatpush.msra.mxu0 0.0
  %649 = vmatpush.msra.mxu0 0.0
  %650 = vmatpush.msra.mxu0 0.0
  %651 = vmatpush.msra.mxu0 0.0
  %652 = vmatpush.msra.mxu0 0.0
  %653 = vmatpush.msra.mxu0 0.0
  %654 = vmatpush.msra.mxu0 %v641
  %655 = vmatpush.msra.mxu0 %v640
  %656 = vmatpush.msra.mxu0 %v639
  %657 = vmatpush.msra.mxu0 %v638
  %658 = vmatmul.f32.gmra.mxu0 %v592
  %v659 = vpop.f32.mrf.mxu0
  %v660 = vadd.f32 %v329, %v659
  %661 = vdwg.mxu0
  %s662 = scalar_lea.vmem [#allocation2], 16
  %v663 = vld [vmem:[%s662] sm:$0xff]
  %v664 = vadd.f32 %v663, %v612
  %v665 = vxor.u32 %v664, 2147483648
  %v666 = vmul.f32 %v665, 1.442695
  %v667 = vpow.pop %v666
  %v668 = vadd.f32 %v667, 1.0
  %v669 = vrcp.pop %v668
  %v670 = vmul.f32 %v668, %v669
  %v671 = vsub.f32 1.0, %v670
  %v672 = vmul.f32 %v669, %v671
  %v673 = vadd.f32 %v669, %v672
  %vm674 = vweird.f32 %v668
  %vm675 = vweird.f32 %v669
  %vm676 = vmor %vm674, %vm675
  %v677 = vsel %vm676, %v669, %v673
  %v678 = vand.u32 2147483647, %v668
  %vm679 = vcmp.eq.f32.partialorder %v678, 8.507059e+37
  %v680 = vand.u32 %v668, 2147483648
  %v681 = vor.u32 1.1754944e-38, %v680
  %v682 = vsel %vm679, %v681, %v677
  %v683 = vmul.f32 1.0, %v682
  %s684 = scalar_lea.vmem [#allocation3], 16
  %v685 = vld [vmem:[%s684] sm:$0xff]
  %v686 = vadd.f32 %v685, %v636
  %v687 = vxor.u32 %v686, 2147483648
  %v688 = vmul.f32 %v687, 1.442695
  %v689 = vpow.pop %v688
  %v690 = vadd.f32 %v689, 1.0
  %v691 = vrcp.pop %v690
  %v692 = vmul.f32 %v690, %v691
  %v693 = vsub.f32 1.0, %v692
  %v694 = vmul.f32 %v691, %v693
  %v695 = vadd.f32 %v691, %v694
  %vm696 = vweird.f32 %v690
  %vm697 = vweird.f32 %v691
  %vm698 = vmor %vm696, %vm697
  %v699 = vsel %vm698, %v691, %v695
  %v700 = vand.u32 2147483647, %v690
  %vm701 = vcmp.eq.f32.partialorder %v700, 8.507059e+37
  %v702 = vand.u32 %v690, 2147483648
  %v703 = vor.u32 1.1754944e-38, %v702
  %v704 = vsel %vm701, %v703, %v699
  %v705 = vmul.f32 1.0, %v704
  %s706 = scalar_lea.vmem [#allocation4], 16
  %v707 = vld [vmem:[%s706] sm:$0xff]
  %v708 = vmul.f32 %v683, %v660
  %v709 = vadd.f32 %v707, %v708
  %v710 = vtanh.pop %v709
  %v711 = vsub.f32 1.0, %v705
  %v712 = vmul.f32 %v711, %v710
  %v713 = vmul.f32 %v705, %v584
  %v714 = vadd.f32 %v712, %v713
  %s715 = scalar_lea.vmem [#allocation5], 16
  %716 = vst.msk [vmem:[%s715] sm:$0xff] %vm139, %v714
  %v717 = vld [vmem:[%s7] sm:$0xff]
  %v718 = vld [vmem:[%s7 + $0x8] sm:$0xff]
  %v719 = vld [vmem:[%s7 + $0x10] sm:$0xff]
  %v720 = vld [vmem:[%s7 + $0x18] sm:$0xff]
  %v722 = vsel %vm139, %v714, 0
  %724 = vmatpush.msra.mxu0 0.0
  %725 = vmatpush.msra.mxu0 0.0
  %726 = vmatpush.msra.mxu0 0.0
  %727 = vmatpush.msra.mxu0 0.0
  %728 = vmatpush.msra.mxu0 0.0
  %729 = vmatpush.msra.mxu0 0.0
  %730 = vmatpush.msra.mxu0 0.0
  %731 = vmatpush.msra.mxu0 0.0
  %732 = vmatpush.msra.mxu0 0.0
  %733 = vmatpush.msra.mxu0 0.0
  %734 = vmatpush.msra.mxu0 0.0
  %735 = vmatpush.msra.mxu0 0.0
  %736 = vmatpush.msra.mxu0 %v720
  %737 = vmatpush.msra.mxu0 %v719
  %738 = vmatpush.msra.mxu0 %v718
  %739 = vmatpush.msra.mxu0 %v717
  %740 = vmatmul.f32.gmra.mxu0 %v722
  %v741 = vpop.f32.mrf.mxu0
  %v742 = vadd.f32 0.0, %v741
  %743 = vdwg.mxu0
  %v744 = vld [vmem:[%s8] sm:$0xff]
  %v745 = vld [vmem:[%s8 + $0x8] sm:$0xff]
  %v746 = vld [vmem:[%s8 + $0x10] sm:$0xff]
  %v747 = vld [vmem:[%s8 + $0x18] sm:$0xff]
  %748 = vmatpush.msra.mxu0 0.0
  %749 = vmatpush.msra.mxu0 0.0
  %750 = vmatpush.msra.mxu0 0.0
  %751 = vmatpush.msra.mxu0 0.0
  %752 = vmatpush.msra.mxu0 0.0
  %753 = vmatpush.msra.mxu0 0.0
  %754 = vmatpush.msra.mxu0 0.0
  %755 = vmatpush.msra.mxu0 0.0
  %756 = vmatpush.msra.mxu0 0.0
  %757 = vmatpush.msra.mxu0 0.0
  %758 = vmatpush.msra.mxu0 0.0
  %759 = vmatpush.msra.mxu0 0.0
  %760 = vmatpush.msra.mxu0 %v747
  %761 = vmatpush.msra.mxu0 %v746
  %762 = vmatpush.msra.mxu0 %v745
  %763 = vmatpush.msra.mxu0 %v744
  %764 = vmatmul.f32.gmra.mxu0 %v722
  %v765 = vpop.f32.mrf.mxu0
  %v766 = vadd.f32 0.0, %v765
  %767 = vdwg.mxu0
  %v768 = vld [vmem:[%s9] sm:$0xff]
  %v769 = vld [vmem:[%s9 + $0x8] sm:$0xff]
  %v770 = vld [vmem:[%s9 + $0x10] sm:$0xff]
  %v771 = vld [vmem:[%s9 + $0x18] sm:$0xff]
  %772 = vmatpush.msra.mxu0 0.0
  %773 = vmatpush.msra.mxu0 0.0
  %774 = vmatpush.msra.mxu0 0.0
  %775 = vmatpush.msra.mxu0 0.0
  %776 = vmatpush.msra.mxu0 0.0
  %777 = vmatpush.msra.mxu0 0.0
  %778 = vmatpush.msra.mxu0 0.0
  %779 = vmatpush.msra.mxu0 0.0
  %780 = vmatpush.msra.mxu0 0.0
  %781 = vmatpush.msra.mxu0 0.0
  %782 = vmatpush.msra.mxu0 0.0
  %783 = vmatpush.msra.mxu0 0.0
  %784 = vmatpush.msra.mxu0 %v771
  %785 = vmatpush.msra.mxu0 %v770
  %786 = vmatpush.msra.mxu0 %v769
  %787 = vmatpush.msra.mxu0 %v768
  %788 = vmatmul.f32.gmra.mxu0 %v722
  %v789 = vpop.f32.mrf.mxu0
  %v790 = vadd.f32 %v329, %v789
  %791 = vdwg.mxu0
  %s792 = scalar_lea.vmem [#allocation2], 24
  %v793 = vld [vmem:[%s792] sm:$0xff]
  %v794 = vadd.f32 %v793, %v742
  %v795 = vxor.u32 %v794, 2147483648
  %v796 = vmul.f32 %v795, 1.442695
  %v797 = vpow.pop %v796
  %v798 = vadd.f32 %v797, 1.0
  %v799 = vrcp.pop %v798
  %v800 = vmul.f32 %v798, %v799
  %v801 = vsub.f32 1.0, %v800
  %v802 = vmul.f32 %v799, %v801
  %v803 = vadd.f32 %v799, %v802
  %vm804 = vweird.f32 %v798
  %vm805 = vweird.f32 %v799
  %vm806 = vmor %vm804, %vm805
  %v807 = vsel %vm806, %v799, %v803
  %v808 = vand.u32 2147483647, %v798
  %vm809 = vcmp.eq.f32.partialorder %v808, 8.507059e+37
  %v810 = vand.u32 %v798, 2147483648
  %v811 = vor.u32 1.1754944e-38, %v810
  %v812 = vsel %vm809, %v811, %v807
  %v813 = vmul.f32 1.0, %v812
  %s814 = scalar_lea.vmem [#allocation3], 24
  %v815 = vld [vmem:[%s814] sm:$0xff]
  %v816 = vadd.f32 %v815, %v766
  %v817 = vxor.u32 %v816, 2147483648
  %v818 = vmul.f32 %v817, 1.442695
  %v819 = vpow.pop %v818
  %v820 = vadd.f32 %v819, 1.0
  %v821 = vrcp.pop %v820
  %v822 = vmul.f32 %v820, %v821
  %v823 = vsub.f32 1.0, %v822
  %v824 = vmul.f32 %v821, %v823
  %v825 = vadd.f32 %v821, %v824
  %vm826 = vweird.f32 %v820
  %vm827 = vweird.f32 %v821
  %vm828 = vmor %vm826, %vm827
  %v829 = vsel %vm828, %v821, %v825
  %v830 = vand.u32 2147483647, %v820
  %vm831 = vcmp.eq.f32.partialorder %v830, 8.507059e+37
  %v832 = vand.u32 %v820, 2147483648
  %v833 = vor.u32 1.1754944e-38, %v832
  %v834 = vsel %vm831, %v833, %v829
  %v835 = vmul.f32 1.0, %v834
  %s836 = scalar_lea.vmem [#allocation4], 24
  %v837 = vld [vmem:[%s836] sm:$0xff]
  %v838 = vmul.f32 %v813, %v790
  %v839 = vadd.f32 %v837, %v838
  %v840 = vtanh.pop %v839
  %v841 = vsub.f32 1.0, %v835
  %v842 = vmul.f32 %v841, %v840
  %v843 = vmul.f32 %v835, %v714
  %v844 = vadd.f32 %v842, %v843
  %s845 = scalar_lea.vmem [#allocation5], 24
  %846 = vst.msk [vmem:[%s845] sm:$0xff] %vm139, %v844
  %v847 = vld [vmem:[%s7] sm:$0xff]
  %v848 = vld [vmem:[%s7 + $0x8] sm:$0xff]
  %v849 = vld [vmem:[%s7 + $0x10] sm:$0xff]
  %v850 = vld [vmem:[%s7 + $0x18] sm:$0xff]
  %v852 = vsel %vm139, %v844, 0
  %854 = vmatpush.msra.mxu0 0.0
  %855 = vmatpush.msra.mxu0 0.0
  %856 = vmatpush.msra.mxu0 0.0
  %857 = vmatpush.msra.mxu0 0.0
  %858 = vmatpush.msra.mxu0 0.0
  %859 = vmatpush.msra.mxu0 0.0
  %860 = vmatpush.msra.mxu0 0.0
  %861 = vmatpush.msra.mxu0 0.0
  %862 = vmatpush.msra.mxu0 0.0
  %863 = vmatpush.msra.mxu0 0.0
  %864 = vmatpush.msra.mxu0 0.0
  %865 = vmatpush.msra.mxu0 0.0
  %866 = vmatpush.msra.mxu0 %v850
  %867 = vmatpush.msra.mxu0 %v849
  %868 = vmatpush.msra.mxu0 %v848
  %869 = vmatpush.msra.mxu0 %v847
  %870 = vmatmul.f32.gmra.mxu0 %v852
  %v871 = vpop.f32.mrf.mxu0
  %v872 = vadd.f32 0.0, %v871
  %873 = vdwg.mxu0
  %v874 = vld [vmem:[%s8] sm:$0xff]
  %v875 = vld [vmem:[%s8 + $0x8] sm:$0xff]
  %v876 = vld [vmem:[%s8 + $0x10] sm:$0xff]
  %v877 = vld [vmem:[%s8 + $0x18] sm:$0xff]
  %878 = vmatpush.msra.mxu0 0.0
  %879 = vmatpush.msra.mxu0 0.0
  %880 = vmatpush.msra.mxu0 0.0
  %881 = vmatpush.msra.mxu0 0.0
  %882 = vmatpush.msra.mxu0 0.0
  %883 = vmatpush.msra.mxu0 0.0
  %884 = vmatpush.msra.mxu0 0.0
  %885 = vmatpush.msra.mxu0 0.0
  %886 = vmatpush.msra.mxu0 0.0
  %887 = vmatpush.msra.mxu0 0.0
  %888 = vmatpush.msra.mxu0 0.0
  %889 = vmatpush.msra.mxu0 0.0
  %890 = vmatpush.msra.mxu0 %v877
  %891 = vmatpush.msra.mxu0 %v876
  %892 = vmatpush.msra.mxu0 %v875
  %893 = vmatpush.msra.mxu0 %v874
  %894 = vmatmul.f32.gmra.mxu0 %v852
  %v895 = vpop.f32.mrf.mxu0
  %v896 = vadd.f32 0.0, %v895
  %897 = vdwg.mxu0
  %v898 = vld [vmem:[%s9] sm:$0xff]
  %v899 = vld [vmem:[%s9 + $0x8] sm:$0xff]
  %v900 = vld [vmem:[%s9 + $0x10] sm:$0xff]
  %v901 = vld [vmem:[%s9 + $0x18] sm:$0xff]
  %902 = vmatpush.msra.mxu0 0.0
  %903 = vmatpush.msra.mxu0 0.0
  %904 = vmatpush.msra.mxu0 0.0
  %905 = vmatpush.msra.mxu0 0.0
  %906 = vmatpush.msra.mxu0 0.0
  %907 = vmatpush.msra.mxu0 0.0
  %908 = vmatpush.msra.mxu0 0.0
  %909 = vmatpush.msra.mxu0 0.0
  %910 = vmatpush.msra.mxu0 0.0
  %911 = vmatpush.msra.mxu0 0.0
  %912 = vmatpush.msra.mxu0 0.0
  %913 = vmatpush.msra.mxu0 0.0
  %914 = vmatpush.msra.mxu0 %v901
  %915 = vmatpush.msra.mxu0 %v900
  %916 = vmatpush.msra.mxu0 %v899
  %917 = vmatpush.msra.mxu0 %v898
  %918 = vmatmul.f32.gmra.mxu0 %v852
  %v919 = vpop.f32.mrf.mxu0
  %v920 = vadd.f32 %v329, %v919
  %921 = vdwg.mxu0
  %s922 = scalar_lea.vmem [#allocation2], 32
  %v923 = vld [vmem:[%s922] sm:$0xff]
  %v924 = vadd.f32 %v923, %v872
  %v925 = vxor.u32 %v924, 2147483648
  %v926 = vmul.f32 %v925, 1.442695
  %v927 = vpow.pop %v926
  %v928 = vadd.f32 %v927, 1.0
  %v929 = vrcp.pop %v928
  %v930 = vmul.f32 %v928, %v929
  %v931 = vsub.f32 1.0, %v930
  %v932 = vmul.f32 %v929, %v931
  %v933 = vadd.f32 %v929, %v932
  %vm934 = vweird.f32 %v928
  %vm935 = vweird.f32 %v929
  %vm936 = vmor %vm934, %vm935
  %v937 = vsel %vm936, %v929, %v933
  %v938 = vand.u32 2147483647, %v928
  %vm939 = vcmp.eq.f32.partialorder %v938, 8.507059e+37
  %v940 = vand.u32 %v928, 2147483648
  %v941 = vor.u32 1.1754944e-38, %v940
  %v942 = vsel %vm939, %v941, %v937
  %v943 = vmul.f32 1.0, %v942
  %s944 = scalar_lea.vmem [#allocation3], 32
  %v945 = vld [vmem:[%s944] sm:$0xff]
  %v946 = vadd.f32 %v945, %v896
  %v947 = vxor.u32 %v946, 2147483648
  %v948 = vmul.f32 %v947, 1.442695
  %v949 = vpow.pop %v948
  %v950 = vadd.f32 %v949, 1.0
  %v951 = vrcp.pop %v950
  %v952 = vmul.f32 %v950, %v951
  %v953 = vsub.f32 1.0, %v952
  %v954 = vmul.f32 %v951, %v953
  %v955 = vadd.f32 %v951, %v954
  %vm956 = vweird.f32 %v950
  %vm957 = vweird.f32 %v951
  %vm958 = vmor %vm956, %vm957
  %v959 = vsel %vm958, %v951, %v955
  %v960 = vand.u32 2147483647, %v950
  %vm961 = vcmp.eq.f32.partialorder %v960, 8.507059e+37
  %v962 = vand.u32 %v950, 2147483648
  %v963 = vor.u32 1.1754944e-38, %v962
  %v964 = vsel %vm961, %v963, %v959
  %v965 = vmul.f32 1.0, %v964
  %s966 = scalar_lea.vmem [#allocation4], 32
  %v967 = vld [vmem:[%s966] sm:$0xff]
  %v968 = vmul.f32 %v943, %v920
  %v969 = vadd.f32 %v967, %v968
  %v970 = vtanh.pop %v969
  %v971 = vsub.f32 1.0, %v965
  %v972 = vmul.f32 %v971, %v970
  %v973 = vmul.f32 %v965, %v844
  %v974 = vadd.f32 %v972, %v973
  %s975 = scalar_lea.vmem [#allocation5], 32
  %976 = vst.msk [vmem:[%s975] sm:$0xff] %vm139, %v974
  %v977 = vld [vmem:[%s7] sm:$0xff]
  %v978 = vld [vmem:[%s7 + $0x8] sm:$0xff]
  %v979 = vld [vmem:[%s7 + $0x10] sm:$0xff]
  %v980 = vld [vmem:[%s7 + $0x18] sm:$0xff]
  %v982 = vsel %vm139, %v974, 0
  %984 = vmatpush.msra.mxu0 0.0
  %985 = vmatpush.msra.mxu0 0.0
  %986 = vmatpush.msra.mxu0 0.0
  %987 = vmatpush.msra.mxu0 0.0
  %988 = vmatpush.msra.mxu0 0.0
  %989 = vmatpush.msra.mxu0 0.0
  %990 = vmatpush.msra.mxu0 0.0
  %991 = vmatpush.msra.mxu0 0.0
  %992 = vmatpush.msra.mxu0 0.0
  %993 = vmatpush.msra.mxu0 0.0
  %994 = vmatpush.msra.mxu0 0.0
  %995 = vmatpush.msra.mxu0 0.0
  %996 = vmatpush.msra.mxu0 %v980
  %997 = vmatpush.msra.mxu0 %v979
  %998 = vmatpush.msra.mxu0 %v978
  %999 = vmatpush.msra.mxu0 %v977
  %1000 = vmatmul.f32.gmra.mxu0 %v982
  %v1001 = vpop.f32.mrf.mxu0
  %v1002 = vadd.f32 0.0, %v1001
  %1003 = vdwg.mxu0
  %v1004 = vld [vmem:[%s8] sm:$0xff]
  %v1005 = vld [vmem:[%s8 + $0x8] sm:$0xff]
  %v1006 = vld [vmem:[%s8 + $0x10] sm:$0xff]
  %v1007 = vld [vmem:[%s8 + $0x18] sm:$0xff]
  %1008 = vmatpush.msra.mxu0 0.0
  %1009 = vmatpush.msra.mxu0 0.0
  %1010 = vmatpush.msra.mxu0 0.0
  %1011 = vmatpush.msra.mxu0 0.0
  %1012 = vmatpush.msra.mxu0 0.0
  %1013 = vmatpush.msra.mxu0 0.0
  %1014 = vmatpush.msra.mxu0 0.0
  %1015 = vmatpush.msra.mxu0 0.0
  %1016 = vmatpush.msra.mxu0 0.0
  %1017 = vmatpush.msra.mxu0 0.0
  %1018 = vmatpush.msra.mxu0 0.0
  %1019 = vmatpush.msra.mxu0 0.0
  %1020 = vmatpush.msra.mxu0 %v1007
  %1021 = vmatpush.msra.mxu0 %v1006
  %1022 = vmatpush.msra.mxu0 %v1005
  %1023 = vmatpush.msra.mxu0 %v1004
  %1024 = vmatmul.f32.gmra.mxu0 %v982
  %v1025 = vpop.f32.mrf.mxu0
  %v1026 = vadd.f32 0.0, %v1025
  %1027 = vdwg.mxu0
  %v1028 = vld [vmem:[%s9] sm:$0xff]
  %v1029 = vld [vmem:[%s9 + $0x8] sm:$0xff]
  %v1030 = vld [vmem:[%s9 + $0x10] sm:$0xff]
  %v1031 = vld [vmem:[%s9 + $0x18] sm:$0xff]
  %1032 = vmatpush.msra.mxu0 0.0
  %1033 = vmatpush.msra.mxu0 0.0
  %1034 = vmatpush.msra.mxu0 0.0
  %1035 = vmatpush.msra.mxu0 0.0
  %1036 = vmatpush.msra.mxu0 0.0
  %1037 = vmatpush.msra.mxu0 0.0
  %1038 = vmatpush.msra.mxu0 0.0
  %1039 = vmatpush.msra.mxu0 0.0
  %1040 = vmatpush.msra.mxu0 0.0
  %1041 = vmatpush.msra.mxu0 0.0
  %1042 = vmatpush.msra.mxu0 0.0
  %1043 = vmatpush.msra.mxu0 0.0
  %1044 = vmatpush.msra.mxu0 %v1031
  %1045 = vmatpush.msra.mxu0 %v1030
  %1046 = vmatpush.msra.mxu0 %v1029
  %1047 = vmatpush.msra.mxu0 %v1028
  %1048 = vmatmul.f32.gmra.mxu0 %v982
  %v1049 = vpop.f32.mrf.mxu0
  %v1050 = vadd.f32 %v329, %v1049
  %1051 = vdwg.mxu0
  %s1052 = scalar_lea.vmem [#allocation2], 40
  %v1053 = vld [vmem:[%s1052] sm:$0xff]
  %v1054 = vadd.f32 %v1053, %v1002
  %v1055 = vxor.u32 %v1054, 2147483648
  %v1056 = vmul.f32 %v1055, 1.442695
  %v1057 = vpow.pop %v1056
  %v1058 = vadd.f32 %v1057, 1.0
  %v1059 = vrcp.pop %v1058
  %v1060 = vmul.f32 %v1058, %v1059
  %v1061 = vsub.f32 1.0, %v1060
  %v1062 = vmul.f32 %v1059, %v1061
  %v1063 = vadd.f32 %v1059, %v1062
  %vm1064 = vweird.f32 %v1058
  %vm1065 = vweird.f32 %v1059
  %vm1066 = vmor %vm1064, %vm1065
  %v1067 = vsel %vm1066, %v1059, %v1063
  %v1068 = vand.u32 2147483647, %v1058
  %vm1069 = vcmp.eq.f32.partialorder %v1068, 8.507059e+37
  %v1070 = vand.u32 %v1058, 2147483648
  %v1071 = vor.u32 1.1754944e-38, %v1070
  %v1072 = vsel %vm1069, %v1071, %v1067
  %v1073 = vmul.f32 1.0, %v1072
  %s1074 = scalar_lea.vmem [#allocation3], 40
  %v1075 = vld [vmem:[%s1074] sm:$0xff]
  %v1076 = vadd.f32 %v1075, %v1026
  %v1077 = vxor.u32 %v1076, 2147483648
  %v1078 = vmul.f32 %v1077, 1.442695
  %v1079 = vpow.pop %v1078
  %v1080 = vadd.f32 %v1079, 1.0
  %v1081 = vrcp.pop %v1080
  %v1082 = vmul.f32 %v1080, %v1081
  %v1083 = vsub.f32 1.0, %v1082
  %v1084 = vmul.f32 %v1081, %v1083
  %v1085 = vadd.f32 %v1081, %v1084
  %vm1086 = vweird.f32 %v1080
  %vm1087 = vweird.f32 %v1081
  %vm1088 = vmor %vm1086, %vm1087
  %v1089 = vsel %vm1088, %v1081, %v1085
  %v1090 = vand.u32 2147483647, %v1080
  %vm1091 = vcmp.eq.f32.partialorder %v1090, 8.507059e+37
  %v1092 = vand.u32 %v1080, 2147483648
  %v1093 = vor.u32 1.1754944e-38, %v1092
  %v1094 = vsel %vm1091, %v1093, %v1089
  %v1095 = vmul.f32 1.0, %v1094
  %s1096 = scalar_lea.vmem [#allocation4], 40
  %v1097 = vld [vmem:[%s1096] sm:$0xff]
  %v1098 = vmul.f32 %v1073, %v1050
  %v1099 = vadd.f32 %v1097, %v1098
  %v1100 = vtanh.pop %v1099
  %v1101 = vsub.f32 1.0, %v1095
  %v1102 = vmul.f32 %v1101, %v1100
  %v1103 = vmul.f32 %v1095, %v974
  %v1104 = vadd.f32 %v1102, %v1103
  %s1105 = scalar_lea.vmem [#allocation5], 40
  %1106 = vst.msk [vmem:[%s1105] sm:$0xff] %vm139, %v1104
  %v1107 = vld [vmem:[%s7] sm:$0xff]
  %v1108 = vld [vmem:[%s7 + $0x8] sm:$0xff]
  %v1109 = vld [vmem:[%s7 + $0x10] sm:$0xff]
  %v1110 = vld [vmem:[%s7 + $0x18] sm:$0xff]
  %v1112 = vsel %vm139, %v1104, 0
  %1114 = vmatpush.msra.mxu0 0.0
  %1115 = vmatpush.msra.mxu0 0.0
  %1116 = vmatpush.msra.mxu0 0.0
  %1117 = vmatpush.msra.mxu0 0.0
  %1118 = vmatpush.msra.mxu0 0.0
  %1119 = vmatpush.msra.mxu0 0.0
  %1120 = vmatpush.msra.mxu0 0.0
  %1121 = vmatpush.msra.mxu0 0.0
  %1122 = vmatpush.msra.mxu0 0.0
  %1123 = vmatpush.msra.mxu0 0.0
  %1124 = vmatpush.msra.mxu0 0.0
  %1125 = vmatpush.msra.mxu0 0.0
  %1126 = vmatpush.msra.mxu0 %v1110
  %1127 = vmatpush.msra.mxu0 %v1109
  %1128 = vmatpush.msra.mxu0 %v1108
  %1129 = vmatpush.msra.mxu0 %v1107
  %1130 = vmatmul.f32.gmra.mxu0 %v1112
  %v1131 = vpop.f32.mrf.mxu0
  %v1132 = vadd.f32 0.0, %v1131
  %1133 = vdwg.mxu0
  %v1134 = vld [vmem:[%s8] sm:$0xff]
  %v1135 = vld [vmem:[%s8 + $0x8] sm:$0xff]
  %v1136 = vld [vmem:[%s8 + $0x10] sm:$0xff]
  %v1137 = vld [vmem:[%s8 + $0x18] sm:$0xff]
  %1138 = vmatpush.msra.mxu0 0.0
  %1139 = vmatpush.msra.mxu0 0.0
  %1140 = vmatpush.msra.mxu0 0.0
  %1141 = vmatpush.msra.mxu0 0.0
  %1142 = vmatpush.msra.mxu0 0.0
  %1143 = vmatpush.msra.mxu0 0.0
  %1144 = vmatpush.msra.mxu0 0.0
  %1145 = vmatpush.msra.mxu0 0.0
  %1146 = vmatpush.msra.mxu0 0.0
  %1147 = vmatpush.msra.mxu0 0.0
  %1148 = vmatpush.msra.mxu0 0.0
  %1149 = vmatpush.msra.mxu0 0.0
  %1150 = vmatpush.msra.mxu0 %v1137
  %1151 = vmatpush.msra.mxu0 %v1136
  %1152 = vmatpush.msra.mxu0 %v1135
  %1153 = vmatpush.msra.mxu0 %v1134
  %1154 = vmatmul.f32.gmra.mxu0 %v1112
  %v1155 = vpop.f32.mrf.mxu0
  %v1156 = vadd.f32 0.0, %v1155
  %1157 = vdwg.mxu0
  %v1158 = vld [vmem:[%s9] sm:$0xff]
  %v1159 = vld [vmem:[%s9 + $0x8] sm:$0xff]
  %v1160 = vld [vmem:[%s9 + $0x10] sm:$0xff]
  %v1161 = vld [vmem:[%s9 + $0x18] sm:$0xff]
  %1162 = vmatpush.msra.mxu0 0.0
  %1163 = vmatpush.msra.mxu0 0.0
  %1164 = vmatpush.msra.mxu0 0.0
  %1165 = vmatpush.msra.mxu0 0.0
  %1166 = vmatpush.msra.mxu0 0.0
  %1167 = vmatpush.msra.mxu0 0.0
  %1168 = vmatpush.msra.mxu0 0.0
  %1169 = vmatpush.msra.mxu0 0.0
  %1170 = vmatpush.msra.mxu0 0.0
  %1171 = vmatpush.msra.mxu0 0.0
  %1172 = vmatpush.msra.mxu0 0.0
  %1173 = vmatpush.msra.mxu0 0.0
  %1174 = vmatpush.msra.mxu0 %v1161
  %1175 = vmatpush.msra.mxu0 %v1160
  %1176 = vmatpush.msra.mxu0 %v1159
  %1177 = vmatpush.msra.mxu0 %v1158
  %1178 = vmatmul.f32.gmra.mxu0 %v1112
  %v1179 = vpop.f32.mrf.mxu0
  %v1180 = vadd.f32 %v329, %v1179
  %1181 = vdwg.mxu0
  %s1182 = scalar_lea.vmem [#allocation2], 48
  %v1183 = vld [vmem:[%s1182] sm:$0xff]
  %v1184 = vadd.f32 %v1183, %v1132
  %v1185 = vxor.u32 %v1184, 2147483648
  %v1186 = vmul.f32 %v1185, 1.442695
  %v1187 = vpow.pop %v1186
  %v1188 = vadd.f32 %v1187, 1.0
  %v1189 = vrcp.pop %v1188
  %v1190 = vmul.f32 %v1188, %v1189
  %v1191 = vsub.f32 1.0, %v1190
  %v1192 = vmul.f32 %v1189, %v1191
  %v1193 = vadd.f32 %v1189, %v1192
  %vm1194 = vweird.f32 %v1188
  %vm1195 = vweird.f32 %v1189
  %vm1196 = vmor %vm1194, %vm1195
  %v1197 = vsel %vm1196, %v1189, %v1193
  %v1198 = vand.u32 2147483647, %v1188
  %vm1199 = vcmp.eq.f32.partialorder %v1198, 8.507059e+37
  %v1200 = vand.u32 %v1188, 2147483648
  %v1201 = vor.u32 1.1754944e-38, %v1200
  %v1202 = vsel %vm1199, %v1201, %v1197
  %v1203 = vmul.f32 1.0, %v1202
  %s1204 = scalar_lea.vmem [#allocation3], 48
  %v1205 = vld [vmem:[%s1204] sm:$0xff]
  %v1206 = vadd.f32 %v1205, %v1156
  %v1207 = vxor.u32 %v1206, 2147483648
  %v1208 = vmul.f32 %v1207, 1.442695
  %v1209 = vpow.pop %v1208
  %v1210 = vadd.f32 %v1209, 1.0
  %v1211 = vrcp.pop %v1210
  %v1212 = vmul.f32 %v1210, %v1211
  %v1213 = vsub.f32 1.0, %v1212
  %v1214 = vmul.f32 %v1211, %v1213
  %v1215 = vadd.f32 %v1211, %v1214
  %vm1216 = vweird.f32 %v1210
  %vm1217 = vweird.f32 %v1211
  %vm1218 = vmor %vm1216, %vm1217
  %v1219 = vsel %vm1218, %v1211, %v1215
  %v1220 = vand.u32 2147483647, %v1210
  %vm1221 = vcmp.eq.f32.partialorder %v1220, 8.507059e+37
  %v1222 = vand.u32 %v1210, 2147483648
  %v1223 = vor.u32 1.1754944e-38, %v1222
  %v1224 = vsel %vm1221, %v1223, %v1219
  %v1225 = vmul.f32 1.0, %v1224
  %s1226 = scalar_lea.vmem [#allocation4], 48
  %v1227 = vld [vmem:[%s1226] sm:$0xff]
  %v1228 = vmul.f32 %v1203, %v1180
  %v1229 = vadd.f32 %v1227, %v1228
  %v1230 = vtanh.pop %v1229
  %v1231 = vsub.f32 1.0, %v1225
  %v1232 = vmul.f32 %v1231, %v1230
  %v1233 = vmul.f32 %v1225, %v1104
  %v1234 = vadd.f32 %v1232, %v1233
  %s1235 = scalar_lea.vmem [#allocation5], 48
  %1236 = vst.msk [vmem:[%s1235] sm:$0xff] %vm139, %v1234
  %v1237 = vld [vmem:[%s7] sm:$0xff]
  %v1238 = vld [vmem:[%s7 + $0x8] sm:$0xff]
  %v1239 = vld [vmem:[%s7 + $0x10] sm:$0xff]
  %v1240 = vld [vmem:[%s7 + $0x18] sm:$0xff]
  %v1242 = vsel %vm139, %v1234, 0
  %1244 = vmatpush.msra.mxu0 0.0
  %1245 = vmatpush.msra.mxu0 0.0
  %1246 = vmatpush.msra.mxu0 0.0
  %1247 = vmatpush.msra.mxu0 0.0
  %1248 = vmatpush.msra.mxu0 0.0
  %1249 = vmatpush.msra.mxu0 0.0
  %1250 = vmatpush.msra.mxu0 0.0
  %1251 = vmatpush.msra.mxu0 0.0
  %1252 = vmatpush.msra.mxu0 0.0
  %1253 = vmatpush.msra.mxu0 0.0
  %1254 = vmatpush.msra.mxu0 0.0
  %1255 = vmatpush.msra.mxu0 0.0
  %1256 = vmatpush.msra.mxu0 %v1240
  %1257 = vmatpush.msra.mxu0 %v1239
  %1258 = vmatpush.msra.mxu0 %v1238
  %1259 = vmatpush.msra.mxu0 %v1237
  %1260 = vmatmul.f32.gmra.mxu0 %v1242
  %v1261 = vpop.f32.mrf.mxu0
  %v1262 = vadd.f32 0.0, %v1261
  %1263 = vdwg.mxu0
  %v1264 = vld [vmem:[%s8] sm:$0xff]
  %v1265 = vld [vmem:[%s8 + $0x8] sm:$0xff]
  %v1266 = vld [vmem:[%s8 + $0x10] sm:$0xff]
  %v1267 = vld [vmem:[%s8 + $0x18] sm:$0xff]
  %1268 = vmatpush.msra.mxu0 0.0
  %1269 = vmatpush.msra.mxu0 0.0
  %1270 = vmatpush.msra.mxu0 0.0
  %1271 = vmatpush.msra.mxu0 0.0
  %1272 = vmatpush.msra.mxu0 0.0
  %1273 = vmatpush.msra.mxu0 0.0
  %1274 = vmatpush.msra.mxu0 0.0
  %1275 = vmatpush.msra.mxu0 0.0
  %1276 = vmatpush.msra.mxu0 0.0
  %1277 = vmatpush.msra.mxu0 0.0
  %1278 = vmatpush.msra.mxu0 0.0
  %1279 = vmatpush.msra.mxu0 0.0
  %1280 = vmatpush.msra.mxu0 %v1267
  %1281 = vmatpush.msra.mxu0 %v1266
  %1282 = vmatpush.msra.mxu0 %v1265
  %1283 = vmatpush.msra.mxu0 %v1264
  %1284 = vmatmul.f32.gmra.mxu0 %v1242
  %v1285 = vpop.f32.mrf.mxu0
  %v1286 = vadd.f32 0.0, %v1285
  %1287 = vdwg.mxu0
  %v1288 = vld [vmem:[%s9] sm:$0xff]
  %v1289 = vld [vmem:[%s9 + $0x8] sm:$0xff]
  %v1290 = vld [vmem:[%s9 + $0x10] sm:$0xff]
  %v1291 = vld [vmem:[%s9 + $0x18] sm:$0xff]
  %1292 = vmatpush.msra.mxu0 0.0
  %1293 = vmatpush.msra.mxu0 0.0
  %1294 = vmatpush.msra.mxu0 0.0
  %1295 = vmatpush.msra.mxu0 0.0
  %1296 = vmatpush.msra.mxu0 0.0
  %1297 = vmatpush.msra.mxu0 0.0
  %1298 = vmatpush.msra.mxu0 0.0
  %1299 = vmatpush.msra.mxu0 0.0
  %1300 = vmatpush.msra.mxu0 0.0
  %1301 = vmatpush.msra.mxu0 0.0
  %1302 = vmatpush.msra.mxu0 0.0
  %1303 = vmatpush.msra.mxu0 0.0
  %1304 = vmatpush.msra.mxu0 %v1291
  %1305 = vmatpush.msra.mxu0 %v1290
  %1306 = vmatpush.msra.mxu0 %v1289
  %1307 = vmatpush.msra.mxu0 %v1288
  %1308 = vmatmul.f32.gmra.mxu0 %v1242
  %v1309 = vpop.f32.mrf.mxu0
  %v1310 = vadd.f32 %v329, %v1309
  %1311 = vdwg.mxu0
  %s1312 = scalar_lea.vmem [#allocation2], 56
  %v1313 = vld [vmem:[%s1312] sm:$0xff]
  %v1314 = vadd.f32 %v1313, %v1262
  %v1315 = vxor.u32 %v1314, 2147483648
  %v1316 = vmul.f32 %v1315, 1.442695
  %v1317 = vpow.pop %v1316
  %v1318 = vadd.f32 %v1317, 1.0
  %v1319 = vrcp.pop %v1318
  %v1320 = vmul.f32 %v1318, %v1319
  %v1321 = vsub.f32 1.0, %v1320
  %v1322 = vmul.f32 %v1319, %v1321
  %v1323 = vadd.f32 %v1319, %v1322
  %vm1324 = vweird.f32 %v1318
  %vm1325 = vweird.f32 %v1319
  %vm1326 = vmor %vm1324, %vm1325
  %v1327 = vsel %vm1326, %v1319, %v1323
  %v1328 = vand.u32 2147483647, %v1318
  %vm1329 = vcmp.eq.f32.partialorder %v1328, 8.507059e+37
  %v1330 = vand.u32 %v1318, 2147483648
  %v1331 = vor.u32 1.1754944e-38, %v1330
  %v1332 = vsel %vm1329, %v1331, %v1327
  %v1333 = vmul.f32 1.0, %v1332
  %s1334 = scalar_lea.vmem [#allocation3], 56
  %v1335 = vld [vmem:[%s1334] sm:$0xff]
  %v1336 = vadd.f32 %v1335, %v1286
  %v1337 = vxor.u32 %v1336, 2147483648
  %v1338 = vmul.f32 %v1337, 1.442695
  %v1339 = vpow.pop %v1338
  %v1340 = vadd.f32 %v1339, 1.0
  %v1341 = vrcp.pop %v1340
  %v1342 = vmul.f32 %v1340, %v1341
  %v1343 = vsub.f32 1.0, %v1342
  %v1344 = vmul.f32 %v1341, %v1343
  %v1345 = vadd.f32 %v1341, %v1344
  %vm1346 = vweird.f32 %v1340
  %vm1347 = vweird.f32 %v1341
  %vm1348 = vmor %vm1346, %vm1347
  %v1349 = vsel %vm1348, %v1341, %v1345
  %v1350 = vand.u32 2147483647, %v1340
  %vm1351 = vcmp.eq.f32.partialorder %v1350, 8.507059e+37
  %v1352 = vand.u32 %v1340, 2147483648
  %v1353 = vor.u32 1.1754944e-38, %v1352
  %v1354 = vsel %vm1351, %v1353, %v1349
  %v1355 = vmul.f32 1.0, %v1354
  %s1356 = scalar_lea.vmem [#allocation4], 56
  %v1357 = vld [vmem:[%s1356] sm:$0xff]
  %v1358 = vmul.f32 %v1333, %v1310
  %v1359 = vadd.f32 %v1357, %v1358
  %v1360 = vtanh.pop %v1359
  %v1361 = vsub.f32 1.0, %v1355
  %v1362 = vmul.f32 %v1361, %v1360
  %v1363 = vmul.f32 %v1355, %v1234
  %v1364 = vadd.f32 %v1362, %v1363
  %s1365 = scalar_lea.vmem [#allocation5], 56
  %1366 = vst.msk [vmem:[%s1365] sm:$0xff] %vm139, %v1364
  %v1367 = vld [vmem:[#allocation5] sm:$0xff]
  %v1368 = vld [vmem:[#allocation5 + $0x8] sm:$0xff]
  %v1369 = vld [vmem:[#allocation5 + $0x10] sm:$0xff]
  %v1370 = vld [vmem:[#allocation5 + $0x18] sm:$0xff]
  %v1371 = vld [vmem:[#allocation5 + $0x20] sm:$0xff]
  %v1372 = vld [vmem:[#allocation5 + $0x28] sm:$0xff]
  %v1373 = vld [vmem:[#allocation5 + $0x30] sm:$0xff]
  %v1374 = vld [vmem:[#allocation5 + $0x38] sm:$0xff]
  %s1375 = scalar_lea.vmem %s4, 32
  %v1376 = vld [vmem:[%s1375] sm:$0xff]
  %v1377 = vld [vmem:[%s1375 + $0x8] sm:$0xff]
  %v1378 = vld [vmem:[%s1375 + $0x10] sm:$0xff]
  %v1379 = vld [vmem:[%s1375 + $0x18] sm:$0xff]
  %s1380 = scalar_lea.vmem %s10, 1
  %v1381 = vld [vmem:[%s1380] sm:$0x1]
  %v1383 = vperm.slane %v1381, 0
  %v1386 = vsel %vm139, %v1367, 0
  %v1389 = vsel %vm139, %v1368, 0
  %v1392 = vsel %vm139, %v1369, 0
  %v1395 = vsel %vm139, %v1370, 0
  %v1398 = vsel %vm139, %v1371, 0
  %v1401 = vsel %vm139, %v1372, 0
  %v1404 = vsel %vm139, %v1373, 0
  %v1407 = vsel %vm139, %v1374, 0
  %1409 = vmatpush.msra.mxu0 0.0
  %1410 = vmatpush.msra.mxu0 0.0
  %1411 = vmatpush.msra.mxu0 0.0
  %1412 = vmatpush.msra.mxu0 0.0
  %1413 = vmatpush.msra.mxu0 0.0
  %1414 = vmatpush.msra.mxu0 0.0
  %1415 = vmatpush.msra.mxu0 0.0
  %1416 = vmatpush.msra.mxu0 0.0
  %1417 = vmatpush.msra.mxu0 0.0
  %1418 = vmatpush.msra.mxu0 0.0
  %1419 = vmatpush.msra.mxu0 0.0
  %1420 = vmatpush.msra.mxu0 0.0
  %1421 = vmatpush.msra.mxu0 %v1379
  %1422 = vmatpush.msra.mxu0 %v1378
  %1423 = vmatpush.msra.mxu0 %v1377
  %1424 = vmatpush.msra.mxu0 %v1376
  %1425 = vmatmul.f32.gmra.mxu0 %v1386
  %v1426 = vpop.f32.mrf.mxu0
  %v1427 = vadd.f32 %v1383, %v1426
  %1428 = vmatmul.f32.gmra.mxu0 %v1389
  %v1429 = vpop.f32.mrf.mxu0
  %v1430 = vadd.f32 %v1383, %v1429
  %1431 = vmatmul.f32.gmra.mxu0 %v1392
  %v1432 = vpop.f32.mrf.mxu0
  %v1433 = vadd.f32 %v1383, %v1432
  %1434 = vmatmul.f32.gmra.mxu0 %v1395
  %v1435 = vpop.f32.mrf.mxu0
  %v1436 = vadd.f32 %v1383, %v1435
  %1437 = vmatmul.f32.gmra.mxu0 %v1398
  %v1438 = vpop.f32.mrf.mxu0
  %v1439 = vadd.f32 %v1383, %v1438
  %1440 = vmatmul.f32.gmra.mxu0 %v1401
  %v1441 = vpop.f32.mrf.mxu0
  %v1442 = vadd.f32 %v1383, %v1441
  %1443 = vmatmul.f32.gmra.mxu0 %v1404
  %v1444 = vpop.f32.mrf.mxu0
  %v1445 = vadd.f32 %v1383, %v1444
  %1446 = vmatmul.f32.gmra.mxu0 %v1407
  %v1447 = vpop.f32.mrf.mxu0
  %v1448 = vadd.f32 %v1383, %v1447
  %1449 = vdwg.mxu0
  %1450 = vst.msk [vmem:[#allocation2] sm:$0xff] %vm139, %v1427
  %1451 = vst.msk [vmem:[#allocation2 + $0x8] sm:$0xff] %vm139, %v1430
  %1452 = vst.msk [vmem:[#allocation2 + $0x10] sm:$0xff] %vm139, %v1433
  %1453 = vst.msk [vmem:[#allocation2 + $0x18] sm:$0xff] %vm139, %v1436
  %1454 = vst.msk [vmem:[#allocation2 + $0x20] sm:$0xff] %vm139, %v1439
  %1455 = vst.msk [vmem:[#allocation2 + $0x28] sm:$0xff] %vm139, %v1442
  %1456 = vst.msk [vmem:[#allocation2 + $0x30] sm:$0xff] %vm139, %v1445
  %1457 = vst.msk [vmem:[#allocation2 + $0x38] sm:$0xff] %vm139, %v1448
  %s1458 = scalar_lea.vmem %s5, 32
  %v1459 = vld [vmem:[%s1458] sm:$0xff]
  %v1460 = vld [vmem:[%s1458 + $0x8] sm:$0xff]
  %v1461 = vld [vmem:[%s1458 + $0x10] sm:$0xff]
  %v1462 = vld [vmem:[%s1458 + $0x18] sm:$0xff]
  %s1463 = scalar_lea.vmem %s11, 1
  %v1464 = vld [vmem:[%s1463] sm:$0x1]
  %v1466 = vperm.slane %v1464, 0
  %1468 = vmatpush.msra.mxu0 0.0
  %1469 = vmatpush.msra.mxu0 0.0
  %1470 = vmatpush.msra.mxu0 0.0
  %1471 = vmatpush.msra.mxu0 0.0
  %1472 = vmatpush.msra.mxu0 0.0
  %1473 = vmatpush.msra.mxu0 0.0
  %1474 = vmatpush.msra.mxu0 0.0
  %1475 = vmatpush.msra.mxu0 0.0
  %1476 = vmatpush.msra.mxu0 0.0
  %1477 = vmatpush.msra.mxu0 0.0
  %1478 = vmatpush.msra.mxu0 0.0
  %1479 = vmatpush.msra.mxu0 0.0
  %1480 = vmatpush.msra.mxu0 %v1462
  %1481 = vmatpush.msra.mxu0 %v1461
  %1482 = vmatpush.msra.mxu0 %v1460
  %1483 = vmatpush.msra.mxu0 %v1459
  %1484 = vmatmul.f32.gmra.mxu0 %v1386
  %v1485 = vpop.f32.mrf.mxu0
  %v1486 = vadd.f32 %v1466, %v1485
  %1487 = vmatmul.f32.gmra.mxu0 %v1389
  %v1488 = vpop.f32.mrf.mxu0
  %v1489 = vadd.f32 %v1466, %v1488
  %1490 = vmatmul.f32.gmra.mxu0 %v1392
  %v1491 = vpop.f32.mrf.mxu0
  %v1492 = vadd.f32 %v1466, %v1491
  %1493 = vmatmul.f32.gmra.mxu0 %v1395
  %v1494 = vpop.f32.mrf.mxu0
  %v1495 = vadd.f32 %v1466, %v1494
  %1496 = vmatmul.f32.gmra.mxu0 %v1398
  %v1497 = vpop.f32.mrf.mxu0
  %v1498 = vadd.f32 %v1466, %v1497
  %1499 = vmatmul.f32.gmra.mxu0 %v1401
  %v1500 = vpop.f32.mrf.mxu0
  %v1501 = vadd.f32 %v1466, %v1500
  %1502 = vmatmul.f32.gmra.mxu0 %v1404
  %v1503 = vpop.f32.mrf.mxu0
  %v1504 = vadd.f32 %v1466, %v1503
  %1505 = vmatmul.f32.gmra.mxu0 %v1407
  %v1506 = vpop.f32.mrf.mxu0
  %v1507 = vadd.f32 %v1466, %v1506
  %1508 = vdwg.mxu0
  %1509 = vst.msk [vmem:[#allocation3] sm:$0xff] %vm139, %v1486
  %1510 = vst.msk [vmem:[#allocation3 + $0x8] sm:$0xff] %vm139, %v1489
  %1511 = vst.msk [vmem:[#allocation3 + $0x10] sm:$0xff] %vm139, %v1492
  %1512 = vst.msk [vmem:[#allocation3 + $0x18] sm:$0xff] %vm139, %v1495
  %1513 = vst.msk [vmem:[#allocation3 + $0x20] sm:$0xff] %vm139, %v1498
  %1514 = vst.msk [vmem:[#allocation3 + $0x28] sm:$0xff] %vm139, %v1501
  %1515 = vst.msk [vmem:[#allocation3 + $0x30] sm:$0xff] %vm139, %v1504
  %1516 = vst.msk [vmem:[#allocation3 + $0x38] sm:$0xff] %vm139, %v1507
  %s1517 = scalar_lea.vmem %s6, 32
  %v1518 = vld [vmem:[%s1517] sm:$0xff]
  %v1519 = vld [vmem:[%s1517 + $0x8] sm:$0xff]
  %v1520 = vld [vmem:[%s1517 + $0x10] sm:$0xff]
  %v1521 = vld [vmem:[%s1517 + $0x18] sm:$0xff]
  %s1522 = scalar_lea.vmem %s12, 1
  %v1523 = vld [vmem:[%s1522] sm:$0x1]
  %v1525 = vperm.slane %v1523, 0
  %1527 = vmatpush.msra.mxu0 0.0
  %1528 = vmatpush.msra.mxu0 0.0
  %1529 = vmatpush.msra.mxu0 0.0
  %1530 = vmatpush.msra.mxu0 0.0
  %1531 = vmatpush.msra.mxu0 0.0
  %1532 = vmatpush.msra.mxu0 0.0
  %1533 = vmatpush.msra.mxu0 0.0
  %1534 = vmatpush.msra.mxu0 0.0
  %1535 = vmatpush.msra.mxu0 0.0
  %1536 = vmatpush.msra.mxu0 0.0
  %1537 = vmatpush.msra.mxu0 0.0
  %1538 = vmatpush.msra.mxu0 0.0
  %1539 = vmatpush.msra.mxu0 %v1521
  %1540 = vmatpush.msra.mxu0 %v1520
  %1541 = vmatpush.msra.mxu0 %v1519
  %1542 = vmatpush.msra.mxu0 %v1518
  %1543 = vmatmul.f32.gmra.mxu0 %v1386
  %v1544 = vpop.f32.mrf.mxu0
  %v1545 = vadd.f32 %v1525, %v1544
  %1546 = vmatmul.f32.gmra.mxu0 %v1389
  %v1547 = vpop.f32.mrf.mxu0
  %v1548 = vadd.f32 %v1525, %v1547
  %1549 = vmatmul.f32.gmra.mxu0 %v1392
  %v1550 = vpop.f32.mrf.mxu0
  %v1551 = vadd.f32 %v1525, %v1550
  %1552 = vmatmul.f32.gmra.mxu0 %v1395
  %v1553 = vpop.f32.mrf.mxu0
  %v1554 = vadd.f32 %v1525, %v1553
  %1555 = vmatmul.f32.gmra.mxu0 %v1398
  %v1556 = vpop.f32.mrf.mxu0
  %v1557 = vadd.f32 %v1525, %v1556
  %1558 = vmatmul.f32.gmra.mxu0 %v1401
  %v1559 = vpop.f32.mrf.mxu0
  %v1560 = vadd.f32 %v1525, %v1559
  %1561 = vmatmul.f32.gmra.mxu0 %v1404
  %v1562 = vpop.f32.mrf.mxu0
  %v1563 = vadd.f32 %v1525, %v1562
  %1564 = vmatmul.f32.gmra.mxu0 %v1407
  %v1565 = vpop.f32.mrf.mxu0
  %v1566 = vadd.f32 %v1525, %v1565
  %1567 = vdwg.mxu0
  %1568 = vst.msk [vmem:[#allocation4] sm:$0xff] %vm139, %v1545
  %1569 = vst.msk [vmem:[#allocation4 + $0x8] sm:$0xff] %vm139, %v1548
  %1570 = vst.msk [vmem:[#allocation4 + $0x10] sm:$0xff] %vm139, %v1551
  %1571 = vst.msk [vmem:[#allocation4 + $0x18] sm:$0xff] %vm139, %v1554
  %1572 = vst.msk [vmem:[#allocation4 + $0x20] sm:$0xff] %vm139, %v1557
  %1573 = vst.msk [vmem:[#allocation4 + $0x28] sm:$0xff] %vm139, %v1560
  %1574 = vst.msk [vmem:[#allocation4 + $0x30] sm:$0xff] %vm139, %v1563
  %1575 = vst.msk [vmem:[#allocation4 + $0x38] sm:$0xff] %vm139, %v1566
  %s1576 = scalar_lea.vmem %s13, 1
  %v1577 = vld [vmem:[%s1576] sm:$0x1]
  %v1579 = vperm.slane %v1577, 0
  %s1581 = scalar_lea.vmem %s7, 32
  %v1582 = vld [vmem:[%s1581] sm:$0xff]
  %v1583 = vld [vmem:[%s1581 + $0x8] sm:$0xff]
  %v1584 = vld [vmem:[%s1581 + $0x10] sm:$0xff]
  %v1585 = vld [vmem:[%s1581 + $0x18] sm:$0xff]
  %1586 = vmatpush.msra.mxu0 0.0
  %1587 = vmatpush.msra.mxu0 0.0
  %1588 = vmatpush.msra.mxu0 0.0
  %1589 = vmatpush.msra.mxu0 0.0
  %1590 = vmatpush.msra.mxu0 0.0
  %1591 = vmatpush.msra.mxu0 0.0
  %1592 = vmatpush.msra.mxu0 0.0
  %1593 = vmatpush.msra.mxu0 0.0
  %1594 = vmatpush.msra.mxu0 0.0
  %1595 = vmatpush.msra.mxu0 0.0
  %1596 = vmatpush.msra.mxu0 0.0
  %1597 = vmatpush.msra.mxu0 0.0
  %1598 = vmatpush.msra.mxu0 %v1585
  %1599 = vmatpush.msra.mxu0 %v1584
  %1600 = vmatpush.msra.mxu0 %v1583
  %1601 = vmatpush.msra.mxu0 %v1582
  %1602 = vmatmul.f32.gmra.mxu0 %v336
  %v1603 = vpop.f32.mrf.mxu0
  %v1604 = vadd.f32 0.0, %v1603
  %1605 = vdwg.mxu0
  %s1606 = scalar_lea.vmem %s8, 32
  %v1607 = vld [vmem:[%s1606] sm:$0xff]
  %v1608 = vld [vmem:[%s1606 + $0x8] sm:$0xff]
  %v1609 = vld [vmem:[%s1606 + $0x10] sm:$0xff]
  %v1610 = vld [vmem:[%s1606 + $0x18] sm:$0xff]
  %1611 = vmatpush.msra.mxu0 0.0
  %1612 = vmatpush.msra.mxu0 0.0
  %1613 = vmatpush.msra.mxu0 0.0
  %1614 = vmatpush.msra.mxu0 0.0
  %1615 = vmatpush.msra.mxu0 0.0
  %1616 = vmatpush.msra.mxu0 0.0
  %1617 = vmatpush.msra.mxu0 0.0
  %1618 = vmatpush.msra.mxu0 0.0
  %1619 = vmatpush.msra.mxu0 0.0
  %1620 = vmatpush.msra.mxu0 0.0
  %1621 = vmatpush.msra.mxu0 0.0
  %1622 = vmatpush.msra.mxu0 0.0
  %1623 = vmatpush.msra.mxu0 %v1610
  %1624 = vmatpush.msra.mxu0 %v1609
  %1625 = vmatpush.msra.mxu0 %v1608
  %1626 = vmatpush.msra.mxu0 %v1607
  %1627 = vmatmul.f32.gmra.mxu0 %v336
  %v1628 = vpop.f32.mrf.mxu0
  %v1629 = vadd.f32 0.0, %v1628
  %1630 = vdwg.mxu0
  %s1631 = scalar_lea.vmem %s9, 32
  %v1632 = vld [vmem:[%s1631] sm:$0xff]
  %v1633 = vld [vmem:[%s1631 + $0x8] sm:$0xff]
  %v1634 = vld [vmem:[%s1631 + $0x10] sm:$0xff]
  %v1635 = vld [vmem:[%s1631 + $0x18] sm:$0xff]
  %1636 = vmatpush.msra.mxu0 0.0
  %1637 = vmatpush.msra.mxu0 0.0
  %1638 = vmatpush.msra.mxu0 0.0
  %1639 = vmatpush.msra.mxu0 0.0
  %1640 = vmatpush.msra.mxu0 0.0
  %1641 = vmatpush.msra.mxu0 0.0
  %1642 = vmatpush.msra.mxu0 0.0
  %1643 = vmatpush.msra.mxu0 0.0
  %1644 = vmatpush.msra.mxu0 0.0
  %1645 = vmatpush.msra.mxu0 0.0
  %1646 = vmatpush.msra.mxu0 0.0
  %1647 = vmatpush.msra.mxu0 0.0
  %1648 = vmatpush.msra.mxu0 %v1635
  %1649 = vmatpush.msra.mxu0 %v1634
  %1650 = vmatpush.msra.mxu0 %v1633
  %1651 = vmatpush.msra.mxu0 %v1632
  %1652 = vmatmul.f32.gmra.mxu0 %v336
  %v1653 = vpop.f32.mrf.mxu0
  %v1654 = vadd.f32 %v1579, %v1653
  %1655 = vdwg.mxu0
  %v1656 = vld [vmem:[#allocation2] sm:$0xff]
  %v1657 = vadd.f32 %v1656, %v1604
  %v1658 = vxor.u32 %v1657, 2147483648
  %v1659 = vmul.f32 %v1658, 1.442695
  %v1660 = vpow.pop %v1659
  %v1661 = vadd.f32 %v1660, 1.0
  %v1662 = vrcp.pop %v1661
  %v1663 = vmul.f32 %v1661, %v1662
  %v1664 = vsub.f32 1.0, %v1663
  %v1665 = vmul.f32 %v1662, %v1664
  %v1666 = vadd.f32 %v1662, %v1665
  %vm1667 = vweird.f32 %v1661
  %vm1668 = vweird.f32 %v1662
  %vm1669 = vmor %vm1667, %vm1668
  %v1670 = vsel %vm1669, %v1662, %v1666
  %v1671 = vand.u32 2147483647, %v1661
  %vm1672 = vcmp.eq.f32.partialorder %v1671, 8.507059e+37
  %v1673 = vand.u32 %v1661, 2147483648
  %v1674 = vor.u32 1.1754944e-38, %v1673
  %v1675 = vsel %vm1672, %v1674, %v1670
  %v1676 = vmul.f32 1.0, %v1675
  %v1677 = vld [vmem:[#allocation3] sm:$0xff]
  %v1678 = vadd.f32 %v1677, %v1629
  %v1679 = vxor.u32 %v1678, 2147483648
  %v1680 = vmul.f32 %v1679, 1.442695
  %v1681 = vpow.pop %v1680
  %v1682 = vadd.f32 %v1681, 1.0
  %v1683 = vrcp.pop %v1682
  %v1684 = vmul.f32 %v1682, %v1683
  %v1685 = vsub.f32 1.0, %v1684
  %v1686 = vmul.f32 %v1683, %v1685
  %v1687 = vadd.f32 %v1683, %v1686
  %vm1688 = vweird.f32 %v1682
  %vm1689 = vweird.f32 %v1683
  %vm1690 = vmor %vm1688, %vm1689
  %v1691 = vsel %vm1690, %v1683, %v1687
  %v1692 = vand.u32 2147483647, %v1682
  %vm1693 = vcmp.eq.f32.partialorder %v1692, 8.507059e+37
  %v1694 = vand.u32 %v1682, 2147483648
  %v1695 = vor.u32 1.1754944e-38, %v1694
  %v1696 = vsel %vm1693, %v1695, %v1691
  %v1697 = vmul.f32 1.0, %v1696
  %v1698 = vld [vmem:[#allocation4] sm:$0xff]
  %v1699 = vmul.f32 %v1676, %v1654
  %v1700 = vadd.f32 %v1698, %v1699
  %v1701 = vtanh.pop %v1700
  %v1702 = vsub.f32 1.0, %v1697
  %v1703 = vmul.f32 %v1702, %v1701
  %v1704 = vmul.f32 %v1697, 0.0
  %v1705 = vadd.f32 %v1703, %v1704
  %v1707 = vsel %vm139, %v1705, 0
  %1709 = vmatpush.msra.mxu0 0.0
  %1710 = vmatpush.msra.mxu0 0.0
  %1711 = vmatpush.msra.mxu0 0.0
  %1712 = vmatpush.msra.mxu0 0.0
  %1713 = vmatpush.msra.mxu0 0.0
  %1714 = vmatpush.msra.mxu0 0.0
  %1715 = vmatpush.msra.mxu0 0.0
  %1716 = vmatpush.msra.mxu0 0.0
  %1717 = vmatpush.msra.mxu0 0.0
  %1718 = vmatpush.msra.mxu0 0.0
  %1719 = vmatpush.msra.mxu0 0.0
  %1720 = vmatpush.msra.mxu0 0.0
  %1721 = vmatpush.msra.mxu0 %v1585
  %1722 = vmatpush.msra.mxu0 %v1584
  %1723 = vmatpush.msra.mxu0 %v1583
  %1724 = vmatpush.msra.mxu0 %v1582
  %1725 = vmatmul.f32.gmra.mxu0 %v1707
  %v1726 = vpop.f32.mrf.mxu0
  %v1727 = vadd.f32 0.0, %v1726
  %1728 = vdwg.mxu0
  %1729 = vmatpush.msra.mxu0 0.0
  %1730 = vmatpush.msra.mxu0 0.0
  %1731 = vmatpush.msra.mxu0 0.0
  %1732 = vmatpush.msra.mxu0 0.0
  %1733 = vmatpush.msra.mxu0 0.0
  %1734 = vmatpush.msra.mxu0 0.0
  %1735 = vmatpush.msra.mxu0 0.0
  %1736 = vmatpush.msra.mxu0 0.0
  %1737 = vmatpush.msra.mxu0 0.0
  %1738 = vmatpush.msra.mxu0 0.0
  %1739 = vmatpush.msra.mxu0 0.0
  %1740 = vmatpush.msra.mxu0 0.0
  %1741 = vmatpush.msra.mxu0 %v1610
  %1742 = vmatpush.msra.mxu0 %v1609
  %1743 = vmatpush.msra.mxu0 %v1608
  %1744 = vmatpush.msra.mxu0 %v1607
  %1745 = vmatmul.f32.gmra.mxu0 %v1707
  %v1746 = vpop.f32.mrf.mxu0
  %v1747 = vadd.f32 0.0, %v1746
  %1748 = vdwg.mxu0
  %1749 = vmatpush.msra.mxu0 0.0
  %1750 = vmatpush.msra.mxu0 0.0
  %1751 = vmatpush.msra.mxu0 0.0
  %1752 = vmatpush.msra.mxu0 0.0
  %1753 = vmatpush.msra.mxu0 0.0
  %1754 = vmatpush.msra.mxu0 0.0
  %1755 = vmatpush.msra.mxu0 0.0
  %1756 = vmatpush.msra.mxu0 0.0
  %1757 = vmatpush.msra.mxu0 0.0
  %1758 = vmatpush.msra.mxu0 0.0
  %1759 = vmatpush.msra.mxu0 0.0
  %1760 = vmatpush.msra.mxu0 0.0
  %1761 = vmatpush.msra.mxu0 %v1635
  %1762 = vmatpush.msra.mxu0 %v1634
  %1763 = vmatpush.msra.mxu0 %v1633
  %1764 = vmatpush.msra.mxu0 %v1632
  %1765 = vmatmul.f32.gmra.mxu0 %v1707
  %v1766 = vpop.f32.mrf.mxu0
  %v1767 = vadd.f32 %v1579, %v1766
  %1768 = vdwg.mxu0
  %v1769 = vld [vmem:[%s532] sm:$0xff]
  %v1770 = vadd.f32 %v1769, %v1727
  %v1771 = vxor.u32 %v1770, 2147483648
  %v1772 = vmul.f32 %v1771, 1.442695
  %v1773 = vpow.pop %v1772
  %v1774 = vadd.f32 %v1773, 1.0
  %v1775 = vrcp.pop %v1774
  %v1776 = vmul.f32 %v1774, %v1775
  %v1777 = vsub.f32 1.0, %v1776
  %v1778 = vmul.f32 %v1775, %v1777
  %v1779 = vadd.f32 %v1775, %v1778
  %vm1780 = vweird.f32 %v1774
  %vm1781 = vweird.f32 %v1775
  %vm1782 = vmor %vm1780, %vm1781
  %v1783 = vsel %vm1782, %v1775, %v1779
  %v1784 = vand.u32 2147483647, %v1774
  %vm1785 = vcmp.eq.f32.partialorder %v1784, 8.507059e+37
  %v1786 = vand.u32 %v1774, 2147483648
  %v1787 = vor.u32 1.1754944e-38, %v1786
  %v1788 = vsel %vm1785, %v1787, %v1783
  %v1789 = vmul.f32 1.0, %v1788
  %v1790 = vld [vmem:[%s554] sm:$0xff]
  %v1791 = vadd.f32 %v1790, %v1747
  %v1792 = vxor.u32 %v1791, 2147483648
  %v1793 = vmul.f32 %v1792, 1.442695
  %v1794 = vpow.pop %v1793
  %v1795 = vadd.f32 %v1794, 1.0
  %v1796 = vrcp.pop %v1795
  %v1797 = vmul.f32 %v1795, %v1796
  %v1798 = vsub.f32 1.0, %v1797
  %v1799 = vmul.f32 %v1796, %v1798
  %v1800 = vadd.f32 %v1796, %v1799
  %vm1801 = vweird.f32 %v1795
  %vm1802 = vweird.f32 %v1796
  %vm1803 = vmor %vm1801, %vm1802
  %v1804 = vsel %vm1803, %v1796, %v1800
  %v1805 = vand.u32 2147483647, %v1795
  %vm1806 = vcmp.eq.f32.partialorder %v1805, 8.507059e+37
  %v1807 = vand.u32 %v1795, 2147483648
  %v1808 = vor.u32 1.1754944e-38, %v1807
  %v1809 = vsel %vm1806, %v1808, %v1804
  %v1810 = vmul.f32 1.0, %v1809
  %v1811 = vld [vmem:[%s576] sm:$0xff]
  %v1812 = vmul.f32 %v1789, %v1767
  %v1813 = vadd.f32 %v1811, %v1812
  %v1814 = vtanh.pop %v1813
  %v1815 = vsub.f32 1.0, %v1810
  %v1816 = vmul.f32 %v1815, %v1814
  %v1817 = vmul.f32 %v1810, %v1705
  %v1818 = vadd.f32 %v1816, %v1817
  %v1820 = vsel %vm139, %v1818, 0
  %1822 = vmatpush.msra.mxu0 0.0
  %1823 = vmatpush.msra.mxu0 0.0
  %1824 = vmatpush.msra.mxu0 0.0
  %1825 = vmatpush.msra.mxu0 0.0
  %1826 = vmatpush.msra.mxu0 0.0
  %1827 = vmatpush.msra.mxu0 0.0
  %1828 = vmatpush.msra.mxu0 0.0
  %1829 = vmatpush.msra.mxu0 0.0
  %1830 = vmatpush.msra.mxu0 0.0
  %1831 = vmatpush.msra.mxu0 0.0
  %1832 = vmatpush.msra.mxu0 0.0
  %1833 = vmatpush.msra.mxu0 0.0
  %1834 = vmatpush.msra.mxu0 %v1585
  %1835 = vmatpush.msra.mxu0 %v1584
  %1836 = vmatpush.msra.mxu0 %v1583
  %1837 = vmatpush.msra.mxu0 %v1582
  %1838 = vmatmul.f32.gmra.mxu0 %v1820
  %v1839 = vpop.f32.mrf.mxu0
  %v1840 = vadd.f32 0.0, %v1839
  %1841 = vdwg.mxu0
  %1842 = vmatpush.msra.mxu0 0.0
  %1843 = vmatpush.msra.mxu0 0.0
  %1844 = vmatpush.msra.mxu0 0.0
  %1845 = vmatpush.msra.mxu0 0.0
  %1846 = vmatpush.msra.mxu0 0.0
  %1847 = vmatpush.msra.mxu0 0.0
  %1848 = vmatpush.msra.mxu0 0.0
  %1849 = vmatpush.msra.mxu0 0.0
  %1850 = vmatpush.msra.mxu0 0.0
  %1851 = vmatpush.msra.mxu0 0.0
  %1852 = vmatpush.msra.mxu0 0.0
  %1853 = vmatpush.msra.mxu0 0.0
  %1854 = vmatpush.msra.mxu0 %v1610
  %1855 = vmatpush.msra.mxu0 %v1609
  %1856 = vmatpush.msra.mxu0 %v1608
  %1857 = vmatpush.msra.mxu0 %v1607
  %1858 = vmatmul.f32.gmra.mxu0 %v1820
  %v1859 = vpop.f32.mrf.mxu0
  %v1860 = vadd.f32 0.0, %v1859
  %1861 = vdwg.mxu0
  %1862 = vmatpush.msra.mxu0 0.0
  %1863 = vmatpush.msra.mxu0 0.0
  %1864 = vmatpush.msra.mxu0 0.0
  %1865 = vmatpush.msra.mxu0 0.0
  %1866 = vmatpush.msra.mxu0 0.0
  %1867 = vmatpush.msra.mxu0 0.0
  %1868 = vmatpush.msra.mxu0 0.0
  %1869 = vmatpush.msra.mxu0 0.0
  %1870 = vmatpush.msra.mxu0 0.0
  %1871 = vmatpush.msra.mxu0 0.0
  %1872 = vmatpush.msra.mxu0 0.0
  %1873 = vmatpush.msra.mxu0 0.0
  %1874 = vmatpush.msra.mxu0 %v1635
  %1875 = vmatpush.msra.mxu0 %v1634
  %1876 = vmatpush.msra.mxu0 %v1633
  %1877 = vmatpush.msra.mxu0 %v1632
  %1878 = vmatmul.f32.gmra.mxu0 %v1820
  %v1879 = vpop.f32.mrf.mxu0
  %v1880 = vadd.f32 %v1579, %v1879
  %1881 = vdwg.mxu0
  %v1882 = vld [vmem:[%s662] sm:$0xff]
  %v1883 = vadd.f32 %v1882, %v1840
  %v1884 = vxor.u32 %v1883, 2147483648
  %v1885 = vmul.f32 %v1884, 1.442695
  %v1886 = vpow.pop %v1885
  %v1887 = vadd.f32 %v1886, 1.0
  %v1888 = vrcp.pop %v1887
  %v1889 = vmul.f32 %v1887, %v1888
  %v1890 = vsub.f32 1.0, %v1889
  %v1891 = vmul.f32 %v1888, %v1890
  %v1892 = vadd.f32 %v1888, %v1891
  %vm1893 = vweird.f32 %v1887
  %vm1894 = vweird.f32 %v1888
  %vm1895 = vmor %vm1893, %vm1894
  %v1896 = vsel %vm1895, %v1888, %v1892
  %v1897 = vand.u32 2147483647, %v1887
  %vm1898 = vcmp.eq.f32.partialorder %v1897, 8.507059e+37
  %v1899 = vand.u32 %v1887, 2147483648
  %v1900 = vor.u32 1.1754944e-38, %v1899
  %v1901 = vsel %vm1898, %v1900, %v1896
  %v1902 = vmul.f32 1.0, %v1901
  %v1903 = vld [vmem:[%s684] sm:$0xff]
  %v1904 = vadd.f32 %v1903, %v1860
  %v1905 = vxor.u32 %v1904, 2147483648
  %v1906 = vmul.f32 %v1905, 1.442695
  %v1907 = vpow.pop %v1906
  %v1908 = vadd.f32 %v1907, 1.0
  %v1909 = vrcp.pop %v1908
  %v1910 = vmul.f32 %v1908, %v1909
  %v1911 = vsub.f32 1.0, %v1910
  %v1912 = vmul.f32 %v1909, %v1911
  %v1913 = vadd.f32 %v1909, %v1912
  %vm1914 = vweird.f32 %v1908
  %vm1915 = vweird.f32 %v1909
  %vm1916 = vmor %vm1914, %vm1915
  %v1917 = vsel %vm1916, %v1909, %v1913
  %v1918 = vand.u32 2147483647, %v1908
  %vm1919 = vcmp.eq.f32.partialorder %v1918, 8.507059e+37
  %v1920 = vand.u32 %v1908, 2147483648
  %v1921 = vor.u32 1.1754944e-38, %v1920
  %v1922 = vsel %vm1919, %v1921, %v1917
  %v1923 = vmul.f32 1.0, %v1922
  %v1924 = vld [vmem:[%s706] sm:$0xff]
  %v1925 = vmul.f32 %v1902, %v1880
  %v1926 = vadd.f32 %v1924, %v1925
  %v1927 = vtanh.pop %v1926
  %v1928 = vsub.f32 1.0, %v1923
  %v1929 = vmul.f32 %v1928, %v1927
  %v1930 = vmul.f32 %v1923, %v1818
  %v1931 = vadd.f32 %v1929, %v1930
  %v1933 = vsel %vm139, %v1931, 0
  %1935 = vmatpush.msra.mxu0 0.0
  %1936 = vmatpush.msra.mxu0 0.0
  %1937 = vmatpush.msra.mxu0 0.0
  %1938 = vmatpush.msra.mxu0 0.0
  %1939 = vmatpush.msra.mxu0 0.0
  %1940 = vmatpush.msra.mxu0 0.0
  %1941 = vmatpush.msra.mxu0 0.0
  %1942 = vmatpush.msra.mxu0 0.0
  %1943 = vmatpush.msra.mxu0 0.0
  %1944 = vmatpush.msra.mxu0 0.0
  %1945 = vmatpush.msra.mxu0 0.0
  %1946 = vmatpush.msra.mxu0 0.0
  %1947 = vmatpush.msra.mxu0 %v1585
  %1948 = vmatpush.msra.mxu0 %v1584
  %1949 = vmatpush.msra.mxu0 %v1583
  %1950 = vmatpush.msra.mxu0 %v1582
  %1951 = vmatmul.f32.gmra.mxu0 %v1933
  %v1952 = vpop.f32.mrf.mxu0
  %v1953 = vadd.f32 0.0, %v1952
  %1954 = vdwg.mxu0
  %1955 = vmatpush.msra.mxu0 0.0
  %1956 = vmatpush.msra.mxu0 0.0
  %1957 = vmatpush.msra.mxu0 0.0
  %1958 = vmatpush.msra.mxu0 0.0
  %1959 = vmatpush.msra.mxu0 0.0
  %1960 = vmatpush.msra.mxu0 0.0
  %1961 = vmatpush.msra.mxu0 0.0
  %1962 = vmatpush.msra.mxu0 0.0
  %1963 = vmatpush.msra.mxu0 0.0
  %1964 = vmatpush.msra.mxu0 0.0
  %1965 = vmatpush.msra.mxu0 0.0
  %1966 = vmatpush.msra.mxu0 0.0
  %1967 = vmatpush.msra.mxu0 %v1610
  %1968 = vmatpush.msra.mxu0 %v1609
  %1969 = vmatpush.msra.mxu0 %v1608
  %1970 = vmatpush.msra.mxu0 %v1607
  %1971 = vmatmul.f32.gmra.mxu0 %v1933
  %v1972 = vpop.f32.mrf.mxu0
  %v1973 = vadd.f32 0.0, %v1972
  %1974 = vdwg.mxu0
  %1975 = vmatpush.msra.mxu0 0.0
  %1976 = vmatpush.msra.mxu0 0.0
  %1977 = vmatpush.msra.mxu0 0.0
  %1978 = vmatpush.msra.mxu0 0.0
  %1979 = vmatpush.msra.mxu0 0.0
  %1980 = vmatpush.msra.mxu0 0.0
  %1981 = vmatpush.msra.mxu0 0.0
  %1982 = vmatpush.msra.mxu0 0.0
  %1983 = vmatpush.msra.mxu0 0.0
  %1984 = vmatpush.msra.mxu0 0.0
  %1985 = vmatpush.msra.mxu0 0.0
  %1986 = vmatpush.msra.mxu0 0.0
  %1987 = vmatpush.msra.mxu0 %v1635
  %1988 = vmatpush.msra.mxu0 %v1634
  %1989 = vmatpush.msra.mxu0 %v1633
  %1990 = vmatpush.msra.mxu0 %v1632
  %1991 = vmatmul.f32.gmra.mxu0 %v1933
  %v1992 = vpop.f32.mrf.mxu0
  %v1993 = vadd.f32 %v1579, %v1992
  %1994 = vdwg.mxu0
  %v1995 = vld [vmem:[%s792] sm:$0xff]
  %v1996 = vadd.f32 %v1995, %v1953
  %v1997 = vxor.u32 %v1996, 2147483648
  %v1998 = vmul.f32 %v1997, 1.442695
  %v1999 = vpow.pop %v1998
  %v2000 = vadd.f32 %v1999, 1.0
  %v2001 = vrcp.pop %v2000
  %v2002 = vmul.f32 %v2000, %v2001
  %v2003 = vsub.f32 1.0, %v2002
  %v2004 = vmul.f32 %v2001, %v2003
  %v2005 = vadd.f32 %v2001, %v2004
  %vm2006 = vweird.f32 %v2000
  %vm2007 = vweird.f32 %v2001
  %vm2008 = vmor %vm2006, %vm2007
  %v2009 = vsel %vm2008, %v2001, %v2005
  %v2010 = vand.u32 2147483647, %v2000
  %vm2011 = vcmp.eq.f32.partialorder %v2010, 8.507059e+37
  %v2012 = vand.u32 %v2000, 2147483648
  %v2013 = vor.u32 1.1754944e-38, %v2012
  %v2014 = vsel %vm2011, %v2013, %v2009
  %v2015 = vmul.f32 1.0, %v2014
  %v2016 = vld [vmem:[%s814] sm:$0xff]
  %v2017 = vadd.f32 %v2016, %v1973
  %v2018 = vxor.u32 %v2017, 2147483648
  %v2019 = vmul.f32 %v2018, 1.442695
  %v2020 = vpow.pop %v2019
  %v2021 = vadd.f32 %v2020, 1.0
  %v2022 = vrcp.pop %v2021
  %v2023 = vmul.f32 %v2021, %v2022
  %v2024 = vsub.f32 1.0, %v2023
  %v2025 = vmul.f32 %v2022, %v2024
  %v2026 = vadd.f32 %v2022, %v2025
  %vm2027 = vweird.f32 %v2021
  %vm2028 = vweird.f32 %v2022
  %vm2029 = vmor %vm2027, %vm2028
  %v2030 = vsel %vm2029, %v2022, %v2026
  %v2031 = vand.u32 2147483647, %v2021
  %vm2032 = vcmp.eq.f32.partialorder %v2031, 8.507059e+37
  %v2033 = vand.u32 %v2021, 2147483648
  %v2034 = vor.u32 1.1754944e-38, %v2033
  %v2035 = vsel %vm2032, %v2034, %v2030
  %v2036 = vmul.f32 1.0, %v2035
  %v2037 = vld [vmem:[%s836] sm:$0xff]
  %v2038 = vmul.f32 %v2015, %v1993
  %v2039 = vadd.f32 %v2037, %v2038
  %v2040 = vtanh.pop %v2039
  %v2041 = vsub.f32 1.0, %v2036
  %v2042 = vmul.f32 %v2041, %v2040
  %v2043 = vmul.f32 %v2036, %v1931
  %v2044 = vadd.f32 %v2042, %v2043
  %v2046 = vsel %vm139, %v2044, 0
  %2048 = vmatpush.msra.mxu0 0.0
  %2049 = vmatpush.msra.mxu0 0.0
  %2050 = vmatpush.msra.mxu0 0.0
  %2051 = vmatpush.msra.mxu0 0.0
  %2052 = vmatpush.msra.mxu0 0.0
  %2053 = vmatpush.msra.mxu0 0.0
  %2054 = vmatpush.msra.mxu0 0.0
  %2055 = vmatpush.msra.mxu0 0.0
  %2056 = vmatpush.msra.mxu0 0.0
  %2057 = vmatpush.msra.mxu0 0.0
  %2058 = vmatpush.msra.mxu0 0.0
  %2059 = vmatpush.msra.mxu0 0.0
  %2060 = vmatpush.msra.mxu0 %v1585
  %2061 = vmatpush.msra.mxu0 %v1584
  %2062 = vmatpush.msra.mxu0 %v1583
  %2063 = vmatpush.msra.mxu0 %v1582
  %2064 = vmatmul.f32.gmra.mxu0 %v2046
  %v2065 = vpop.f32.mrf.mxu0
  %v2066 = vadd.f32 0.0, %v2065
  %2067 = vdwg.mxu0
  %2068 = vmatpush.msra.mxu0 0.0
  %2069 = vmatpush.msra.mxu0 0.0
  %2070 = vmatpush.msra.mxu0 0.0
  %2071 = vmatpush.msra.mxu0 0.0
  %2072 = vmatpush.msra.mxu0 0.0
  %2073 = vmatpush.msra.mxu0 0.0
  %2074 = vmatpush.msra.mxu0 0.0
  %2075 = vmatpush.msra.mxu0 0.0
  %2076 = vmatpush.msra.mxu0 0.0
  %2077 = vmatpush.msra.mxu0 0.0
  %2078 = vmatpush.msra.mxu0 0.0
  %2079 = vmatpush.msra.mxu0 0.0
  %2080 = vmatpush.msra.mxu0 %v1610
  %2081 = vmatpush.msra.mxu0 %v1609
  %2082 = vmatpush.msra.mxu0 %v1608
  %2083 = vmatpush.msra.mxu0 %v1607
  %2084 = vmatmul.f32.gmra.mxu0 %v2046
  %v2085 = vpop.f32.mrf.mxu0
  %v2086 = vadd.f32 0.0, %v2085
  %2087 = vdwg.mxu0
  %2088 = vmatpush.msra.mxu0 0.0
  %2089 = vmatpush.msra.mxu0 0.0
  %2090 = vmatpush.msra.mxu0 0.0
  %2091 = vmatpush.msra.mxu0 0.0
  %2092 = vmatpush.msra.mxu0 0.0
  %2093 = vmatpush.msra.mxu0 0.0
  %2094 = vmatpush.msra.mxu0 0.0
  %2095 = vmatpush.msra.mxu0 0.0
  %2096 = vmatpush.msra.mxu0 0.0
  %2097 = vmatpush.msra.mxu0 0.0
  %2098 = vmatpush.msra.mxu0 0.0
  %2099 = vmatpush.msra.mxu0 0.0
  %2100 = vmatpush.msra.mxu0 %v1635
  %2101 = vmatpush.msra.mxu0 %v1634
  %2102 = vmatpush.msra.mxu0 %v1633
  %2103 = vmatpush.msra.mxu0 %v1632
  %2104 = vmatmul.f32.gmra.mxu0 %v2046
  %v2105 = vpop.f32.mrf.mxu0
  %v2106 = vadd.f32 %v1579, %v2105
  %2107 = vdwg.mxu0
  %v2108 = vld [vmem:[%s922] sm:$0xff]
  %v2109 = vadd.f32 %v2108, %v2066
  %v2110 = vxor.u32 %v2109, 2147483648
  %v2111 = vmul.f32 %v2110, 1.442695
  %v2112 = vpow.pop %v2111
  %v2113 = vadd.f32 %v2112, 1.0
  %v2114 = vrcp.pop %v2113
  %v2115 = vmul.f32 %v2113, %v2114
  %v2116 = vsub.f32 1.0, %v2115
  %v2117 = vmul.f32 %v2114, %v2116
  %v2118 = vadd.f32 %v2114, %v2117
  %vm2119 = vweird.f32 %v2113
  %vm2120 = vweird.f32 %v2114
  %vm2121 = vmor %vm2119, %vm2120
  %v2122 = vsel %vm2121, %v2114, %v2118
  %v2123 = vand.u32 2147483647, %v2113
  %vm2124 = vcmp.eq.f32.partialorder %v2123, 8.507059e+37
  %v2125 = vand.u32 %v2113, 2147483648
  %v2126 = vor.u32 1.1754944e-38, %v2125
  %v2127 = vsel %vm2124, %v2126, %v2122
  %v2128 = vmul.f32 1.0, %v2127
  %v2129 = vld [vmem:[%s944] sm:$0xff]
  %v2130 = vadd.f32 %v2129, %v2086
  %v2131 = vxor.u32 %v2130, 2147483648
  %v2132 = vmul.f32 %v2131, 1.442695
  %v2133 = vpow.pop %v2132
  %v2134 = vadd.f32 %v2133, 1.0
  %v2135 = vrcp.pop %v2134
  %v2136 = vmul.f32 %v2134, %v2135
  %v2137 = vsub.f32 1.0, %v2136
  %v2138 = vmul.f32 %v2135, %v2137
  %v2139 = vadd.f32 %v2135, %v2138
  %vm2140 = vweird.f32 %v2134
  %vm2141 = vweird.f32 %v2135
  %vm2142 = vmor %vm2140, %vm2141
  %v2143 = vsel %vm2142, %v2135, %v2139
  %v2144 = vand.u32 2147483647, %v2134
  %vm2145 = vcmp.eq.f32.partialorder %v2144, 8.507059e+37
  %v2146 = vand.u32 %v2134, 2147483648
  %v2147 = vor.u32 1.1754944e-38, %v2146
  %v2148 = vsel %vm2145, %v2147, %v2143
  %v2149 = vmul.f32 1.0, %v2148
  %v2150 = vld [vmem:[%s966] sm:$0xff]
  %v2151 = vmul.f32 %v2128, %v2106
  %v2152 = vadd.f32 %v2150, %v2151
  %v2153 = vtanh.pop %v2152
  %v2154 = vsub.f32 1.0, %v2149
  %v2155 = vmul.f32 %v2154, %v2153
  %v2156 = vmul.f32 %v2149, %v2044
  %v2157 = vadd.f32 %v2155, %v2156
  %v2159 = vsel %vm139, %v2157, 0
  %2161 = vmatpush.msra.mxu0 0.0
  %2162 = vmatpush.msra.mxu0 0.0
  %2163 = vmatpush.msra.mxu0 0.0
  %2164 = vmatpush.msra.mxu0 0.0
  %2165 = vmatpush.msra.mxu0 0.0
  %2166 = vmatpush.msra.mxu0 0.0
  %2167 = vmatpush.msra.mxu0 0.0
  %2168 = vmatpush.msra.mxu0 0.0
  %2169 = vmatpush.msra.mxu0 0.0
  %2170 = vmatpush.msra.mxu0 0.0
  %2171 = vmatpush.msra.mxu0 0.0
  %2172 = vmatpush.msra.mxu0 0.0
  %2173 = vmatpush.msra.mxu0 %v1585
  %2174 = vmatpush.msra.mxu0 %v1584
  %2175 = vmatpush.msra.mxu0 %v1583
  %2176 = vmatpush.msra.mxu0 %v1582
  %2177 = vmatmul.f32.gmra.mxu0 %v2159
  %v2178 = vpop.f32.mrf.mxu0
  %v2179 = vadd.f32 0.0, %v2178
  %2180 = vdwg.mxu0
  %2181 = vmatpush.msra.mxu0 0.0
  %2182 = vmatpush.msra.mxu0 0.0
  %2183 = vmatpush.msra.mxu0 0.0
  %2184 = vmatpush.msra.mxu0 0.0
  %2185 = vmatpush.msra.mxu0 0.0
  %2186 = vmatpush.msra.mxu0 0.0
  %2187 = vmatpush.msra.mxu0 0.0
  %2188 = vmatpush.msra.mxu0 0.0
  %2189 = vmatpush.msra.mxu0 0.0
  %2190 = vmatpush.msra.mxu0 0.0
  %2191 = vmatpush.msra.mxu0 0.0
  %2192 = vmatpush.msra.mxu0 0.0
  %2193 = vmatpush.msra.mxu0 %v1610
  %2194 = vmatpush.msra.mxu0 %v1609
  %2195 = vmatpush.msra.mxu0 %v1608
  %2196 = vmatpush.msra.mxu0 %v1607
  %2197 = vmatmul.f32.gmra.mxu0 %v2159
  %v2198 = vpop.f32.mrf.mxu0
  %v2199 = vadd.f32 0.0, %v2198
  %2200 = vdwg.mxu0
  %2201 = vmatpush.msra.mxu0 0.0
  %2202 = vmatpush.msra.mxu0 0.0
  %2203 = vmatpush.msra.mxu0 0.0
  %2204 = vmatpush.msra.mxu0 0.0
  %2205 = vmatpush.msra.mxu0 0.0
  %2206 = vmatpush.msra.mxu0 0.0
  %2207 = vmatpush.msra.mxu0 0.0
  %2208 = vmatpush.msra.mxu0 0.0
  %2209 = vmatpush.msra.mxu0 0.0
  %2210 = vmatpush.msra.mxu0 0.0
  %2211 = vmatpush.msra.mxu0 0.0
  %2212 = vmatpush.msra.mxu0 0.0
  %2213 = vmatpush.msra.mxu0 %v1635
  %2214 = vmatpush.msra.mxu0 %v1634
  %2215 = vmatpush.msra.mxu0 %v1633
  %2216 = vmatpush.msra.mxu0 %v1632
  %2217 = vmatmul.f32.gmra.mxu0 %v2159
  %v2218 = vpop.f32.mrf.mxu0
  %v2219 = vadd.f32 %v1579, %v2218
  %2220 = vdwg.mxu0
  %v2221 = vld [vmem:[%s1052] sm:$0xff]
  %v2222 = vadd.f32 %v2221, %v2179
  %v2223 = vxor.u32 %v2222, 2147483648
  %v2224 = vmul.f32 %v2223, 1.442695
  %v2225 = vpow.pop %v2224
  %v2226 = vadd.f32 %v2225, 1.0
  %v2227 = vrcp.pop %v2226
  %v2228 = vmul.f32 %v2226, %v2227
  %v2229 = vsub.f32 1.0, %v2228
  %v2230 = vmul.f32 %v2227, %v2229
  %v2231 = vadd.f32 %v2227, %v2230
  %vm2232 = vweird.f32 %v2226
  %vm2233 = vweird.f32 %v2227
  %vm2234 = vmor %vm2232, %vm2233
  %v2235 = vsel %vm2234, %v2227, %v2231
  %v2236 = vand.u32 2147483647, %v2226
  %vm2237 = vcmp.eq.f32.partialorder %v2236, 8.507059e+37
  %v2238 = vand.u32 %v2226, 2147483648
  %v2239 = vor.u32 1.1754944e-38, %v2238
  %v2240 = vsel %vm2237, %v2239, %v2235
  %v2241 = vmul.f32 1.0, %v2240
  %v2242 = vld [vmem:[%s1074] sm:$0xff]
  %v2243 = vadd.f32 %v2242, %v2199
  %v2244 = vxor.u32 %v2243, 2147483648
  %v2245 = vmul.f32 %v2244, 1.442695
  %v2246 = vpow.pop %v2245
  %v2247 = vadd.f32 %v2246, 1.0
  %v2248 = vrcp.pop %v2247
  %v2249 = vmul.f32 %v2247, %v2248
  %v2250 = vsub.f32 1.0, %v2249
  %v2251 = vmul.f32 %v2248, %v2250
  %v2252 = vadd.f32 %v2248, %v2251
  %vm2253 = vweird.f32 %v2247
  %vm2254 = vweird.f32 %v2248
  %vm2255 = vmor %vm2253, %vm2254
  %v2256 = vsel %vm2255, %v2248, %v2252
  %v2257 = vand.u32 2147483647, %v2247
  %vm2258 = vcmp.eq.f32.partialorder %v2257, 8.507059e+37
  %v2259 = vand.u32 %v2247, 2147483648
  %v2260 = vor.u32 1.1754944e-38, %v2259
  %v2261 = vsel %vm2258, %v2260, %v2256
  %v2262 = vmul.f32 1.0, %v2261
  %v2263 = vld [vmem:[%s1096] sm:$0xff]
  %v2264 = vmul.f32 %v2241, %v2219
  %v2265 = vadd.f32 %v2263, %v2264
  %v2266 = vtanh.pop %v2265
  %v2267 = vsub.f32 1.0, %v2262
  %v2268 = vmul.f32 %v2267, %v2266
  %v2269 = vmul.f32 %v2262, %v2157
  %v2270 = vadd.f32 %v2268, %v2269
  %v2272 = vsel %vm139, %v2270, 0
  %2274 = vmatpush.msra.mxu0 0.0
  %2275 = vmatpush.msra.mxu0 0.0
  %2276 = vmatpush.msra.mxu0 0.0
  %2277 = vmatpush.msra.mxu0 0.0
  %2278 = vmatpush.msra.mxu0 0.0
  %2279 = vmatpush.msra.mxu0 0.0
  %2280 = vmatpush.msra.mxu0 0.0
  %2281 = vmatpush.msra.mxu0 0.0
  %2282 = vmatpush.msra.mxu0 0.0
  %2283 = vmatpush.msra.mxu0 0.0
  %2284 = vmatpush.msra.mxu0 0.0
  %2285 = vmatpush.msra.mxu0 0.0
  %2286 = vmatpush.msra.mxu0 %v1585
  %2287 = vmatpush.msra.mxu0 %v1584
  %2288 = vmatpush.msra.mxu0 %v1583
  %2289 = vmatpush.msra.mxu0 %v1582
  %2290 = vmatmul.f32.gmra.mxu0 %v2272
  %v2291 = vpop.f32.mrf.mxu0
  %v2292 = vadd.f32 0.0, %v2291
  %2293 = vdwg.mxu0
  %2294 = vmatpush.msra.mxu0 0.0
  %2295 = vmatpush.msra.mxu0 0.0
  %2296 = vmatpush.msra.mxu0 0.0
  %2297 = vmatpush.msra.mxu0 0.0
  %2298 = vmatpush.msra.mxu0 0.0
  %2299 = vmatpush.msra.mxu0 0.0
  %2300 = vmatpush.msra.mxu0 0.0
  %2301 = vmatpush.msra.mxu0 0.0
  %2302 = vmatpush.msra.mxu0 0.0
  %2303 = vmatpush.msra.mxu0 0.0
  %2304 = vmatpush.msra.mxu0 0.0
  %2305 = vmatpush.msra.mxu0 0.0
  %2306 = vmatpush.msra.mxu0 %v1610
  %2307 = vmatpush.msra.mxu0 %v1609
  %2308 = vmatpush.msra.mxu0 %v1608
  %2309 = vmatpush.msra.mxu0 %v1607
  %2310 = vmatmul.f32.gmra.mxu0 %v2272
  %v2311 = vpop.f32.mrf.mxu0
  %v2312 = vadd.f32 0.0, %v2311
  %2313 = vdwg.mxu0
  %2314 = vmatpush.msra.mxu0 0.0
  %2315 = vmatpush.msra.mxu0 0.0
  %2316 = vmatpush.msra.mxu0 0.0
  %2317 = vmatpush.msra.mxu0 0.0
  %2318 = vmatpush.msra.mxu0 0.0
  %2319 = vmatpush.msra.mxu0 0.0
  %2320 = vmatpush.msra.mxu0 0.0
  %2321 = vmatpush.msra.mxu0 0.0
  %2322 = vmatpush.msra.mxu0 0.0
  %2323 = vmatpush.msra.mxu0 0.0
  %2324 = vmatpush.msra.mxu0 0.0
  %2325 = vmatpush.msra.mxu0 0.0
  %2326 = vmatpush.msra.mxu0 %v1635
  %2327 = vmatpush.msra.mxu0 %v1634
  %2328 = vmatpush.msra.mxu0 %v1633
  %2329 = vmatpush.msra.mxu0 %v1632
  %2330 = vmatmul.f32.gmra.mxu0 %v2272
  %v2331 = vpop.f32.mrf.mxu0
  %v2332 = vadd.f32 %v1579, %v2331
  %2333 = vdwg.mxu0
  %v2334 = vld [vmem:[%s1182] sm:$0xff]
  %v2335 = vadd.f32 %v2334, %v2292
  %v2336 = vxor.u32 %v2335, 2147483648
  %v2337 = vmul.f32 %v2336, 1.442695
  %v2338 = vpow.pop %v2337
  %v2339 = vadd.f32 %v2338, 1.0
  %v2340 = vrcp.pop %v2339
  %v2341 = vmul.f32 %v2339, %v2340
  %v2342 = vsub.f32 1.0, %v2341
  %v2343 = vmul.f32 %v2340, %v2342
  %v2344 = vadd.f32 %v2340, %v2343
  %vm2345 = vweird.f32 %v2339
  %vm2346 = vweird.f32 %v2340
  %vm2347 = vmor %vm2345, %vm2346
  %v2348 = vsel %vm2347, %v2340, %v2344
  %v2349 = vand.u32 2147483647, %v2339
  %vm2350 = vcmp.eq.f32.partialorder %v2349, 8.507059e+37
  %v2351 = vand.u32 %v2339, 2147483648
  %v2352 = vor.u32 1.1754944e-38, %v2351
  %v2353 = vsel %vm2350, %v2352, %v2348
  %v2354 = vmul.f32 1.0, %v2353
  %v2355 = vld [vmem:[%s1204] sm:$0xff]
  %v2356 = vadd.f32 %v2355, %v2312
  %v2357 = vxor.u32 %v2356, 2147483648
  %v2358 = vmul.f32 %v2357, 1.442695
  %v2359 = vpow.pop %v2358
  %v2360 = vadd.f32 %v2359, 1.0
  %v2361 = vrcp.pop %v2360
  %v2362 = vmul.f32 %v2360, %v2361
  %v2363 = vsub.f32 1.0, %v2362
  %v2364 = vmul.f32 %v2361, %v2363
  %v2365 = vadd.f32 %v2361, %v2364
  %vm2366 = vweird.f32 %v2360
  %vm2367 = vweird.f32 %v2361
  %vm2368 = vmor %vm2366, %vm2367
  %v2369 = vsel %vm2368, %v2361, %v2365
  %v2370 = vand.u32 2147483647, %v2360
  %vm2371 = vcmp.eq.f32.partialorder %v2370, 8.507059e+37
  %v2372 = vand.u32 %v2360, 2147483648
  %v2373 = vor.u32 1.1754944e-38, %v2372
  %v2374 = vsel %vm2371, %v2373, %v2369
  %v2375 = vmul.f32 1.0, %v2374
  %v2376 = vld [vmem:[%s1226] sm:$0xff]
  %v2377 = vmul.f32 %v2354, %v2332
  %v2378 = vadd.f32 %v2376, %v2377
  %v2379 = vtanh.pop %v2378
  %v2380 = vsub.f32 1.0, %v2375
  %v2381 = vmul.f32 %v2380, %v2379
  %v2382 = vmul.f32 %v2375, %v2270
  %v2383 = vadd.f32 %v2381, %v2382
  %v2385 = vsel %vm139, %v2383, 0
  %2387 = vmatpush.msra.mxu0 0.0
  %2388 = vmatpush.msra.mxu0 0.0
  %2389 = vmatpush.msra.mxu0 0.0
  %2390 = vmatpush.msra.mxu0 0.0
  %2391 = vmatpush.msra.mxu0 0.0
  %2392 = vmatpush.msra.mxu0 0.0
  %2393 = vmatpush.msra.mxu0 0.0
  %2394 = vmatpush.msra.mxu0 0.0
  %2395 = vmatpush.msra.mxu0 0.0
  %2396 = vmatpush.msra.mxu0 0.0
  %2397 = vmatpush.msra.mxu0 0.0
  %2398 = vmatpush.msra.mxu0 0.0
  %2399 = vmatpush.msra.mxu0 %v1585
  %2400 = vmatpush.msra.mxu0 %v1584
  %2401 = vmatpush.msra.mxu0 %v1583
  %2402 = vmatpush.msra.mxu0 %v1582
  %2403 = vmatmul.f32.gmra.mxu0 %v2385
  %v2404 = vpop.f32.mrf.mxu0
  %v2405 = vadd.f32 0.0, %v2404
  %2406 = vdwg.mxu0
  %2407 = vmatpush.msra.mxu0 0.0
  %2408 = vmatpush.msra.mxu0 0.0
  %2409 = vmatpush.msra.mxu0 0.0
  %2410 = vmatpush.msra.mxu0 0.0
  %2411 = vmatpush.msra.mxu0 0.0
  %2412 = vmatpush.msra.mxu0 0.0
  %2413 = vmatpush.msra.mxu0 0.0
  %2414 = vmatpush.msra.mxu0 0.0
  %2415 = vmatpush.msra.mxu0 0.0
  %2416 = vmatpush.msra.mxu0 0.0
  %2417 = vmatpush.msra.mxu0 0.0
  %2418 = vmatpush.msra.mxu0 0.0
  %2419 = vmatpush.msra.mxu0 %v1610
  %2420 = vmatpush.msra.mxu0 %v1609
  %2421 = vmatpush.msra.mxu0 %v1608
  %2422 = vmatpush.msra.mxu0 %v1607
  %2423 = vmatmul.f32.gmra.mxu0 %v2385
  %v2424 = vpop.f32.mrf.mxu0
  %v2425 = vadd.f32 0.0, %v2424
  %2426 = vdwg.mxu0
  %2427 = vmatpush.msra.mxu0 0.0
  %2428 = vmatpush.msra.mxu0 0.0
  %2429 = vmatpush.msra.mxu0 0.0
  %2430 = vmatpush.msra.mxu0 0.0
  %2431 = vmatpush.msra.mxu0 0.0
  %2432 = vmatpush.msra.mxu0 0.0
  %2433 = vmatpush.msra.mxu0 0.0
  %2434 = vmatpush.msra.mxu0 0.0
  %2435 = vmatpush.msra.mxu0 0.0
  %2436 = vmatpush.msra.mxu0 0.0
  %2437 = vmatpush.msra.mxu0 0.0
  %2438 = vmatpush.msra.mxu0 0.0
  %2439 = vmatpush.msra.mxu0 %v1635
  %2440 = vmatpush.msra.mxu0 %v1634
  %2441 = vmatpush.msra.mxu0 %v1633
  %2442 = vmatpush.msra.mxu0 %v1632
  %2443 = vmatmul.f32.gmra.mxu0 %v2385
  %v2444 = vpop.f32.mrf.mxu0
  %v2445 = vadd.f32 %v1579, %v2444
  %2446 = vdwg.mxu0
  %v2447 = vld [vmem:[%s1312] sm:$0xff]
  %v2448 = vadd.f32 %v2447, %v2405
  %v2449 = vxor.u32 %v2448, 2147483648
  %v2450 = vmul.f32 %v2449, 1.442695
  %v2451 = vpow.pop %v2450
  %v2452 = vadd.f32 %v2451, 1.0
  %v2453 = vrcp.pop %v2452
  %v2454 = vmul.f32 %v2452, %v2453
  %v2455 = vsub.f32 1.0, %v2454
  %v2456 = vmul.f32 %v2453, %v2455
  %v2457 = vadd.f32 %v2453, %v2456
  %vm2458 = vweird.f32 %v2452
  %vm2459 = vweird.f32 %v2453
  %vm2460 = vmor %vm2458, %vm2459
  %v2461 = vsel %vm2460, %v2453, %v2457
  %v2462 = vand.u32 2147483647, %v2452
  %vm2463 = vcmp.eq.f32.partialorder %v2462, 8.507059e+37
  %v2464 = vand.u32 %v2452, 2147483648
  %v2465 = vor.u32 1.1754944e-38, %v2464
  %v2466 = vsel %vm2463, %v2465, %v2461
  %v2467 = vmul.f32 1.0, %v2466
  %v2468 = vld [vmem:[%s1334] sm:$0xff]
  %v2469 = vadd.f32 %v2468, %v2425
  %v2470 = vxor.u32 %v2469, 2147483648
  %v2471 = vmul.f32 %v2470, 1.442695
  %v2472 = vpow.pop %v2471
  %v2473 = vadd.f32 %v2472, 1.0
  %v2474 = vrcp.pop %v2473
  %v2475 = vmul.f32 %v2473, %v2474
  %v2476 = vsub.f32 1.0, %v2475
  %v2477 = vmul.f32 %v2474, %v2476
  %v2478 = vadd.f32 %v2474, %v2477
  %vm2479 = vweird.f32 %v2473
  %vm2480 = vweird.f32 %v2474
  %vm2481 = vmor %vm2479, %vm2480
  %v2482 = vsel %vm2481, %v2474, %v2478
  %v2483 = vand.u32 2147483647, %v2473
  %vm2484 = vcmp.eq.f32.partialorder %v2483, 8.507059e+37
  %v2485 = vand.u32 %v2473, 2147483648
  %v2486 = vor.u32 1.1754944e-38, %v2485
  %v2487 = vsel %vm2484, %v2486, %v2482
  %v2488 = vmul.f32 1.0, %v2487
  %v2489 = vld [vmem:[%s1356] sm:$0xff]
  %v2490 = vmul.f32 %v2467, %v2445
  %v2491 = vadd.f32 %v2489, %v2490
  %v2492 = vtanh.pop %v2491
  %v2493 = vsub.f32 1.0, %v2488
  %v2494 = vmul.f32 %v2493, %v2492
  %v2495 = vmul.f32 %v2488, %v2383
  %v2496 = vadd.f32 %v2494, %v2495
  %v2497 = vld [vmem:[%s3] sm:$0xff]
  %v2498 = vld [vmem:[%s3 + $0x8] sm:$0xff]
  %v2499 = vld [vmem:[%s3 + $0x10] sm:$0xff]
  %v2500 = vld [vmem:[%s3 + $0x18] sm:$0xff]
  %v2502 = vsel %vm139, %v2496, 0
  %2504 = vmatpush.msra.mxu0 0.0
  %2505 = vmatpush.msra.mxu0 0.0
  %2506 = vmatpush.msra.mxu0 0.0
  %2507 = vmatpush.msra.mxu0 0.0
  %2508 = vmatpush.msra.mxu0 0.0
  %2509 = vmatpush.msra.mxu0 0.0
  %2510 = vmatpush.msra.mxu0 0.0
  %2511 = vmatpush.msra.mxu0 0.0
  %2512 = vmatpush.msra.mxu0 0.0
  %2513 = vmatpush.msra.mxu0 0.0
  %2514 = vmatpush.msra.mxu0 0.0
  %2515 = vmatpush.msra.mxu0 0.0
  %2516 = vmatpush.msra.mxu0 %v2500
  %2517 = vmatpush.msra.mxu0 %v2499
  %2518 = vmatpush.msra.mxu0 %v2498
  %2519 = vmatpush.msra.mxu0 %v2497
  %2520 = vmatmul.f32.gmra.mxu0 %v2502
  %v2521 = vpop.f32.mrf.mxu0
  %v2522 = vadd.f32 0.0, %v2521
  %2523 = vdwg.mxu0
  %vm2524 = vcmask 400384
  %2525 = vst.msk [vmem:[%s14] sm:$0xff] %vm2524, %v2522
  // Predicated region
  $region58: #{gru4rec_forward.2} parent=0 // pred_check
    _
  $region59: #{gru4rec_forward.2} parent=0 // pred_check_branch
    %2527 = sbr.rel (0) target = $region61
  $region60: #{gru4rec_forward.2} parent=0 // pred_region
    _
  $region61: #{gru4rec_forward.2} parent=0 // pred_fallthru
    _
  // Predicated region
  $region62: #{gru4rec_forward.2} parent=0 // pred_check
    _
  $region63: #{gru4rec_forward.2} parent=0 // pred_check_branch
    %2529 = sbr.rel (0) target = $region65
  $region64: #{gru4rec_forward.2} parent=0 // pred_region
    _
  $region65: #{gru4rec_forward.2} parent=0 // pred_fallthru
    _

</llo_original>
